<compile_context>
chip_gen: v7x
topology: tpu7x:2x2x1
jax: 0.10.0
libtpu: 0.0.40
codegen_flags: <defaults>
</compile_context>

<pallas_src>
import jax
import jax.numpy as jnp
from jax import lax
from jax.experimental import pallas as pl
from jax.experimental.pallas import tpu as pltpu

EPS = 1e-5
_MXU_DTYPE = jnp.bfloat16


# --------------------------------------------------------------------------- helpers
def _largest_divisor_leq(n, cap):
    cap = max(1, min(n, cap))
    for d in range(cap, 0, -1):
        if n % d == 0:
            return d
    return 1


def _pick_h_tile_ragged(rows, W, cap=None):
    # Row tile for a grid whose last tile may be ragged (rows are masked in-kernel),
    # targeting ~2048 flat rows (h*W) per tile and an 8-aligned h when possible.
    target = max(1, 2048 // max(W, 1))
    if cap is not None:
        target = min(target, cap)
    h = min(rows, target)
    if h >= 8:
        h -= h % 8
    return max(h, 1)


def _pick_h_tile_exact(rows, W, cap=None):
    # Row tile that must divide `rows` exactly (no masking on this path).
    target = max(1, 2048 // max(W, 1))
    if cap is not None:
        target = min(target, cap)
    return _largest_divisor_leq(rows, target)


def _vmem_limit(est_bytes):
    # Explicit scoped-VMEM budget (defaults are only 16/32 MiB) sized from the actual
    # buffers with headroom, capped well below any chip's physical VMEM.
    return int(min(max(int(est_bytes * 1.7) + (4 << 20), 32 << 20), 100 << 20))


def _fold_weights(w_oihw):
    # PyTorch (Cout, Cin, 3, 3) -> (ky, kx, Cin, Cout) -> (3, 3*Cin, Cout): one K=3*Cin
    # MXU matmul per ky tap, matching the [kx-major, cin-minor] patch layout below.
    Cout, Cin = w_oihw.shape[0], w_oihw.shape[1]
    return jnp.transpose(w_oihw, (2, 3, 1, 0)).reshape(3, 3 * Cin, Cout).astype(_MXU_DTYPE)


# ------------------------------------------------------------- pass 1: conv + BN stats
def _make_conv_stats_kernel(H, W, Cin, Cout, h_tile, mask_rows):
    def kernel(xp_ref, w_ref, y_ref, psum_ref, psq_ref):
        # xp_ref:   (1, HIN, W+2, Cin) bf16  zero-haloed image, resident across row tiles
        # w_ref:    (3, 3*Cin, Cout)   bf16  ky-folded taps, resident
        # y_ref:    (1, h_tile, W, Cout) bf16 pre-BN conv output tile
        # psum_ref/psq_ref: (1, 1, Cout) f32  per-image channel partials (revisited)
        t = pl.program_id(1)
        p0 = t * h_tile

        acc = None
        for ky in range(3):
            band = xp_ref[0, pl.ds(p0 + ky, h_tile), :, :]            # (h, W+2, Cin)
            # Fold the 3 kx taps into the contraction dim: (h*W, 3*Cin) patch.
            patch = jnp.concatenate(
                [band[:, kx:kx + W, :] for kx in range(3)], axis=-1
            ).reshape(h_tile * W, 3 * Cin)
            d = jnp.dot(patch, w_ref[ky], preferred_element_type=jnp.float32)
            acc = d if acc is None else acc + d                       # (h*W, Cout) f32

        if mask_rows:
            # Padded-row layout: row p = p0 + i holds conv output row p-1; halo row
            # (p == 0) and ragged / bottom-halo rows (p > H) are zeroed and thereby
            # excluded from the BN statistics.
            row = lax.broadcasted_iota(jnp.int32, (h_tile, 1), 0)
            valid = (p0 + row >= 1) & (p0 + row <= H)                 # (h, 1)
            acc3 = jnp.where(valid[:, :, None], acc.reshape(h_tile, W, Cout), 0.0)
            acc = acc3.reshape(h_tile * W, Cout)

        y_ref[...] = acc.reshape(1, h_tile, W, Cout).astype(y_ref.dtype)

        @pl.when(t == 0)
        def _():
            psum_ref[...] = jnp.zeros_like(psum_ref)
            psq_ref[...] = jnp.zeros_like(psq_ref)

        psum_ref[...] += jnp.sum(acc, axis=0).reshape(1, 1, Cout)
        psq_ref[...] += jnp.sum(acc * acc, axis=0).reshape(1, 1, Cout)

    return kernel


def _conv_stats_pass(xp, w_fold, *, H, W, Cout, h_tile, n_t, mask_rows):
    N, HIN, Wp, Cin = xp.shape
    assert Wp == W + 2
    HY = n_t * h_tile
    est = (HIN * Wp * Cin * 2                 # resident image, single-buffered
           + 2 * w_fold.size * 2              # folded weights
           + 2 * h_tile * W * Cout * 2        # bf16 y tile, double-buffered
           + h_tile * W * Cout * 4            # f32 accumulator value
           + 5 * h_tile * Wp * Cin * 2        # band / patch temporaries
           + 8 * Cout * 4)
    kernel = _make_conv_stats_kernel(H, W, Cin, Cout, h_tile, mask_rows)
    return pl.pallas_call(
        kernel,
        grid=(N, n_t),
        in_specs=[
            # Resident per-image input: its block index is constant along the row-tile
            # axis, so double-buffering would only overlap the *next image's* DMA at
            # 2x the largest VMEM consumer -> single buffer.
            pl.BlockSpec((1, HIN, Wp, Cin), lambda n, t: (n, 0, 0, 0),
                         pipeline_mode=pl.Buffered(1)),
            pl.BlockSpec((3, 3 * Cin, Cout), lambda n, t: (0, 0, 0),
                         pipeline_mode=pl.Buffered(1)),
        ],
        out_specs=(
            pl.BlockSpec((1, h_tile, W, Cout), lambda n, t: (n, t, 0, 0)),
            pl.BlockSpec((1, 1, Cout), lambda n, t: (n, 0, 0)),
            pl.BlockSpec((1, 1, Cout), lambda n, t: (n, 0, 0)),
        ),
        out_shape=(
            jax.ShapeDtypeStruct((N, HY, W, Cout), _MXU_DTYPE),
            jax.ShapeDtypeStruct((N, 1, Cout), jnp.float32),
            jax.ShapeDtypeStruct((N, 1, Cout), jnp.float32),
        ),
        compiler_params=pltpu.CompilerParams(
            dimension_semantics=("parallel", "arbitrary"),
            vmem_limit_bytes=_vmem_limit(est)),
    )(xp, w_fold)


# --------------------------------------------------------------- pass 2: BN + ReLU
def _make_bn_relu_kernel(H, W, Cout, h_tile, pad_output):
    def kernel(y_ref, scale_ref, shift_ref, o_ref):
        act = jnp.maximum(
            y_ref[...].astype(jnp.float32) * scale_ref[...] + shift_ref[...], 0.0)
        if pad_output:
            # Emit the zero-halo buffer for the next conv directly: halo / ragged rows
            # must be zero AFTER BN+ReLU (relu(shift) != 0 in general), plus one zero
            # column on each side of W.
            t = pl.program_id(1)
            row = lax.broadcasted_iota(jnp.int32, (h_tile, 1), 0)
            valid = (t * h_tile + row >= 1) & (t * h_tile + row <= H)   # (h, 1)
            act = jnp.where(valid[None, :, :, None], act, 0.0)
            zcol = jnp.zeros((1, h_tile, 1, Cout), jnp.float32)
            act = jnp.concatenate([zcol, act, zcol], axis=2)
        o_ref[...] = act.astype(o_ref.dtype)

    return kernel


def _bn_relu_pass(y, scale, shift, *, H, W, Cout, h_tile, n_t, pad_output, out_dtype):
    N = y.shape[0]
    assert y.shape[1] == n_t * h_tile
    Wout = W + 2 if pad_output else W
    out_bytes = jnp.dtype(out_dtype).itemsize
    est = (2 * h_tile * W * Cout * 2 + 2 * h_tile * Wout * Cout * out_bytes
           + 2 * h_tile * Wout * Cout * 4 + 8 * Cout * 4)
    kernel = _make_bn_relu_kernel(H, W, Cout, h_tile, pad_output)
    return pl.pallas_call(
        kernel,
        grid=(N, n_t),
        in_specs=[
            pl.BlockSpec((1, h_tile, W, Cout), lambda n, t: (n, t, 0, 0)),
            pl.BlockSpec((1, Cout), lambda n, t: (0, 0)),
            pl.BlockSpec((1, Cout), lambda n, t: (0, 0)),
        ],
        out_specs=pl.BlockSpec((1, h_tile, Wout, Cout), lambda n, t: (n, t, 0, 0)),
        out_shape=jax.ShapeDtypeStruct((N, n_t * h_tile, Wout, Cout), out_dtype),
        compiler_params=pltpu.CompilerParams(
            dimension_semantics=("parallel", "parallel"),
            vmem_limit_bytes=_vmem_limit(est)),
    )(y, scale, shift)


def _bn_scale_shift(psum, psq, gamma, beta, count):
    # Training-mode BatchNorm (batch statistics, biased variance, eps=1e-5) folded into
    # per-channel scale/shift.  Stats come from the f32 conv accumulator, so the bf16
    # pre-BN intermediate does not affect mean/var precision.
    # TODO(synk): per-tile shifted-mean (Welford) accumulation if very-large-mean
    #             activations show cancellation in E[x^2]-E[x]^2.
    g = gamma.astype(jnp.float32)
    b = beta.astype(jnp.float32)
    mean = jnp.sum(psum, axis=(0, 1)) / count
    var = jnp.maximum(jnp.sum(psq, axis=(0, 1)) / count - mean * mean, 0.0)
    inv = lax.rsqrt(var + EPS)
    scale = (g * inv).reshape(1, -1)
    shift = (b - mean * g * inv).reshape(1, -1)
    return scale, shift


# --------------------------------------------------------------------- full DoubleConv
def double_conv(x_nchw, params, *, h_tile1=None, h_tile2=None):
    """Forward pass of DoubleConv. NCHW in / NCHW out (matches the nn.Module)."""
    N, Cin, H, W = x_nchw.shape
    Cout = params["w1"].shape[0]
    x = jnp.transpose(x_nchw, (0, 2, 3, 1))                      # NHWC (channels on lanes)

    # ----- block 1: conv1 -> BN -> ReLU (padded-row layout, pad-free handoff) -----
    h1 = _pick_h_tile_ragged(H + 2, W, cap=h_tile1)
    n_t1 = pl.cdiv(H + 2, h1)
    Hp1 = n_t1 * h1
    # Single jnp.pad at the module boundary only: 2 halo rows on top (padded-row shift),
    # Hp1 - H rows at the bottom (halo + ragged-tile slack), 1 halo column on each side.
    xp1 = jnp.pad(x.astype(_MXU_DTYPE), ((0, 0), (2, Hp1 - H), (1, 1), (0, 0)))
    y1, s1, q1 = _conv_stats_pass(xp1, _fold_weights(params["w1"]), H=H, W=W,
                                  Cout=Cout, h_tile=h1, n_t=n_t1, mask_rows=True)
    scale1, shift1 = _bn_scale_shift(s1, q1, params["gamma1"], params["beta1"],
                                     jnp.float32(N * H * W))
    # a1 is conv2's zero-halo bf16 input, shape (N, Hp1 >= H+2, W+2, Cout): no XLA pad.
    a1 = _bn_relu_pass(y1, scale1, shift1, H=H, W=W, Cout=Cout, h_tile=h1,
                       n_t=n_t1, pad_output=True, out_dtype=_MXU_DTYPE)

    # ----- block 2: conv2 -> BN -> ReLU (standard layout, consumes a1 directly) -----
    h2 = _pick_h_tile_exact(H, W, cap=h_tile2)
    n_t2 = H // h2
    y2, s2, q2 = _conv_stats_pass(a1, _fold_weights(params["w2"]), H=H, W=W,
                                  Cout=Cout, h_tile=h2, n_t=n_t2, mask_rows=False)
    scale2, shift2 = _bn_scale_shift(s2, q2, params["gamma2"], params["beta2"],
                                     jnp.float32(N * H * W))
    out = _bn_relu_pass(y2, scale2, shift2, H=H, W=W, Cout=Cout, h_tile=h2,
                        n_t=n_t2, pad_output=False, out_dtype=jnp.float32)
    return jnp.transpose(out, (0, 3, 1, 2))


def double_conv_ref(x_nchw, params):
    # Pure-JAX f32 reference (correctness check only).
    def block(x, w, g, b):
        y = lax.conv_general_dilated(
            x, w, window_strides=(1, 1), padding=((1, 1), (1, 1)),
            dimension_numbers=("NCHW", "OIHW", "NCHW"))
        mean = jnp.mean(y, axis=(0, 2, 3), keepdims=True)
        var = jnp.mean((y - mean) ** 2, axis=(0, 2, 3), keepdims=True)
        y = (y - mean) / jnp.sqrt(var + EPS)
        y = y * g.reshape(1, -1, 1, 1) + b.reshape(1, -1, 1, 1)
        return jnp.maximum(y, 0.0)

    y = block(x_nchw.astype(jnp.float32), params["w1"], params["gamma1"], params["beta1"])
    return block(y, params["w2"], params["gamma2"], params["beta2"])


if __name__ == "__main__":
    key = jax.random.PRNGKey(0)
    N, Cin, Cout, H, W = 2, 4, 8, 16, 16
    k1, k2, k3, k4, k5 = jax.random.split(key, 5)

    x = jax.random.normal(k1, (N, Cin, H, W), jnp.float32)
    # Shapes from DoubleConv.__init__: conv1 (Cout,Cin,3,3), conv2 (Cout,Cout,3,3), no
    # bias.  Non-trivial BN affine params so the scale/shift + zero-halo paths are
    # actually exercised.
    params = {
        "w1": 0.1 * jax.random.normal(k2, (Cout, Cin, 3, 3), jnp.float32),
        "gamma1": 1.0 + 0.1 * jax.random.normal(k4, (Cout,), jnp.float32),
        "beta1": 0.1 * jax.random.normal(k5, (Cout,), jnp.float32),
        "w2": 0.1 * jax.random.normal(k3, (Cout, Cout, 3, 3), jnp.float32),
        "gamma2": jnp.ones((Cout,), jnp.float32),
        "beta2": jnp.zeros((Cout,), jnp.float32),
    }

    # Small row tiles force several tiles per image (ragged last tile in block 1,
    # accumulated BN partials in both blocks) so all tiled / masked paths run.
    fwd = jax.jit(lambda xx: double_conv(xx, params, h_tile1=8, h_tile2=8))
    out = jax.block_until_ready(fwd(x))
    ref = jax.block_until_ready(double_conv_ref(x, params))

    assert out.shape == (N, Cout, H, W), out.shape
    # bf16 MXU operands plus bf16 pre-BN / inter-block intermediates (f32 accumulation
    # and f32 BN statistics); typical max-abs error is a few 1e-2.
    err = float(jnp.max(jnp.abs(out - ref)))
    assert err < 1e-1, f"max abs err {err}"
    print("KERNEL_OK")
</pallas_src>

<mosaic_0001>
module attributes {stable_mosaic.version = 11 : i64} {
  func.func @kernel(%arg0: i32, %arg1: i32, %arg2: memref<1x26x18x4xbf16, #tpu.memory_space<vmem>>, %arg3: memref<3x12x8xbf16, #tpu.memory_space<vmem>>, %arg4: memref<1x8x16x8xbf16, #tpu.memory_space<vmem>>, %arg5: memref<1x1x8xf32, #tpu.memory_space<vmem>>, %arg6: memref<1x1x8xf32, #tpu.memory_space<vmem>>) attributes {dimension_semantics = [#tpu.dimension_semantics<parallel>, #tpu.dimension_semantics<arbitrary>], iteration_bounds = array<i64: 2, 3>, scalar_prefetch = 0 : i64, scratch_operands = 0 : i64, tpu.core_type = #tpu.core_type<tc>, window_params = [{pipeline_mode = #tpu.pipeline_mode<synchronous>, transform_indices = @transform_0, window_bounds = array<i64: 1, 26, 18, 4>}, {pipeline_mode = #tpu.pipeline_mode<synchronous>, transform_indices = @transform_1, window_bounds = array<i64: 3, 12, 8>}, {transform_indices = @transform_2, window_bounds = array<i64: 1, 8, 16, 8>}, {transform_indices = @transform_3, window_bounds = array<i64: 1, 1, 8>}, {transform_indices = @transform_4, window_bounds = array<i64: 1, 1, 8>}]} {
    %c8_i32 = arith.constant 8 : i32
    %0 = arith.muli %arg1, %c8_i32 : i32
    %c0_i32 = arith.constant 0 : i32
    %1 = arith.addi %0, %c0_i32 : i32
    %c0 = arith.constant 0 : index
    %2 = arith.index_cast %1 : i32 to index
    %c0_0 = arith.constant 0 : index
    %c0_1 = arith.constant 0 : index
    %3 = vector.load %arg2[%c0, %2, %c0_0, %c0_1] : memref<1x26x18x4xbf16, #tpu.memory_space<vmem>>, vector<1x8x18x4xbf16>
    %4 = vector.shape_cast %3 : vector<1x8x18x4xbf16> to vector<8x18x4xbf16>
    %5 = vector.extract_strided_slice %4 {offsets = [0, 0, 0], sizes = [8, 16, 4], strides = [1, 1, 1]} : vector<8x18x4xbf16> to vector<8x16x4xbf16>
    %6 = vector.extract_strided_slice %4 {offsets = [0, 1, 0], sizes = [8, 16, 4], strides = [1, 1, 1]} : vector<8x18x4xbf16> to vector<8x16x4xbf16>
    %7 = vector.extract_strided_slice %4 {offsets = [0, 2, 0], sizes = [8, 16, 4], strides = [1, 1, 1]} : vector<8x18x4xbf16> to vector<8x16x4xbf16>
    %8 = tpu.concatenate %5, %6, %7 in 2 : vector<8x16x4xbf16>, vector<8x16x4xbf16>, vector<8x16x4xbf16> -> vector<8x16x12xbf16>
    %9 = vector.shape_cast %8 : vector<8x16x12xbf16> to vector<128x12xbf16>
    %c0_2 = arith.constant 0 : index
    %c0_3 = arith.constant 0 : index
    %c0_4 = arith.constant 0 : index
    %10 = vector.load %arg3[%c0_2, %c0_3, %c0_4] : memref<3x12x8xbf16, #tpu.memory_space<vmem>>, vector<1x12x8xbf16>
    %11 = vector.shape_cast %10 : vector<1x12x8xbf16> to vector<12x8xbf16>
    %cst = arith.constant dense<0.000000e+00> : vector<128x8xf32>
    %12 = tpu.matmul %9, %11, %cst {dimension_numbers = #tpu.dot_dimension_numbers<[1], [0], [0], [1], [0, 0, 1, 1], [], []>} : vector<128x12xbf16>, vector<12x8xbf16>, vector<128x8xf32> -> vector<128x8xf32>
    %c1_i32 = arith.constant 1 : i32
    %13 = arith.addi %0, %c1_i32 : i32
    %c0_5 = arith.constant 0 : index
    %14 = arith.index_cast %13 : i32 to index
    %c0_6 = arith.constant 0 : index
    %c0_7 = arith.constant 0 : index
    %15 = vector.load %arg2[%c0_5, %14, %c0_6, %c0_7] : memref<1x26x18x4xbf16, #tpu.memory_space<vmem>>, vector<1x8x18x4xbf16>
    %16 = vector.shape_cast %15 : vector<1x8x18x4xbf16> to vector<8x18x4xbf16>
    %17 = vector.extract_strided_slice %16 {offsets = [0, 0, 0], sizes = [8, 16, 4], strides = [1, 1, 1]} : vector<8x18x4xbf16> to vector<8x16x4xbf16>
    %18 = vector.extract_strided_slice %16 {offsets = [0, 1, 0], sizes = [8, 16, 4], strides = [1, 1, 1]} : vector<8x18x4xbf16> to vector<8x16x4xbf16>
    %19 = vector.extract_strided_slice %16 {offsets = [0, 2, 0], sizes = [8, 16, 4], strides = [1, 1, 1]} : vector<8x18x4xbf16> to vector<8x16x4xbf16>
    %20 = tpu.concatenate %17, %18, %19 in 2 : vector<8x16x4xbf16>, vector<8x16x4xbf16>, vector<8x16x4xbf16> -> vector<8x16x12xbf16>
    %21 = vector.shape_cast %20 : vector<8x16x12xbf16> to vector<128x12xbf16>
    %c1 = arith.constant 1 : index
    %c0_8 = arith.constant 0 : index
    %c0_9 = arith.constant 0 : index
    %22 = vector.load %arg3[%c1, %c0_8, %c0_9] : memref<3x12x8xbf16, #tpu.memory_space<vmem>>, vector<1x12x8xbf16>
    %23 = vector.shape_cast %22 : vector<1x12x8xbf16> to vector<12x8xbf16>
    %cst_10 = arith.constant dense<0.000000e+00> : vector<128x8xf32>
    %24 = tpu.matmul %21, %23, %cst_10 {dimension_numbers = #tpu.dot_dimension_numbers<[1], [0], [0], [1], [0, 0, 1, 1], [], []>} : vector<128x12xbf16>, vector<12x8xbf16>, vector<128x8xf32> -> vector<128x8xf32>
    %25 = arith.addf %12, %24 : vector<128x8xf32>
    %c2_i32 = arith.constant 2 : i32
    %26 = arith.addi %0, %c2_i32 : i32
    %c0_11 = arith.constant 0 : index
    %27 = arith.index_cast %26 : i32 to index
    %c0_12 = arith.constant 0 : index
    %c0_13 = arith.constant 0 : index
    %28 = vector.load %arg2[%c0_11, %27, %c0_12, %c0_13] : memref<1x26x18x4xbf16, #tpu.memory_space<vmem>>, vector<1x8x18x4xbf16>
    %29 = vector.shape_cast %28 : vector<1x8x18x4xbf16> to vector<8x18x4xbf16>
    %30 = vector.extract_strided_slice %29 {offsets = [0, 0, 0], sizes = [8, 16, 4], strides = [1, 1, 1]} : vector<8x18x4xbf16> to vector<8x16x4xbf16>
    %31 = vector.extract_strided_slice %29 {offsets = [0, 1, 0], sizes = [8, 16, 4], strides = [1, 1, 1]} : vector<8x18x4xbf16> to vector<8x16x4xbf16>
    %32 = vector.extract_strided_slice %29 {offsets = [0, 2, 0], sizes = [8, 16, 4], strides = [1, 1, 1]} : vector<8x18x4xbf16> to vector<8x16x4xbf16>
    %33 = tpu.concatenate %30, %31, %32 in 2 : vector<8x16x4xbf16>, vector<8x16x4xbf16>, vector<8x16x4xbf16> -> vector<8x16x12xbf16>
    %34 = vector.shape_cast %33 : vector<8x16x12xbf16> to vector<128x12xbf16>
    %c2 = arith.constant 2 : index
    %c0_14 = arith.constant 0 : index
    %c0_15 = arith.constant 0 : index
    %35 = vector.load %arg3[%c2, %c0_14, %c0_15] : memref<3x12x8xbf16, #tpu.memory_space<vmem>>, vector<1x12x8xbf16>
    %36 = vector.shape_cast %35 : vector<1x12x8xbf16> to vector<12x8xbf16>
    %cst_16 = arith.constant dense<0.000000e+00> : vector<128x8xf32>
    %37 = tpu.matmul %34, %36, %cst_16 {dimension_numbers = #tpu.dot_dimension_numbers<[1], [0], [0], [1], [0, 0, 1, 1], [], []>} : vector<128x12xbf16>, vector<12x8xbf16>, vector<128x8xf32> -> vector<128x8xf32>
    %38 = arith.addf %25, %37 : vector<128x8xf32>
    %39 = tpu.iota {dimensions = array<i32: 0>} : vector<8x1xi32>
    %40 = vector.broadcast %0 : i32 to vector<8x1xi32>
    %41 = arith.addi %40, %39 : vector<8x1xi32>
    %c1_i32_17 = arith.constant 1 : i32
    %42 = vector.broadcast %c1_i32_17 : i32 to vector<8x1xi32>
    %43 = arith.cmpi sge, %41, %42 : vector<8x1xi32>
    %44 = vector.broadcast %0 : i32 to vector<8x1xi32>
    %45 = arith.addi %44, %39 : vector<8x1xi32>
    %c16_i32 = arith.constant 16 : i32
    %46 = vector.broadcast %c16_i32 : i32 to vector<8x1xi32>
    %47 = arith.cmpi sle, %45, %46 : vector<8x1xi32>
    %48 = arith.andi %43, %47 : vector<8x1xi1>
    %49 = vector.shape_cast %48 : vector<8x1xi1> to vector<8x1x1xi1>
    %50 = vector.shape_cast %38 : vector<128x8xf32> to vector<8x16x8xf32>
    %cst_18 = arith.constant 0.000000e+00 : f32
    %51 = vector.shape_cast %49 : vector<8x1x1xi1> to vector<8x1x1xi1>
    %52 = vector.broadcast %51 : vector<8x1x1xi1> to vector<8x16x8xi1>
    %53 = vector.broadcast %cst_18 : f32 to vector<8x16x8xf32>
    %54 = arith.select %52, %50, %53 : vector<8x16x8xi1>, vector<8x16x8xf32>
    %55 = vector.shape_cast %54 : vector<8x16x8xf32> to vector<128x8xf32>
    %56 = vector.shape_cast %55 : vector<128x8xf32> to vector<1x8x16x8xf32>
    %57 = arith.truncf %56 : vector<1x8x16x8xf32> to vector<1x8x16x8xbf16>
    %c0_19 = arith.constant 0 : index
    %c0_20 = arith.constant 0 : index
    %c0_21 = arith.constant 0 : index
    %c0_22 = arith.constant 0 : index
    %58 = vector.load %arg4[%c0_19, %c0_20, %c0_21, %c0_22] : memref<1x8x16x8xbf16, #tpu.memory_space<vmem>>, vector<1x8x16x8xbf16>
    tpu.vector_store %arg4[%c0_19, %c0_20, %c0_21, %c0_22], %57 {strides = array<i32>} : memref<1x8x16x8xbf16, #tpu.memory_space<vmem>>, vector<1x8x16x8xbf16>,
    %c0_i32_23 = arith.constant 0 : i32
    %59 = arith.cmpi eq, %arg1, %c0_i32_23 : i32
    %60 = arith.extui %59 : i1 to i32
    %c0_i32_24 = arith.constant 0 : i32
    %61 = arith.cmpi ne, %60, %c0_i32_24 : i32
    scf.if %61 {
      %cst_39 = arith.constant 0.000000e+00 : f32
      %73 = vector.broadcast %cst_39 : f32 to vector<1x1x8xf32>
      %c0_40 = arith.constant 0 : index
      %c0_41 = arith.constant 0 : index
      %c0_42 = arith.constant 0 : index
      %74 = vector.load %arg5[%c0_40, %c0_41, %c0_42] : memref<1x1x8xf32, #tpu.memory_space<vmem>>, vector<1x1x8xf32>
      tpu.vector_store %arg5[%c0_40, %c0_41, %c0_42], %73 {strides = array<i32>} : memref<1x1x8xf32, #tpu.memory_space<vmem>>, vector<1x1x8xf32>,
      %cst_43 = arith.constant 0.000000e+00 : f32
      %75 = vector.broadcast %cst_43 : f32 to vector<1x1x8xf32>
      %c0_44 = arith.constant 0 : index
      %c0_45 = arith.constant 0 : index
      %c0_46 = arith.constant 0 : index
      %76 = vector.load %arg6[%c0_44, %c0_45, %c0_46] : memref<1x1x8xf32, #tpu.memory_space<vmem>>, vector<1x1x8xf32>
      tpu.vector_store %arg6[%c0_44, %c0_45, %c0_46], %75 {strides = array<i32>} : memref<1x1x8xf32, #tpu.memory_space<vmem>>, vector<1x1x8xf32>,
    } else {
    }
    %c0_25 = arith.constant 0 : index
    %c0_26 = arith.constant 0 : index
    %c0_27 = arith.constant 0 : index
    %62 = vector.load %arg5[%c0_25, %c0_26, %c0_27] : memref<1x1x8xf32, #tpu.memory_space<vmem>>, vector<1x1x8xf32>
    %cst_28 = arith.constant dense<0.000000e+00> : vector<8xf32>
    %63 = vector.multi_reduction <add>, %55, %cst_28 [0] : vector<128x8xf32> to vector<8xf32>
    %64 = vector.shape_cast %63 : vector<8xf32> to vector<1x1x8xf32>
    %65 = arith.addf %62, %64 : vector<1x1x8xf32>
    %c0_29 = arith.constant 0 : index
    %c0_30 = arith.constant 0 : index
    %c0_31 = arith.constant 0 : index
    %66 = vector.load %arg5[%c0_29, %c0_30, %c0_31] : memref<1x1x8xf32, #tpu.memory_space<vmem>>, vector<1x1x8xf32>
    tpu.vector_store %arg5[%c0_29, %c0_30, %c0_31], %65 {strides = array<i32>} : memref<1x1x8xf32, #tpu.memory_space<vmem>>, vector<1x1x8xf32>,
    %c0_32 = arith.constant 0 : index
    %c0_33 = arith.constant 0 : index
    %c0_34 = arith.constant 0 : index
    %67 = vector.load %arg6[%c0_32, %c0_33, %c0_34] : memref<1x1x8xf32, #tpu.memory_space<vmem>>, vector<1x1x8xf32>
    %68 = arith.mulf %55, %55 : vector<128x8xf32>
    %cst_35 = arith.constant dense<0.000000e+00> : vector<8xf32>
    %69 = vector.multi_reduction <add>, %68, %cst_35 [0] : vector<128x8xf32> to vector<8xf32>
    %70 = vector.shape_cast %69 : vector<8xf32> to vector<1x1x8xf32>
    %71 = arith.addf %67, %70 : vector<1x1x8xf32>
    %c0_36 = arith.constant 0 : index
    %c0_37 = arith.constant 0 : index
    %c0_38 = arith.constant 0 : index
    %72 = vector.load %arg6[%c0_36, %c0_37, %c0_38] : memref<1x1x8xf32, #tpu.memory_space<vmem>>, vector<1x1x8xf32>
    tpu.vector_store %arg6[%c0_36, %c0_37, %c0_38], %71 {strides = array<i32>} : memref<1x1x8xf32, #tpu.memory_space<vmem>>, vector<1x1x8xf32>,
    return
  }
  func.func @transform_0(%arg0: i32, %arg1: i32) -> (i32, i32, i32, i32) {
    %c0_i32 = arith.constant 0 : i32
    %c0_i32_0 = arith.constant 0 : i32
    %c0_i32_1 = arith.constant 0 : i32
    %c0_i32_2 = arith.constant 0 : i32
    return %arg0, %c0_i32, %c0_i32_0, %c0_i32_1 : i32, i32, i32, i32
  }
  func.func @transform_1(%arg0: i32, %arg1: i32) -> (i32, i32, i32) {
    %c0_i32 = arith.constant 0 : i32
    %c0_i32_0 = arith.constant 0 : i32
    %c0_i32_1 = arith.constant 0 : i32
    %c0_i32_2 = arith.constant 0 : i32
    return %c0_i32, %c0_i32_0, %c0_i32_1 : i32, i32, i32
  }
  func.func @transform_2(%arg0: i32, %arg1: i32) -> (i32, i32, i32, i32) {
    %c0_i32 = arith.constant 0 : i32
    %c0_i32_0 = arith.constant 0 : i32
    %c0_i32_1 = arith.constant 0 : i32
    return %arg0, %arg1, %c0_i32, %c0_i32_0 : i32, i32, i32, i32
  }
  func.func @transform_3(%arg0: i32, %arg1: i32) -> (i32, i32, i32) {
    %c0_i32 = arith.constant 0 : i32
    %c0_i32_0 = arith.constant 0 : i32
    %c0_i32_1 = arith.constant 0 : i32
    return %arg0, %c0_i32, %c0_i32_0 : i32, i32, i32
  }
  func.func @transform_4(%arg0: i32, %arg1: i32) -> (i32, i32, i32) {
    %c0_i32 = arith.constant 0 : i32
    %c0_i32_0 = arith.constant 0 : i32
    %c0_i32_1 = arith.constant 0 : i32
    return %arg0, %c0_i32, %c0_i32_0 : i32, i32, i32
  }
}

module attributes {stable_mosaic.version = 11 : i64} {
  func.func @kernel(%arg0: i32, %arg1: i32, %arg2: memref<1x8x16x8xbf16, #tpu.memory_space<vmem>>, %arg3: memref<1x8xf32, #tpu.memory_space<vmem>>, %arg4: memref<1x8xf32, #tpu.memory_space<vmem>>, %arg5: memref<1x8x18x8xbf16, #tpu.memory_space<vmem>>) attributes {dimension_semantics = [#tpu.dimension_semantics<parallel>, #tpu.dimension_semantics<parallel>], iteration_bounds = array<i64: 2, 3>, scalar_prefetch = 0 : i64, scratch_operands = 0 : i64, tpu.core_type = #tpu.core_type<tc>, window_params = [{transform_indices = @transform_0, window_bounds = array<i64: 1, 8, 16, 8>}, {pipeline_mode = #tpu.pipeline_mode<synchronous>, transform_indices = @transform_1, window_bounds = array<i64: 1, 8>}, {pipeline_mode = #tpu.pipeline_mode<synchronous>, transform_indices = @transform_2, window_bounds = array<i64: 1, 8>}, {transform_indices = @transform_3, window_bounds = array<i64: 1, 8, 18, 8>}]} {
    %c0 = arith.constant 0 : index
    %c0_0 = arith.constant 0 : index
    %c0_1 = arith.constant 0 : index
    %c0_2 = arith.constant 0 : index
    %0 = vector.load %arg2[%c0, %c0_0, %c0_1, %c0_2] : memref<1x8x16x8xbf16, #tpu.memory_space<vmem>>, vector<1x8x16x8xbf16>
    %1 = arith.extf %0 : vector<1x8x16x8xbf16> to vector<1x8x16x8xf32>
    %c0_3 = arith.constant 0 : index
    %c0_4 = arith.constant 0 : index
    %2 = vector.load %arg3[%c0_3, %c0_4] : memref<1x8xf32, #tpu.memory_space<vmem>>, vector<1x8xf32>
    %3 = vector.shape_cast %2 : vector<1x8xf32> to vector<1x1x1x8xf32>
    %4 = vector.broadcast %3 : vector<1x1x1x8xf32> to vector<1x8x16x8xf32>
    %5 = arith.mulf %1, %4 : vector<1x8x16x8xf32>
    %c0_5 = arith.constant 0 : index
    %c0_6 = arith.constant 0 : index
    %6 = vector.load %arg4[%c0_5, %c0_6] : memref<1x8xf32, #tpu.memory_space<vmem>>, vector<1x8xf32>
    %7 = vector.shape_cast %6 : vector<1x8xf32> to vector<1x1x1x8xf32>
    %8 = vector.broadcast %7 : vector<1x1x1x8xf32> to vector<1x8x16x8xf32>
    %9 = arith.addf %5, %8 : vector<1x8x16x8xf32>
    %cst = arith.constant 0.000000e+00 : f32
    %10 = vector.broadcast %cst : f32 to vector<1x8x16x8xf32>
    %11 = arith.maximumf %9, %10 : vector<1x8x16x8xf32>
    %12 = tpu.iota {dimensions = array<i32: 0>} : vector<8x1xi32>
    %c8_i32 = arith.constant 8 : i32
    %13 = arith.muli %arg1, %c8_i32 : i32
    %14 = vector.broadcast %13 : i32 to vector<8x1xi32>
    %15 = arith.addi %14, %12 : vector<8x1xi32>
    %c1_i32 = arith.constant 1 : i32
    %16 = vector.broadcast %c1_i32 : i32 to vector<8x1xi32>
    %17 = arith.cmpi sge, %15, %16 : vector<8x1xi32>
    %c8_i32_7 = arith.constant 8 : i32
    %18 = arith.muli %arg1, %c8_i32_7 : i32
    %19 = vector.broadcast %18 : i32 to vector<8x1xi32>
    %20 = arith.addi %19, %12 : vector<8x1xi32>
    %c16_i32 = arith.constant 16 : i32
    %21 = vector.broadcast %c16_i32 : i32 to vector<8x1xi32>
    %22 = arith.cmpi sle, %20, %21 : vector<8x1xi32>
    %23 = arith.andi %17, %22 : vector<8x1xi1>
    %24 = vector.shape_cast %23 : vector<8x1xi1> to vector<1x8x1x1xi1>
    %cst_8 = arith.constant 0.000000e+00 : f32
    %25 = vector.shape_cast %24 : vector<1x8x1x1xi1> to vector<1x8x1x1xi1>
    %26 = vector.broadcast %25 : vector<1x8x1x1xi1> to vector<1x8x16x8xi1>
    %27 = vector.broadcast %cst_8 : f32 to vector<1x8x16x8xf32>
    %28 = arith.select %26, %11, %27 : vector<1x8x16x8xi1>, vector<1x8x16x8xf32>
    %cst_9 = arith.constant 0.000000e+00 : f32
    %29 = vector.broadcast %cst_9 : f32 to vector<1x8x1x8xf32>
    %30 = tpu.concatenate %29, %28, %29 in 2 : vector<1x8x1x8xf32>, vector<1x8x16x8xf32>, vector<1x8x1x8xf32> -> vector<1x8x18x8xf32>
    %31 = arith.truncf %30 : vector<1x8x18x8xf32> to vector<1x8x18x8xbf16>
    %c0_10 = arith.constant 0 : index
    %c0_11 = arith.constant 0 : index
    %c0_12 = arith.constant 0 : index
    %c0_13 = arith.constant 0 : index
    %32 = vector.load %arg5[%c0_10, %c0_11, %c0_12, %c0_13] : memref<1x8x18x8xbf16, #tpu.memory_space<vmem>>, vector<1x8x18x8xbf16>
    tpu.vector_store %arg5[%c0_10, %c0_11, %c0_12, %c0_13], %31 {strides = array<i32>} : memref<1x8x18x8xbf16, #tpu.memory_space<vmem>>, vector<1x8x18x8xbf16>,
    return
  }
  func.func @transform_0(%arg0: i32, %arg1: i32) -> (i32, i32, i32, i32) {
    %c0_i32 = arith.constant 0 : i32
    %c0_i32_0 = arith.constant 0 : i32
    %c0_i32_1 = arith.constant 0 : i32
    return %arg0, %arg1, %c0_i32, %c0_i32_0 : i32, i32, i32, i32
  }
  func.func @transform_1(%arg0: i32, %arg1: i32) -> (i32, i32) {
    %c0_i32 = arith.constant 0 : i32
    %c0_i32_0 = arith.constant 0 : i32
    %c0_i32_1 = arith.constant 0 : i32
    return %c0_i32, %c0_i32_0 : i32, i32
  }
  func.func @transform_2(%arg0: i32, %arg1: i32) -> (i32, i32) {
    %c0_i32 = arith.constant 0 : i32
    %c0_i32_0 = arith.constant 0 : i32
    %c0_i32_1 = arith.constant 0 : i32
    return %c0_i32, %c0_i32_0 : i32, i32
  }
  func.func @transform_3(%arg0: i32, %arg1: i32) -> (i32, i32, i32, i32) {
    %c0_i32 = arith.constant 0 : i32
    %c0_i32_0 = arith.constant 0 : i32
    %c0_i32_1 = arith.constant 0 : i32
    return %arg0, %arg1, %c0_i32, %c0_i32_0 : i32, i32, i32, i32
  }
}

module attributes {stable_mosaic.version = 11 : i64} {
  func.func @kernel(%arg0: i32, %arg1: i32, %arg2: memref<1x24x18x8xbf16, #tpu.memory_space<vmem>>, %arg3: memref<3x24x8xbf16, #tpu.memory_space<vmem>>, %arg4: memref<1x8x16x8xbf16, #tpu.memory_space<vmem>>, %arg5: memref<1x1x8xf32, #tpu.memory_space<vmem>>, %arg6: memref<1x1x8xf32, #tpu.memory_space<vmem>>) attributes {dimension_semantics = [#tpu.dimension_semantics<parallel>, #tpu.dimension_semantics<arbitrary>], iteration_bounds = array<i64: 2, 2>, scalar_prefetch = 0 : i64, scratch_operands = 0 : i64, tpu.core_type = #tpu.core_type<tc>, window_params = [{pipeline_mode = #tpu.pipeline_mode<synchronous>, transform_indices = @transform_0, window_bounds = array<i64: 1, 24, 18, 8>}, {pipeline_mode = #tpu.pipeline_mode<synchronous>, transform_indices = @transform_1, window_bounds = array<i64: 3, 24, 8>}, {transform_indices = @transform_2, window_bounds = array<i64: 1, 8, 16, 8>}, {transform_indices = @transform_3, window_bounds = array<i64: 1, 1, 8>}, {transform_indices = @transform_4, window_bounds = array<i64: 1, 1, 8>}]} {
    %c8_i32 = arith.constant 8 : i32
    %0 = arith.muli %arg1, %c8_i32 : i32
    %c0_i32 = arith.constant 0 : i32
    %1 = arith.addi %0, %c0_i32 : i32
    %c0 = arith.constant 0 : index
    %2 = arith.index_cast %1 : i32 to index
    %c0_0 = arith.constant 0 : index
    %c0_1 = arith.constant 0 : index
    %3 = vector.load %arg2[%c0, %2, %c0_0, %c0_1] : memref<1x24x18x8xbf16, #tpu.memory_space<vmem>>, vector<1x8x18x8xbf16>
    %4 = vector.shape_cast %3 : vector<1x8x18x8xbf16> to vector<8x18x8xbf16>
    %5 = vector.extract_strided_slice %4 {offsets = [0, 0, 0], sizes = [8, 16, 8], strides = [1, 1, 1]} : vector<8x18x8xbf16> to vector<8x16x8xbf16>
    %6 = vector.extract_strided_slice %4 {offsets = [0, 1, 0], sizes = [8, 16, 8], strides = [1, 1, 1]} : vector<8x18x8xbf16> to vector<8x16x8xbf16>
    %7 = vector.extract_strided_slice %4 {offsets = [0, 2, 0], sizes = [8, 16, 8], strides = [1, 1, 1]} : vector<8x18x8xbf16> to vector<8x16x8xbf16>
    %8 = tpu.concatenate %5, %6, %7 in 2 : vector<8x16x8xbf16>, vector<8x16x8xbf16>, vector<8x16x8xbf16> -> vector<8x16x24xbf16>
    %9 = vector.shape_cast %8 : vector<8x16x24xbf16> to vector<128x24xbf16>
    %c0_2 = arith.constant 0 : index
    %c0_3 = arith.constant 0 : index
    %c0_4 = arith.constant 0 : index
    %10 = vector.load %arg3[%c0_2, %c0_3, %c0_4] : memref<3x24x8xbf16, #tpu.memory_space<vmem>>, vector<1x24x8xbf16>
    %11 = vector.shape_cast %10 : vector<1x24x8xbf16> to vector<24x8xbf16>
    %cst = arith.constant dense<0.000000e+00> : vector<128x8xf32>
    %12 = tpu.matmul %9, %11, %cst {dimension_numbers = #tpu.dot_dimension_numbers<[1], [0], [0], [1], [0, 0, 1, 1], [], []>} : vector<128x24xbf16>, vector<24x8xbf16>, vector<128x8xf32> -> vector<128x8xf32>
    %c1_i32 = arith.constant 1 : i32
    %13 = arith.addi %0, %c1_i32 : i32
    %c0_5 = arith.constant 0 : index
    %14 = arith.index_cast %13 : i32 to index
    %c0_6 = arith.constant 0 : index
    %c0_7 = arith.constant 0 : index
    %15 = vector.load %arg2[%c0_5, %14, %c0_6, %c0_7] : memref<1x24x18x8xbf16, #tpu.memory_space<vmem>>, vector<1x8x18x8xbf16>
    %16 = vector.shape_cast %15 : vector<1x8x18x8xbf16> to vector<8x18x8xbf16>
    %17 = vector.extract_strided_slice %16 {offsets = [0, 0, 0], sizes = [8, 16, 8], strides = [1, 1, 1]} : vector<8x18x8xbf16> to vector<8x16x8xbf16>
    %18 = vector.extract_strided_slice %16 {offsets = [0, 1, 0], sizes = [8, 16, 8], strides = [1, 1, 1]} : vector<8x18x8xbf16> to vector<8x16x8xbf16>
    %19 = vector.extract_strided_slice %16 {offsets = [0, 2, 0], sizes = [8, 16, 8], strides = [1, 1, 1]} : vector<8x18x8xbf16> to vector<8x16x8xbf16>
    %20 = tpu.concatenate %17, %18, %19 in 2 : vector<8x16x8xbf16>, vector<8x16x8xbf16>, vector<8x16x8xbf16> -> vector<8x16x24xbf16>
    %21 = vector.shape_cast %20 : vector<8x16x24xbf16> to vector<128x24xbf16>
    %c1 = arith.constant 1 : index
    %c0_8 = arith.constant 0 : index
    %c0_9 = arith.constant 0 : index
    %22 = vector.load %arg3[%c1, %c0_8, %c0_9] : memref<3x24x8xbf16, #tpu.memory_space<vmem>>, vector<1x24x8xbf16>
    %23 = vector.shape_cast %22 : vector<1x24x8xbf16> to vector<24x8xbf16>
    %cst_10 = arith.constant dense<0.000000e+00> : vector<128x8xf32>
    %24 = tpu.matmul %21, %23, %cst_10 {dimension_numbers = #tpu.dot_dimension_numbers<[1], [0], [0], [1], [0, 0, 1, 1], [], []>} : vector<128x24xbf16>, vector<24x8xbf16>, vector<128x8xf32> -> vector<128x8xf32>
    %25 = arith.addf %12, %24 : vector<128x8xf32>
    %c2_i32 = arith.constant 2 : i32
    %26 = arith.addi %0, %c2_i32 : i32
    %c0_11 = arith.constant 0 : index
    %27 = arith.index_cast %26 : i32 to index
    %c0_12 = arith.constant 0 : index
    %c0_13 = arith.constant 0 : index
    %28 = vector.load %arg2[%c0_11, %27, %c0_12, %c0_13] : memref<1x24x18x8xbf16, #tpu.memory_space<vmem>>, vector<1x8x18x8xbf16>
    %29 = vector.shape_cast %28 : vector<1x8x18x8xbf16> to vector<8x18x8xbf16>
    %30 = vector.extract_strided_slice %29 {offsets = [0, 0, 0], sizes = [8, 16, 8], strides = [1, 1, 1]} : vector<8x18x8xbf16> to vector<8x16x8xbf16>
    %31 = vector.extract_strided_slice %29 {offsets = [0, 1, 0], sizes = [8, 16, 8], strides = [1, 1, 1]} : vector<8x18x8xbf16> to vector<8x16x8xbf16>
    %32 = vector.extract_strided_slice %29 {offsets = [0, 2, 0], sizes = [8, 16, 8], strides = [1, 1, 1]} : vector<8x18x8xbf16> to vector<8x16x8xbf16>
    %33 = tpu.concatenate %30, %31, %32 in 2 : vector<8x16x8xbf16>, vector<8x16x8xbf16>, vector<8x16x8xbf16> -> vector<8x16x24xbf16>
    %34 = vector.shape_cast %33 : vector<8x16x24xbf16> to vector<128x24xbf16>
    %c2 = arith.constant 2 : index
    %c0_14 = arith.constant 0 : index
    %c0_15 = arith.constant 0 : index
    %35 = vector.load %arg3[%c2, %c0_14, %c0_15] : memref<3x24x8xbf16, #tpu.memory_space<vmem>>, vector<1x24x8xbf16>
    %36 = vector.shape_cast %35 : vector<1x24x8xbf16> to vector<24x8xbf16>
    %cst_16 = arith.constant dense<0.000000e+00> : vector<128x8xf32>
    %37 = tpu.matmul %34, %36, %cst_16 {dimension_numbers = #tpu.dot_dimension_numbers<[1], [0], [0], [1], [0, 0, 1, 1], [], []>} : vector<128x24xbf16>, vector<24x8xbf16>, vector<128x8xf32> -> vector<128x8xf32>
    %38 = arith.addf %25, %37 : vector<128x8xf32>
    %39 = vector.shape_cast %38 : vector<128x8xf32> to vector<1x8x16x8xf32>
    %40 = arith.truncf %39 : vector<1x8x16x8xf32> to vector<1x8x16x8xbf16>
    %c0_17 = arith.constant 0 : index
    %c0_18 = arith.constant 0 : index
    %c0_19 = arith.constant 0 : index
    %c0_20 = arith.constant 0 : index
    %41 = vector.load %arg4[%c0_17, %c0_18, %c0_19, %c0_20] : memref<1x8x16x8xbf16, #tpu.memory_space<vmem>>, vector<1x8x16x8xbf16>
    tpu.vector_store %arg4[%c0_17, %c0_18, %c0_19, %c0_20], %40 {strides = array<i32>} : memref<1x8x16x8xbf16, #tpu.memory_space<vmem>>, vector<1x8x16x8xbf16>,
    %c0_i32_21 = arith.constant 0 : i32
    %42 = arith.cmpi eq, %arg1, %c0_i32_21 : i32
    %43 = arith.extui %42 : i1 to i32
    %c0_i32_22 = arith.constant 0 : i32
    %44 = arith.cmpi ne, %43, %c0_i32_22 : i32
    scf.if %44 {
      %cst_37 = arith.constant 0.000000e+00 : f32
      %56 = vector.broadcast %cst_37 : f32 to vector<1x1x8xf32>
      %c0_38 = arith.constant 0 : index
      %c0_39 = arith.constant 0 : index
      %c0_40 = arith.constant 0 : index
      %57 = vector.load %arg5[%c0_38, %c0_39, %c0_40] : memref<1x1x8xf32, #tpu.memory_space<vmem>>, vector<1x1x8xf32>
      tpu.vector_store %arg5[%c0_38, %c0_39, %c0_40], %56 {strides = array<i32>} : memref<1x1x8xf32, #tpu.memory_space<vmem>>, vector<1x1x8xf32>,
      %cst_41 = arith.constant 0.000000e+00 : f32
      %58 = vector.broadcast %cst_41 : f32 to vector<1x1x8xf32>
      %c0_42 = arith.constant 0 : index
      %c0_43 = arith.constant 0 : index
      %c0_44 = arith.constant 0 : index
      %59 = vector.load %arg6[%c0_42, %c0_43, %c0_44] : memref<1x1x8xf32, #tpu.memory_space<vmem>>, vector<1x1x8xf32>
      tpu.vector_store %arg6[%c0_42, %c0_43, %c0_44], %58 {strides = array<i32>} : memref<1x1x8xf32, #tpu.memory_space<vmem>>, vector<1x1x8xf32>,
    } else {
    }
    %c0_23 = arith.constant 0 : index
    %c0_24 = arith.constant 0 : index
    %c0_25 = arith.constant 0 : index
    %45 = vector.load %arg5[%c0_23, %c0_24, %c0_25] : memref<1x1x8xf32, #tpu.memory_space<vmem>>, vector<1x1x8xf32>
    %cst_26 = arith.constant dense<0.000000e+00> : vector<8xf32>
    %46 = vector.multi_reduction <add>, %38, %cst_26 [0] : vector<128x8xf32> to vector<8xf32>
    %47 = vector.shape_cast %46 : vector<8xf32> to vector<1x1x8xf32>
    %48 = arith.addf %45, %47 : vector<1x1x8xf32>
    %c0_27 = arith.constant 0 : index
    %c0_28 = arith.constant 0 : index
    %c0_29 = arith.constant 0 : index
    %49 = vector.load %arg5[%c0_27, %c0_28, %c0_29] : memref<1x1x8xf32, #tpu.memory_space<vmem>>, vector<1x1x8xf32>
    tpu.vector_store %arg5[%c0_27, %c0_28, %c0_29], %48 {strides = array<i32>} : memref<1x1x8xf32, #tpu.memory_space<vmem>>, vector<1x1x8xf32>,
    %c0_30 = arith.constant 0 : index
    %c0_31 = arith.constant 0 : index
    %c0_32 = arith.constant 0 : index
    %50 = vector.load %arg6[%c0_30, %c0_31, %c0_32] : memref<1x1x8xf32, #tpu.memory_space<vmem>>, vector<1x1x8xf32>
    %51 = arith.mulf %38, %38 : vector<128x8xf32>
    %cst_33 = arith.constant dense<0.000000e+00> : vector<8xf32>
    %52 = vector.multi_reduction <add>, %51, %cst_33 [0] : vector<128x8xf32> to vector<8xf32>
    %53 = vector.shape_cast %52 : vector<8xf32> to vector<1x1x8xf32>
    %54 = arith.addf %50, %53 : vector<1x1x8xf32>
    %c0_34 = arith.constant 0 : index
    %c0_35 = arith.constant 0 : index
    %c0_36 = arith.constant 0 : index
    %55 = vector.load %arg6[%c0_34, %c0_35, %c0_36] : memref<1x1x8xf32, #tpu.memory_space<vmem>>, vector<1x1x8xf32>
    tpu.vector_store %arg6[%c0_34, %c0_35, %c0_36], %54 {strides = array<i32>} : memref<1x1x8xf32, #tpu.memory_space<vmem>>, vector<1x1x8xf32>,
    return
  }
  func.func @transform_0(%arg0: i32, %arg1: i32) -> (i32, i32, i32, i32) {
    %c0_i32 = arith.constant 0 : i32
    %c0_i32_0 = arith.constant 0 : i32
    %c0_i32_1 = arith.constant 0 : i32
    %c0_i32_2 = arith.constant 0 : i32
    return %arg0, %c0_i32, %c0_i32_0, %c0_i32_1 : i32, i32, i32, i32
  }
  func.func @transform_1(%arg0: i32, %arg1: i32) -> (i32, i32, i32) {
    %c0_i32 = arith.constant 0 : i32
    %c0_i32_0 = arith.constant 0 : i32
    %c0_i32_1 = arith.constant 0 : i32
    %c0_i32_2 = arith.constant 0 : i32
    return %c0_i32, %c0_i32_0, %c0_i32_1 : i32, i32, i32
  }
  func.func @transform_2(%arg0: i32, %arg1: i32) -> (i32, i32, i32, i32) {
    %c0_i32 = arith.constant 0 : i32
    %c0_i32_0 = arith.constant 0 : i32
    %c0_i32_1 = arith.constant 0 : i32
    return %arg0, %arg1, %c0_i32, %c0_i32_0 : i32, i32, i32, i32
  }
  func.func @transform_3(%arg0: i32, %arg1: i32) -> (i32, i32, i32) {
    %c0_i32 = arith.constant 0 : i32
    %c0_i32_0 = arith.constant 0 : i32
    %c0_i32_1 = arith.constant 0 : i32
    return %arg0, %c0_i32, %c0_i32_0 : i32, i32, i32
  }
  func.func @transform_4(%arg0: i32, %arg1: i32) -> (i32, i32, i32) {
    %c0_i32 = arith.constant 0 : i32
    %c0_i32_0 = arith.constant 0 : i32
    %c0_i32_1 = arith.constant 0 : i32
    return %arg0, %c0_i32, %c0_i32_0 : i32, i32, i32
  }
}

module attributes {stable_mosaic.version = 11 : i64} {
  func.func @kernel(%arg0: i32, %arg1: i32, %arg2: memref<1x8x16x8xbf16, #tpu.memory_space<vmem>>, %arg3: memref<1x8xf32, #tpu.memory_space<vmem>>, %arg4: memref<1x8xf32, #tpu.memory_space<vmem>>, %arg5: memref<1x8x16x8xf32, #tpu.memory_space<vmem>>) attributes {dimension_semantics = [#tpu.dimension_semantics<parallel>, #tpu.dimension_semantics<parallel>], iteration_bounds = array<i64: 2, 2>, scalar_prefetch = 0 : i64, scratch_operands = 0 : i64, tpu.core_type = #tpu.core_type<tc>, window_params = [{transform_indices = @transform_0, window_bounds = array<i64: 1, 8, 16, 8>}, {pipeline_mode = #tpu.pipeline_mode<synchronous>, transform_indices = @transform_1, window_bounds = array<i64: 1, 8>}, {pipeline_mode = #tpu.pipeline_mode<synchronous>, transform_indices = @transform_2, window_bounds = array<i64: 1, 8>}, {transform_indices = @transform_3, window_bounds = array<i64: 1, 8, 16, 8>}]} {
    %c0 = arith.constant 0 : index
    %c0_0 = arith.constant 0 : index
    %c0_1 = arith.constant 0 : index
    %c0_2 = arith.constant 0 : index
    %0 = vector.load %arg2[%c0, %c0_0, %c0_1, %c0_2] : memref<1x8x16x8xbf16, #tpu.memory_space<vmem>>, vector<1x8x16x8xbf16>
    %1 = arith.extf %0 : vector<1x8x16x8xbf16> to vector<1x8x16x8xf32>
    %c0_3 = arith.constant 0 : index
    %c0_4 = arith.constant 0 : index
    %2 = vector.load %arg3[%c0_3, %c0_4] : memref<1x8xf32, #tpu.memory_space<vmem>>, vector<1x8xf32>
    %3 = vector.shape_cast %2 : vector<1x8xf32> to vector<1x1x1x8xf32>
    %4 = vector.broadcast %3 : vector<1x1x1x8xf32> to vector<1x8x16x8xf32>
    %5 = arith.mulf %1, %4 : vector<1x8x16x8xf32>
    %c0_5 = arith.constant 0 : index
    %c0_6 = arith.constant 0 : index
    %6 = vector.load %arg4[%c0_5, %c0_6] : memref<1x8xf32, #tpu.memory_space<vmem>>, vector<1x8xf32>
    %7 = vector.shape_cast %6 : vector<1x8xf32> to vector<1x1x1x8xf32>
    %8 = vector.broadcast %7 : vector<1x1x1x8xf32> to vector<1x8x16x8xf32>
    %9 = arith.addf %5, %8 : vector<1x8x16x8xf32>
    %cst = arith.constant 0.000000e+00 : f32
    %10 = vector.broadcast %cst : f32 to vector<1x8x16x8xf32>
    %11 = arith.maximumf %9, %10 : vector<1x8x16x8xf32>
    %c0_7 = arith.constant 0 : index
    %c0_8 = arith.constant 0 : index
    %c0_9 = arith.constant 0 : index
    %c0_10 = arith.constant 0 : index
    %12 = vector.load %arg5[%c0_7, %c0_8, %c0_9, %c0_10] : memref<1x8x16x8xf32, #tpu.memory_space<vmem>>, vector<1x8x16x8xf32>
    tpu.vector_store %arg5[%c0_7, %c0_8, %c0_9, %c0_10], %11 {strides = array<i32>} : memref<1x8x16x8xf32, #tpu.memory_space<vmem>>, vector<1x8x16x8xf32>,
    return
  }
  func.func @transform_0(%arg0: i32, %arg1: i32) -> (i32, i32, i32, i32) {
    %c0_i32 = arith.constant 0 : i32
    %c0_i32_0 = arith.constant 0 : i32
    %c0_i32_1 = arith.constant 0 : i32
    return %arg0, %arg1, %c0_i32, %c0_i32_0 : i32, i32, i32, i32
  }
  func.func @transform_1(%arg0: i32, %arg1: i32) -> (i32, i32) {
    %c0_i32 = arith.constant 0 : i32
    %c0_i32_0 = arith.constant 0 : i32
    %c0_i32_1 = arith.constant 0 : i32
    return %c0_i32, %c0_i32_0 : i32, i32
  }
  func.func @transform_2(%arg0: i32, %arg1: i32) -> (i32, i32) {
    %c0_i32 = arith.constant 0 : i32
    %c0_i32_0 = arith.constant 0 : i32
    %c0_i32_1 = arith.constant 0 : i32
    return %c0_i32, %c0_i32_0 : i32, i32
  }
  func.func @transform_3(%arg0: i32, %arg1: i32) -> (i32, i32, i32, i32) {
    %c0_i32 = arith.constant 0 : i32
    %c0_i32_0 = arith.constant 0 : i32
    %c0_i32_1 = arith.constant 0 : i32
    return %arg0, %arg1, %c0_i32, %c0_i32_0 : i32, i32, i32, i32
  }
}

</mosaic_0001>

<llo_original>
// kernel: _lambda_.7
$region0: #{_lambda_.7}
  #allocation0 [shape = 'u32[]', space=smem, size = 0x4, offset = 0x4, fixed_abs, tag = 'smem constant byte address 0x4 - core index']
  #allocation1 [shape = 'u32[144,128]{1,0:T(1,128)}', space=vmem, size = 0x12000, scoped, tag = 'internal scratch']
  %s0 = inlined_call_operand.vmem [shape: bf16[2,16,16,8], index: 0, kind: input, shape index: {}]
  %s1 = inlined_call_operand.vmem [shape: f32[1,8], index: 1, kind: input, shape index: {}]
  %s2 = inlined_call_operand.vmem [shape: f32[1,8], index: 2, kind: input, shape index: {}]
  %s3 = inlined_call_operand.vmem [shape: f32[2,16,16,8], index: 3, kind: output, shape index: {}]
  %s4 = sld [smem:[#allocation0]]
  $region45: #{_lambda_.7} parent=0
    _
  %s6 = ssub.s32 1, %s4
  %s7 = scalar_select 0, %s6, %s4
  loop: start=0, step=1, limit=6
  $region2: #{_lambda_.7} parent=0 // loop_pre_header
    _
  $region3: #{_lambda_.7} parent=0 // loop_header
    %s9 = sphi 0, %s13
    %p10 = scmp.ge.s32.totalorder %s9, 6
    %s16 = sphi 0, %s28
    %s17 = sphi 0, %s24
    %s18 = sphi 0, %s16
    %s19 = sphi 0, %s17
    %s20 = sphi 0, %s18
    %s21 = sphi 0, %s19
    %s33 = sphi 0, %s35
    %s36 = sphi 0, %s33
    %s37 = sphi 0, %s36
    %s53 = sphi 0, %s37
    %s57 = sphi 0, %s57
    %s59 = sphi 0, %s57
    %s60 = sphi 0, %s59
    %s74 = sphi 0, %s60
    %s78 = sphi 0, %s78
    %s80 = sphi 0, %s78
    %s81 = sphi 0, %s80
    %s95 = sphi 0, %s81
    %s103 = sphi 0, %s105
    %s106 = sphi 0, %s103
    %s107 = sphi 0, %s106
    %s123 = sphi 0, %s107
  $region4: #{_lambda_.7} parent=0 // loop_header_branch
    %12 = sbr.rel (%p10) target = $region8
  $region5: #{_lambda_.7} parent=0 // loop_body
    %s14 = ssub.s32 %s9, 1
    %s15 = ssub.s32 %s9, 2
    %s22 = sadd.s32 1, %s17
    %p23 = scmp.ge.s32.totalorder %s22, 2
    %s24 = scalar_select %p23, 0, %s22
    %s25 = sadd.s32 1, %s16
    %s26 = scalar_select %p23, %s25, %s16
    %p27 = scmp.ge.s32.totalorder %s26, 2
    %s28 = scalar_select %p27, 0, %s26
    %s29 = ssub.s32 %s16, %s28
    %s30 = ssub.s32 %s17, %s24
    %s31 = sor.u32 %s29, %s30
    %p32 = scmp.eq.s32.totalorder %s31, 0
    %s34 = sadd.s32 %s33, 1
    %s35 = scalar_select %p32, %s33, %s34
    %p38 = pneg %p32
    %p39 = scmp.eq.s32.totalorder %s9, 3
    %p40 = por %p38, %p39
    %p41 = scmp.ne.s32.totalorder %s33, %s36
    %p42 = scmp.eq.s32.totalorder %s9, 0
    %p43 = por %p41, %p42
    %p44 = scmp.ne.s32.totalorder %s33, %s36
    %p45 = scmp.eq.s32.totalorder %s14, 3
    %p46 = por %p44, %p45
    %p47 = scmp.ne.s32.totalorder %s36, %s37
    %p48 = scmp.eq.s32.totalorder %s14, 0
    %p49 = por %p47, %p48
    %p50 = scmp.ne.s32.totalorder %s36, %s37
    %p51 = scmp.eq.s32.totalorder %s15, 3
    %p52 = por %p50, %p51
    %p54 = scmp.ne.s32.totalorder %s37, %s53
    %p55 = scmp.eq.s32.totalorder %s15, 0
    %p56 = por %p54, %p55
    %s58 = sadd.s32 %s57, 1
    %p61 = scmp.eq.s32.totalorder %s9, 3
    %p62 = scmp.ne.s32.totalorder %s57, %s59
    %p63 = scmp.eq.s32.totalorder %s9, 0
    %p64 = por %p62, %p63
    %p65 = scmp.ne.s32.totalorder %s57, %s59
    %p66 = scmp.eq.s32.totalorder %s14, 3
    %p67 = por %p65, %p66
    %p68 = scmp.ne.s32.totalorder %s59, %s60
    %p69 = scmp.eq.s32.totalorder %s14, 0
    %p70 = por %p68, %p69
    %p71 = scmp.ne.s32.totalorder %s59, %s60
    %p72 = scmp.eq.s32.totalorder %s15, 3
    %p73 = por %p71, %p72
    %p75 = scmp.ne.s32.totalorder %s60, %s74
    %p76 = scmp.eq.s32.totalorder %s15, 0
    %p77 = por %p75, %p76
    %s79 = sadd.s32 %s78, 1
    %p82 = scmp.eq.s32.totalorder %s9, 3
    %p83 = scmp.ne.s32.totalorder %s78, %s80
    %p84 = scmp.eq.s32.totalorder %s9, 0
    %p85 = por %p83, %p84
    %p86 = scmp.ne.s32.totalorder %s78, %s80
    %p87 = scmp.eq.s32.totalorder %s14, 3
    %p88 = por %p86, %p87
    %p89 = scmp.ne.s32.totalorder %s80, %s81
    %p90 = scmp.eq.s32.totalorder %s14, 0
    %p91 = por %p89, %p90
    %p92 = scmp.ne.s32.totalorder %s80, %s81
    %p93 = scmp.eq.s32.totalorder %s15, 3
    %p94 = por %p92, %p93
    %p96 = scmp.ne.s32.totalorder %s81, %s95
    %p97 = scmp.eq.s32.totalorder %s15, 0
    %p98 = por %p96, %p97
    %s99 = ssub.s32 %s16, %s28
    %s100 = ssub.s32 %s17, %s24
    %s101 = sor.u32 %s99, %s100
    %p102 = scmp.eq.s32.totalorder %s101, 0
    %s104 = sadd.s32 %s103, 1
    %s105 = scalar_select %p102, %s103, %s104
    %p108 = pneg %p102
    %p109 = scmp.eq.s32.totalorder %s9, 3
    %p110 = por %p108, %p109
    %p111 = scmp.ne.s32.totalorder %s103, %s106
    %p112 = scmp.eq.s32.totalorder %s9, 0
    %p113 = por %p111, %p112
    %p114 = scmp.ne.s32.totalorder %s103, %s106
    %p115 = scmp.eq.s32.totalorder %s14, 3
    %p116 = por %p114, %p115
    %p117 = scmp.ne.s32.totalorder %s106, %s107
    %p118 = scmp.eq.s32.totalorder %s14, 0
    %p119 = por %p117, %p118
    %p120 = scmp.ne.s32.totalorder %s106, %s107
    %p121 = scmp.eq.s32.totalorder %s15, 3
    %p122 = por %p120, %p121
    %p124 = scmp.ne.s32.totalorder %s107, %s123
    %p125 = scmp.eq.s32.totalorder %s15, 0
    %p126 = por %p124, %p125
    %p127 = scmp.le.s32.totalorder 1, %s9
    %p128 = scmp.lt.s32.totalorder %s9, 5
    %p129 = pnand %p127, %p128
    %p130 = pneg %p129
    // Predicated region
    $region9: #{_lambda_.7} parent=5 // pred_check
      _
    $region10: #{_lambda_.7} parent=5 // pred_check_branch
      %132 = sbr.rel (%p129) target = $region12
    $region11: #{_lambda_.7} parent=5 // pred_region
      %s133 = ssub.s32 %s9, 1
      // Predicated region
      $region13: #{_lambda_.7} parent=11 // pred_check
        %p134 = pneg %p70
      $region14: #{_lambda_.7} parent=11 // pred_check_branch
        %136 = sbr.rel (%p134) target = $region16
      $region15: #{_lambda_.7} parent=11 // pred_region
        _
      $region16: #{_lambda_.7} parent=11 // pred_fallthru
        _
      // Predicated region
      $region17: #{_lambda_.7} parent=11 // pred_check
        %p137 = pneg %p91
      $region18: #{_lambda_.7} parent=11 // pred_check_branch
        %139 = sbr.rel (%p137) target = $region20
      $region19: #{_lambda_.7} parent=11 // pred_region
        _
      $region20: #{_lambda_.7} parent=11 // pred_fallthru
        _
    $region12: #{_lambda_.7} parent=5 // pred_fallthru
      _
    %p140 = scmp.lt.s32.totalorder %s9, 4
    // Predicated region
    $region21: #{_lambda_.7} parent=5 // pred_check
      %p141 = pneg %p140
    $region22: #{_lambda_.7} parent=5 // pred_check_branch
      %143 = sbr.rel (%p141) target = $region24
    $region23: #{_lambda_.7} parent=5 // pred_region
      // Predicated region
      $region25: #{_lambda_.7} parent=23 // pred_check
        %p144 = pneg %p43
      $region26: #{_lambda_.7} parent=23 // pred_check_branch
        %146 = sbr.rel (%p144) target = $region28
      $region27: #{_lambda_.7} parent=23 // pred_region
        %s147 = smul.u32 8, %s17
        %p148 = scmp.lt.s32.totalorder %s16, 1
        %s149 = scalar_select %p148, %s16, 1
        %p150 = scmp.lt.s32.totalorder %s147, 15
        %s151 = scalar_select %p150, %s147, 15
        %s152 = smul.addr %s151, 2
        %s153 = smul.addr %s149, 32
        %s154 = sadd.s32 %s152, %s153
        %s155 = smul.addr %s154, 4
        %s156 = scalar_lea.vmem %s0, %s155
        %s157 = smul.u32 8, %s17
      $region28: #{_lambda_.7} parent=23 // pred_fallthru
        _
    $region24: #{_lambda_.7} parent=5 // pred_fallthru
      _
    %p158 = scmp.le.s32.totalorder 1, %s9
    %p159 = scmp.lt.s32.totalorder %s9, 5
    %p160 = pnand %p158, %p159
    %p161 = pneg %p160
    // Predicated region
    $region29: #{_lambda_.7} parent=5 // pred_check
      _
    $region30: #{_lambda_.7} parent=5 // pred_check_branch
      %163 = sbr.rel (%p160) target = $region32
    $region31: #{_lambda_.7} parent=5 // pred_region
      %s164 = ssub.s32 %s9, 1
      %s165 = smul.u32 8, %s19
      %p166 = scmp.lt.s32.totalorder %s18, 1
      %s167 = scalar_select %p166, %s18, 1
      %p168 = scmp.lt.s32.totalorder %s165, 15
      %s169 = scalar_select %p168, %s165, 15
      %s170 = smul.addr %s169, 2
      %s171 = smul.addr %s167, 32
      %s172 = sadd.s32 %s170, %s171
      %s173 = smul.addr %s172, 4
      %s174 = scalar_lea.vmem %s0, %s173
      %p175 = pneg %p49
      %p176 = pneg %p46
      %p177 = pneg %p70
      %p178 = pneg %p67
      %p179 = pneg %p91
      %p180 = pneg %p88
      %p181 = pneg %p119
      %p182 = pneg %p116
      %s183 = smul.u32 8, %s19
      %p184 = scmp.lt.s32.totalorder %s18, 1
      %s185 = scalar_select %p184, %s18, 1
      %p186 = scmp.lt.s32.totalorder %s183, 15
      %s187 = scalar_select %p186, %s183, 15
      %s188 = smul.addr %s187, 2
      %s189 = smul.addr %s185, 32
      %s190 = sadd.s32 %s188, %s189
      %s191 = smul.addr %s190, 8
      %s192 = scalar_lea.vmem %s3, %s191
      %s193 = smul.u32 8, %s19
      %p194 = scmp.lt.s32.totalorder %s18, 1
      %s195 = scalar_select %p194, %s18, 1
      %p196 = scmp.lt.s32.totalorder %s193, 15
      %s197 = scalar_select %p196, %s193, 15
      %s198 = smul.addr %s197, 2
      %s199 = smul.addr %s195, 32
      %s200 = sadd.s32 %s198, %s199
      %s201 = smul.addr %s200, 4
      %s202 = scalar_lea.vmem %s0, %s201
      %s203 = smul.u32 8, %s19
      %s204 = smul.u32 8, %s19
      %p205 = scmp.lt.s32.totalorder %s18, 1
      %s206 = scalar_select %p205, %s18, 1
      %p207 = scmp.lt.s32.totalorder %s204, 15
      %s208 = scalar_select %p207, %s204, 15
      %s209 = smul.addr %s208, 2
      %s210 = smul.addr %s206, 32
      %s211 = sadd.s32 %s209, %s210
      %s212 = smul.addr %s211, 8
      %s213 = scalar_lea.vmem %s3, %s212
      %s214 = smul.u32 8, %s19
      %v215 = vld [vmem:[%s202] sm:$0xf]
      %v216 = vld [vmem:[%s202 + $0x4] sm:$0xf]
      %v217 = vld [vmem:[%s202 + $0x8] sm:$0xf]
      %v218 = vld [vmem:[%s202 + $0xc] sm:$0xf]
      %v219 = vld [vmem:[%s202 + $0x10] sm:$0xf]
      %v220 = vld [vmem:[%s202 + $0x14] sm:$0xf]
      %v221 = vld [vmem:[%s202 + $0x18] sm:$0xf]
      %v222 = vld [vmem:[%s202 + $0x1c] sm:$0xf]
      %v223 = vld [vmem:[%s202 + $0x20] sm:$0xf]
      %v224 = vld [vmem:[%s202 + $0x24] sm:$0xf]
      %v225 = vld [vmem:[%s202 + $0x28] sm:$0xf]
      %v226 = vld [vmem:[%s202 + $0x2c] sm:$0xf]
      %v227 = vld [vmem:[%s202 + $0x30] sm:$0xf]
      %v228 = vld [vmem:[%s202 + $0x34] sm:$0xf]
      %v229 = vld [vmem:[%s202 + $0x38] sm:$0xf]
      %v230 = vld [vmem:[%s202 + $0x3c] sm:$0xf]
      %v231 = vunpack.c.l.bf16 %v215
      %v232 = vunpack.c.l.bf16 %v216
      %v233 = vunpack.c.l.bf16 %v217
      %v234 = vunpack.c.l.bf16 %v218
      %v235 = vunpack.c.l.bf16 %v219
      %v236 = vunpack.c.l.bf16 %v220
      %v237 = vunpack.c.l.bf16 %v221
      %v238 = vunpack.c.l.bf16 %v222
      %v239 = vunpack.c.l.bf16 %v223
      %v240 = vunpack.c.l.bf16 %v224
      %v241 = vunpack.c.l.bf16 %v225
      %v242 = vunpack.c.l.bf16 %v226
      %v243 = vunpack.c.l.bf16 %v227
      %v244 = vunpack.c.l.bf16 %v228
      %v245 = vunpack.c.l.bf16 %v229
      %v246 = vunpack.c.l.bf16 %v230
      %v247 = vld [vmem:[%s1] sm:$0x1]
      %v249 = vlaneseq
      %v250 = vshrl.u32 %v249, 7
      %v251 = vsub.s32 0, %v250
      %v252 = vrot.slane %v247, %v251
      %v254 = vmul.f32 %v231, %v252
      %v255 = vmul.f32 %v232, %v252
      %v256 = vmul.f32 %v233, %v252
      %v257 = vmul.f32 %v234, %v252
      %v258 = vmul.f32 %v235, %v252
      %v259 = vmul.f32 %v236, %v252
      %v260 = vmul.f32 %v237, %v252
      %v261 = vmul.f32 %v238, %v252
      %v262 = vmul.f32 %v239, %v252
      %v263 = vmul.f32 %v240, %v252
      %v264 = vmul.f32 %v241, %v252
      %v265 = vmul.f32 %v242, %v252
      %v266 = vmul.f32 %v243, %v252
      %v267 = vmul.f32 %v244, %v252
      %v268 = vmul.f32 %v245, %v252
      %v269 = vmul.f32 %v246, %v252
      %v270 = vld [vmem:[%s2] sm:$0x1]
      %v272 = vlaneseq
      %v273 = vshrl.u32 %v272, 7
      %v274 = vsub.s32 0, %v273
      %v275 = vrot.slane %v270, %v274
      %v277 = vadd.f32 %v254, %v275
      %v278 = vadd.f32 %v255, %v275
      %v279 = vadd.f32 %v256, %v275
      %v280 = vadd.f32 %v257, %v275
      %v281 = vadd.f32 %v258, %v275
      %v282 = vadd.f32 %v259, %v275
      %v283 = vadd.f32 %v260, %v275
      %v284 = vadd.f32 %v261, %v275
      %v285 = vadd.f32 %v262, %v275
      %v286 = vadd.f32 %v263, %v275
      %v287 = vadd.f32 %v264, %v275
      %v288 = vadd.f32 %v265, %v275
      %v289 = vadd.f32 %v266, %v275
      %v290 = vadd.f32 %v267, %v275
      %v291 = vadd.f32 %v268, %v275
      %v292 = vadd.f32 %v269, %v275
      %v293 = vmax.f32 %v277, 0.0
      %v294 = vmax.f32 %v278, 0.0
      %v295 = vmax.f32 %v279, 0.0
      %v296 = vmax.f32 %v280, 0.0
      %v297 = vmax.f32 %v281, 0.0
      %v298 = vmax.f32 %v282, 0.0
      %v299 = vmax.f32 %v283, 0.0
      %v300 = vmax.f32 %v284, 0.0
      %v301 = vmax.f32 %v285, 0.0
      %v302 = vmax.f32 %v286, 0.0
      %v303 = vmax.f32 %v287, 0.0
      %v304 = vmax.f32 %v288, 0.0
      %v305 = vmax.f32 %v289, 0.0
      %v306 = vmax.f32 %v290, 0.0
      %v307 = vmax.f32 %v291, 0.0
      %v308 = vmax.f32 %v292, 0.0
      %vm309 = vcmask 64512
      %310 = vst.msk [vmem:[%s213] sm:$0xff] %vm309, %v293
      %311 = vst.msk [vmem:[%s213 + $0x8] sm:$0xff] %vm309, %v294
      %312 = vst.msk [vmem:[%s213 + $0x10] sm:$0xff] %vm309, %v295
      %313 = vst.msk [vmem:[%s213 + $0x18] sm:$0xff] %vm309, %v296
      %314 = vst.msk [vmem:[%s213 + $0x20] sm:$0xff] %vm309, %v297
      %315 = vst.msk [vmem:[%s213 + $0x28] sm:$0xff] %vm309, %v298
      %316 = vst.msk [vmem:[%s213 + $0x30] sm:$0xff] %vm309, %v299
      %317 = vst.msk [vmem:[%s213 + $0x38] sm:$0xff] %vm309, %v300
      %318 = vst.msk [vmem:[%s213 + $0x40] sm:$0xff] %vm309, %v301
      %319 = vst.msk [vmem:[%s213 + $0x48] sm:$0xff] %vm309, %v302
      %320 = vst.msk [vmem:[%s213 + $0x50] sm:$0xff] %vm309, %v303
      %321 = vst.msk [vmem:[%s213 + $0x58] sm:$0xff] %vm309, %v304
      %322 = vst.msk [vmem:[%s213 + $0x60] sm:$0xff] %vm309, %v305
      %323 = vst.msk [vmem:[%s213 + $0x68] sm:$0xff] %vm309, %v306
      %324 = vst.msk [vmem:[%s213 + $0x70] sm:$0xff] %vm309, %v307
      %325 = vst.msk [vmem:[%s213 + $0x78] sm:$0xff] %vm309, %v308
      %s326 = smul.u32 8, %s19
      %p327 = scmp.lt.s32.totalorder %s18, 1
      %s328 = scalar_select %p327, %s18, 1
      %p329 = scmp.lt.s32.totalorder %s326, 15
      %s330 = scalar_select %p329, %s326, 15
      %s331 = smul.addr %s330, 2
      %s332 = smul.addr %s328, 32
      %s333 = sadd.s32 %s331, %s332
      %s334 = smul.addr %s333, 8
      %s335 = scalar_lea.vmem %s3, %s334
      // Predicated region
      $region33: #{_lambda_.7} parent=31 // pred_check
        %p336 = pneg %p116
      $region34: #{_lambda_.7} parent=31 // pred_check_branch
        %338 = sbr.rel (%p336) target = $region36
      $region35: #{_lambda_.7} parent=31 // pred_region
        %s339 = smul.u32 8, %s19
      $region36: #{_lambda_.7} parent=31 // pred_fallthru
        _
    $region32: #{_lambda_.7} parent=5 // pred_fallthru
      _
    %p340 = scmp.le.s32.totalorder 2, %s9
    // Predicated region
    $region37: #{_lambda_.7} parent=5 // pred_check
      %p341 = pneg %p340
    $region38: #{_lambda_.7} parent=5 // pred_check_branch
      %343 = sbr.rel (%p341) target = $region40
    $region39: #{_lambda_.7} parent=5 // pred_region
      %s344 = ssub.s32 %s9, 2
      // Predicated region
      $region41: #{_lambda_.7} parent=39 // pred_check
        %p345 = pneg %p122
      $region42: #{_lambda_.7} parent=39 // pred_check_branch
        %347 = sbr.rel (%p345) target = $region44
      $region43: #{_lambda_.7} parent=39 // pred_region
        %s348 = smul.u32 8, %s21
        %p349 = scmp.lt.s32.totalorder %s20, 1
        %s350 = scalar_select %p349, %s20, 1
        %p351 = scmp.lt.s32.totalorder %s348, 15
        %s352 = scalar_select %p351, %s348, 15
        %s353 = smul.addr %s352, 2
        %s354 = smul.addr %s350, 32
        %s355 = sadd.s32 %s353, %s354
        %s356 = smul.addr %s355, 8
        %s357 = scalar_lea.vmem %s3, %s356
      $region44: #{_lambda_.7} parent=39 // pred_fallthru
        _
    $region40: #{_lambda_.7} parent=5 // pred_fallthru
      _
  $region6: #{_lambda_.7} parent=0 // loop_footer
    %s13 = sadd.s32 1, %s9
  $region7: #{_lambda_.7} parent=0 // loop_footer_branch
    %8 = sbr.rel target = $region3
  $region8: #{_lambda_.7} parent=0 // loop_exit
    _

// kernel: _lambda_.5
$region0: #{_lambda_.5}
  #allocation0 [shape = 'u32[]', space=smem, size = 0x4, offset = 0x4, fixed_abs, tag = 'smem constant byte address 0x4 - core index']
  #allocation1 [shape = 'u32[144,128]{1,0:T(1,128)}', space=vmem, size = 0x12000, scoped, tag = 'internal scratch']
  %s0 = inlined_call_operand.vmem [shape: bf16[2,24,16,8], index: 0, kind: input, shape index: {}]
  %s1 = inlined_call_operand.vmem [shape: f32[1,8], index: 1, kind: input, shape index: {}]
  %s2 = inlined_call_operand.vmem [shape: f32[1,8], index: 2, kind: input, shape index: {}]
  %s3 = inlined_call_operand.vmem [shape: bf16[2,24,18,8], index: 3, kind: output, shape index: {}]
  %s4 = sld [smem:[#allocation0]]
  $region45: #{_lambda_.5} parent=0
    _
  %s6 = ssub.s32 1, %s4
  %s7 = scalar_select 0, %s6, %s4
  loop: start=0, step=1, limit=8
  $region2: #{_lambda_.5} parent=0 // loop_pre_header
    _
  $region3: #{_lambda_.5} parent=0 // loop_header
    %s9 = sphi 0, %s13
    %p10 = scmp.ge.s32.totalorder %s9, 8
    %s16 = sphi 0, %s28
    %s17 = sphi 0, %s24
    %s18 = sphi 0, %s16
    %s19 = sphi 0, %s17
    %s20 = sphi 0, %s18
    %s21 = sphi 0, %s19
    %s33 = sphi 0, %s35
    %s36 = sphi 0, %s33
    %s37 = sphi 0, %s36
    %s53 = sphi 0, %s37
    %s57 = sphi 0, %s57
    %s59 = sphi 0, %s57
    %s60 = sphi 0, %s59
    %s74 = sphi 0, %s60
    %s78 = sphi 0, %s78
    %s80 = sphi 0, %s78
    %s81 = sphi 0, %s80
    %s95 = sphi 0, %s81
    %s103 = sphi 0, %s105
    %s106 = sphi 0, %s103
    %s107 = sphi 0, %s106
    %s123 = sphi 0, %s107
  $region4: #{_lambda_.5} parent=0 // loop_header_branch
    %12 = sbr.rel (%p10) target = $region8
  $region5: #{_lambda_.5} parent=0 // loop_body
    %s14 = ssub.s32 %s9, 1
    %s15 = ssub.s32 %s9, 2
    %s22 = sadd.s32 1, %s17
    %p23 = scmp.ge.s32.totalorder %s22, 3
    %s24 = scalar_select %p23, 0, %s22
    %s25 = sadd.s32 1, %s16
    %s26 = scalar_select %p23, %s25, %s16
    %p27 = scmp.ge.s32.totalorder %s26, 2
    %s28 = scalar_select %p27, 0, %s26
    %s29 = ssub.s32 %s16, %s28
    %s30 = ssub.s32 %s17, %s24
    %s31 = sor.u32 %s29, %s30
    %p32 = scmp.eq.s32.totalorder %s31, 0
    %s34 = sadd.s32 %s33, 1
    %s35 = scalar_select %p32, %s33, %s34
    %p38 = pneg %p32
    %p39 = scmp.eq.s32.totalorder %s9, 5
    %p40 = por %p38, %p39
    %p41 = scmp.ne.s32.totalorder %s33, %s36
    %p42 = scmp.eq.s32.totalorder %s9, 0
    %p43 = por %p41, %p42
    %p44 = scmp.ne.s32.totalorder %s33, %s36
    %p45 = scmp.eq.s32.totalorder %s14, 5
    %p46 = por %p44, %p45
    %p47 = scmp.ne.s32.totalorder %s36, %s37
    %p48 = scmp.eq.s32.totalorder %s14, 0
    %p49 = por %p47, %p48
    %p50 = scmp.ne.s32.totalorder %s36, %s37
    %p51 = scmp.eq.s32.totalorder %s15, 5
    %p52 = por %p50, %p51
    %p54 = scmp.ne.s32.totalorder %s37, %s53
    %p55 = scmp.eq.s32.totalorder %s15, 0
    %p56 = por %p54, %p55
    %s58 = sadd.s32 %s57, 1
    %p61 = scmp.eq.s32.totalorder %s9, 5
    %p62 = scmp.ne.s32.totalorder %s57, %s59
    %p63 = scmp.eq.s32.totalorder %s9, 0
    %p64 = por %p62, %p63
    %p65 = scmp.ne.s32.totalorder %s57, %s59
    %p66 = scmp.eq.s32.totalorder %s14, 5
    %p67 = por %p65, %p66
    %p68 = scmp.ne.s32.totalorder %s59, %s60
    %p69 = scmp.eq.s32.totalorder %s14, 0
    %p70 = por %p68, %p69
    %p71 = scmp.ne.s32.totalorder %s59, %s60
    %p72 = scmp.eq.s32.totalorder %s15, 5
    %p73 = por %p71, %p72
    %p75 = scmp.ne.s32.totalorder %s60, %s74
    %p76 = scmp.eq.s32.totalorder %s15, 0
    %p77 = por %p75, %p76
    %s79 = sadd.s32 %s78, 1
    %p82 = scmp.eq.s32.totalorder %s9, 5
    %p83 = scmp.ne.s32.totalorder %s78, %s80
    %p84 = scmp.eq.s32.totalorder %s9, 0
    %p85 = por %p83, %p84
    %p86 = scmp.ne.s32.totalorder %s78, %s80
    %p87 = scmp.eq.s32.totalorder %s14, 5
    %p88 = por %p86, %p87
    %p89 = scmp.ne.s32.totalorder %s80, %s81
    %p90 = scmp.eq.s32.totalorder %s14, 0
    %p91 = por %p89, %p90
    %p92 = scmp.ne.s32.totalorder %s80, %s81
    %p93 = scmp.eq.s32.totalorder %s15, 5
    %p94 = por %p92, %p93
    %p96 = scmp.ne.s32.totalorder %s81, %s95
    %p97 = scmp.eq.s32.totalorder %s15, 0
    %p98 = por %p96, %p97
    %s99 = ssub.s32 %s16, %s28
    %s100 = ssub.s32 %s17, %s24
    %s101 = sor.u32 %s99, %s100
    %p102 = scmp.eq.s32.totalorder %s101, 0
    %s104 = sadd.s32 %s103, 1
    %s105 = scalar_select %p102, %s103, %s104
    %p108 = pneg %p102
    %p109 = scmp.eq.s32.totalorder %s9, 5
    %p110 = por %p108, %p109
    %p111 = scmp.ne.s32.totalorder %s103, %s106
    %p112 = scmp.eq.s32.totalorder %s9, 0
    %p113 = por %p111, %p112
    %p114 = scmp.ne.s32.totalorder %s103, %s106
    %p115 = scmp.eq.s32.totalorder %s14, 5
    %p116 = por %p114, %p115
    %p117 = scmp.ne.s32.totalorder %s106, %s107
    %p118 = scmp.eq.s32.totalorder %s14, 0
    %p119 = por %p117, %p118
    %p120 = scmp.ne.s32.totalorder %s106, %s107
    %p121 = scmp.eq.s32.totalorder %s15, 5
    %p122 = por %p120, %p121
    %p124 = scmp.ne.s32.totalorder %s107, %s123
    %p125 = scmp.eq.s32.totalorder %s15, 0
    %p126 = por %p124, %p125
    %p127 = scmp.le.s32.totalorder 1, %s9
    %p128 = scmp.lt.s32.totalorder %s9, 7
    %p129 = pnand %p127, %p128
    %p130 = pneg %p129
    // Predicated region
    $region9: #{_lambda_.5} parent=5 // pred_check
      _
    $region10: #{_lambda_.5} parent=5 // pred_check_branch
      %132 = sbr.rel (%p129) target = $region12
    $region11: #{_lambda_.5} parent=5 // pred_region
      %s133 = ssub.s32 %s9, 1
      // Predicated region
      $region13: #{_lambda_.5} parent=11 // pred_check
        %p134 = pneg %p70
      $region14: #{_lambda_.5} parent=11 // pred_check_branch
        %136 = sbr.rel (%p134) target = $region16
      $region15: #{_lambda_.5} parent=11 // pred_region
        _
      $region16: #{_lambda_.5} parent=11 // pred_fallthru
        _
      // Predicated region
      $region17: #{_lambda_.5} parent=11 // pred_check
        %p137 = pneg %p91
      $region18: #{_lambda_.5} parent=11 // pred_check_branch
        %139 = sbr.rel (%p137) target = $region20
      $region19: #{_lambda_.5} parent=11 // pred_region
        _
      $region20: #{_lambda_.5} parent=11 // pred_fallthru
        _
    $region12: #{_lambda_.5} parent=5 // pred_fallthru
      _
    %p140 = scmp.lt.s32.totalorder %s9, 6
    // Predicated region
    $region21: #{_lambda_.5} parent=5 // pred_check
      %p141 = pneg %p140
    $region22: #{_lambda_.5} parent=5 // pred_check_branch
      %143 = sbr.rel (%p141) target = $region24
    $region23: #{_lambda_.5} parent=5 // pred_region
      // Predicated region
      $region25: #{_lambda_.5} parent=23 // pred_check
        %p144 = pneg %p43
      $region26: #{_lambda_.5} parent=23 // pred_check_branch
        %146 = sbr.rel (%p144) target = $region28
      $region27: #{_lambda_.5} parent=23 // pred_region
        %s147 = smul.u32 8, %s17
        %p148 = scmp.lt.s32.totalorder %s16, 1
        %s149 = scalar_select %p148, %s16, 1
        %p150 = scmp.lt.s32.totalorder %s147, 23
        %s151 = scalar_select %p150, %s147, 23
        %s152 = smul.addr %s151, 2
        %s153 = smul.addr %s149, 48
        %s154 = sadd.s32 %s152, %s153
        %s155 = smul.addr %s154, 4
        %s156 = scalar_lea.vmem %s0, %s155
        %s157 = smul.u32 8, %s17
      $region28: #{_lambda_.5} parent=23 // pred_fallthru
        _
    $region24: #{_lambda_.5} parent=5 // pred_fallthru
      _
    %p158 = scmp.le.s32.totalorder 1, %s9
    %p159 = scmp.lt.s32.totalorder %s9, 7
    %p160 = pnand %p158, %p159
    %p161 = pneg %p160
    // Predicated region
    $region29: #{_lambda_.5} parent=5 // pred_check
      _
    $region30: #{_lambda_.5} parent=5 // pred_check_branch
      %163 = sbr.rel (%p160) target = $region32
    $region31: #{_lambda_.5} parent=5 // pred_region
      %s164 = ssub.s32 %s9, 1
      %s165 = smul.u32 8, %s19
      %p166 = scmp.lt.s32.totalorder %s18, 1
      %s167 = scalar_select %p166, %s18, 1
      %p168 = scmp.lt.s32.totalorder %s165, 23
      %s169 = scalar_select %p168, %s165, 23
      %s170 = smul.addr %s169, 2
      %s171 = smul.addr %s167, 48
      %s172 = sadd.s32 %s170, %s171
      %s173 = smul.addr %s172, 4
      %s174 = scalar_lea.vmem %s0, %s173
      %p175 = pneg %p49
      %p176 = pneg %p46
      %p177 = pneg %p70
      %p178 = pneg %p67
      %p179 = pneg %p91
      %p180 = pneg %p88
      %p181 = pneg %p119
      %p182 = pneg %p116
      %s183 = smul.u32 8, %s19
      %p184 = scmp.lt.s32.totalorder %s18, 1
      %s185 = scalar_select %p184, %s18, 1
      %p186 = scmp.lt.s32.totalorder %s183, 23
      %s187 = scalar_select %p186, %s183, 23
      %s188 = smul.addr %s187, 3
      %s189 = smul.addr %s185, 72
      %s190 = sadd.s32 %s188, %s189
      %s191 = smul.addr %s190, 4
      %s192 = scalar_lea.vmem %s3, %s191
      %s193 = smul.u32 8, %s19
      %p194 = scmp.lt.s32.totalorder %s18, 1
      %s195 = scalar_select %p194, %s18, 1
      %p196 = scmp.lt.s32.totalorder %s193, 23
      %s197 = scalar_select %p196, %s193, 23
      %s198 = smul.addr %s197, 2
      %s199 = smul.addr %s195, 48
      %s200 = sadd.s32 %s198, %s199
      %s201 = smul.addr %s200, 4
      %s202 = scalar_lea.vmem %s0, %s201
      %s203 = smul.u32 8, %s19
      %s204 = smul.u32 8, %s19
      %p205 = scmp.lt.s32.totalorder %s18, 1
      %s206 = scalar_select %p205, %s18, 1
      %p207 = scmp.lt.s32.totalorder %s204, 23
      %s208 = scalar_select %p207, %s204, 23
      %s209 = smul.addr %s208, 3
      %s210 = smul.addr %s206, 72
      %s211 = sadd.s32 %s209, %s210
      %s212 = smul.addr %s211, 4
      %s213 = scalar_lea.vmem %s3, %s212
      %s214 = smul.u32 8, %s19
      %v215 = vld [vmem:[%s202] sm:$0xf]
      %v216 = vld [vmem:[%s202 + $0x4] sm:$0xf]
      %v217 = vld [vmem:[%s202 + $0x8] sm:$0xf]
      %v218 = vld [vmem:[%s202 + $0xc] sm:$0xf]
      %v219 = vld [vmem:[%s202 + $0x10] sm:$0xf]
      %v220 = vld [vmem:[%s202 + $0x14] sm:$0xf]
      %v221 = vld [vmem:[%s202 + $0x18] sm:$0xf]
      %v222 = vld [vmem:[%s202 + $0x1c] sm:$0xf]
      %v223 = vld [vmem:[%s202 + $0x20] sm:$0xf]
      %v224 = vld [vmem:[%s202 + $0x24] sm:$0xf]
      %v225 = vld [vmem:[%s202 + $0x28] sm:$0xf]
      %v226 = vld [vmem:[%s202 + $0x2c] sm:$0xf]
      %v227 = vld [vmem:[%s202 + $0x30] sm:$0xf]
      %v228 = vld [vmem:[%s202 + $0x34] sm:$0xf]
      %v229 = vld [vmem:[%s202 + $0x38] sm:$0xf]
      %v230 = vld [vmem:[%s202 + $0x3c] sm:$0xf]
      %v231 = vunpack.c.l.bf16 %v215
      %v232 = vunpack.c.l.bf16 %v216
      %v233 = vunpack.c.l.bf16 %v217
      %v234 = vunpack.c.l.bf16 %v218
      %v235 = vunpack.c.l.bf16 %v219
      %v236 = vunpack.c.l.bf16 %v220
      %v237 = vunpack.c.l.bf16 %v221
      %v238 = vunpack.c.l.bf16 %v222
      %v239 = vunpack.c.l.bf16 %v223
      %v240 = vunpack.c.l.bf16 %v224
      %v241 = vunpack.c.l.bf16 %v225
      %v242 = vunpack.c.l.bf16 %v226
      %v243 = vunpack.c.l.bf16 %v227
      %v244 = vunpack.c.l.bf16 %v228
      %v245 = vunpack.c.l.bf16 %v229
      %v246 = vunpack.c.l.bf16 %v230
      %v247 = vld [vmem:[%s1] sm:$0x1]
      %v249 = vlaneseq
      %v250 = vshrl.u32 %v249, 7
      %v251 = vsub.s32 0, %v250
      %v252 = vrot.slane %v247, %v251
      %v254 = vmul.f32 %v231, %v252
      %v255 = vmul.f32 %v232, %v252
      %v256 = vmul.f32 %v233, %v252
      %v257 = vmul.f32 %v234, %v252
      %v258 = vmul.f32 %v235, %v252
      %v259 = vmul.f32 %v236, %v252
      %v260 = vmul.f32 %v237, %v252
      %v261 = vmul.f32 %v238, %v252
      %v262 = vmul.f32 %v239, %v252
      %v263 = vmul.f32 %v240, %v252
      %v264 = vmul.f32 %v241, %v252
      %v265 = vmul.f32 %v242, %v252
      %v266 = vmul.f32 %v243, %v252
      %v267 = vmul.f32 %v244, %v252
      %v268 = vmul.f32 %v245, %v252
      %v269 = vmul.f32 %v246, %v252
      %v270 = vld [vmem:[%s2] sm:$0x1]
      %v272 = vlaneseq
      %v273 = vshrl.u32 %v272, 7
      %v274 = vsub.s32 0, %v273
      %v275 = vrot.slane %v270, %v274
      %v277 = vadd.f32 %v254, %v275
      %v278 = vadd.f32 %v255, %v275
      %v279 = vadd.f32 %v256, %v275
      %v280 = vadd.f32 %v257, %v275
      %v281 = vadd.f32 %v258, %v275
      %v282 = vadd.f32 %v259, %v275
      %v283 = vadd.f32 %v260, %v275
      %v284 = vadd.f32 %v261, %v275
      %v285 = vadd.f32 %v262, %v275
      %v286 = vadd.f32 %v263, %v275
      %v287 = vadd.f32 %v264, %v275
      %v288 = vadd.f32 %v265, %v275
      %v289 = vadd.f32 %v266, %v275
      %v290 = vadd.f32 %v267, %v275
      %v291 = vadd.f32 %v268, %v275
      %v292 = vadd.f32 %v269, %v275
      %v293 = vmax.f32 %v277, 0.0
      %v294 = vmax.f32 %v278, 0.0
      %v295 = vmax.f32 %v279, 0.0
      %v296 = vmax.f32 %v280, 0.0
      %v297 = vmax.f32 %v281, 0.0
      %v298 = vmax.f32 %v282, 0.0
      %v299 = vmax.f32 %v283, 0.0
      %v300 = vmax.f32 %v284, 0.0
      %v301 = vmax.f32 %v285, 0.0
      %v302 = vmax.f32 %v286, 0.0
      %v303 = vmax.f32 %v287, 0.0
      %v304 = vmax.f32 %v288, 0.0
      %v305 = vmax.f32 %v289, 0.0
      %v306 = vmax.f32 %v290, 0.0
      %v307 = vmax.f32 %v291, 0.0
      %v308 = vmax.f32 %v292, 0.0
      %v309 = vlaneseq
      %v310 = vshrl.u32 %v309, 7
      %s311 = smul.u32 %s19, 8
      %v312 = vstv %s311
      %v313 = vadd.s32 %v312, %v310
      %vm314 = vcmp.ge.s32.totalorder %v313, 1
      %vm315 = vcmp.le.s32.totalorder %v313, 16
      %vm316 = vmand %vm314, %vm315
      %v317 = vsel %vm316, 1, 0
      %v318 = vlaneseq
      %v319 = vshrl.u32 %v318, 7
      %v320 = vsub.s32 0, %v319
      %v321 = vrot.slane %v317, %v320
      %v322 = vlaneseq
      %v323 = vshrl.u32 %v322, 7
      %v324 = vsub.s32 1, %v323
      %v325 = vrot.slane %v317, %v324
      %v326 = vlaneseq
      %v327 = vshrl.u32 %v326, 7
      %v328 = vsub.s32 2, %v327
      %v329 = vrot.slane %v317, %v328
      %v330 = vlaneseq
      %v331 = vshrl.u32 %v330, 7
      %v332 = vsub.s32 3, %v331
      %v333 = vrot.slane %v317, %v332
      %v334 = vlaneseq
      %v335 = vshrl.u32 %v334, 7
      %v336 = vsub.s32 4, %v335
      %v337 = vrot.slane %v317, %v336
      %v338 = vlaneseq
      %v339 = vshrl.u32 %v338, 7
      %v340 = vsub.s32 5, %v339
      %v341 = vrot.slane %v317, %v340
      %v342 = vlaneseq
      %v343 = vshrl.u32 %v342, 7
      %v344 = vsub.s32 6, %v343
      %v345 = vrot.slane %v317, %v344
      %v346 = vlaneseq
      %v347 = vshrl.u32 %v346, 7
      %v348 = vsub.s32 7, %v347
      %v349 = vrot.slane %v317, %v348
      %vm350 = vcmp.ne.s32.totalorder %v321, 0
      %vm351 = vcmp.ne.s32.totalorder %v325, 0
      %vm352 = vcmp.ne.s32.totalorder %v329, 0
      %vm353 = vcmp.ne.s32.totalorder %v333, 0
      %vm354 = vcmp.ne.s32.totalorder %v337, 0
      %vm355 = vcmp.ne.s32.totalorder %v341, 0
      %vm356 = vcmp.ne.s32.totalorder %v345, 0
      %vm357 = vcmp.ne.s32.totalorder %v349, 0
      %v358 = vsel %vm350, 1, 0
      %v359 = vsel %vm351, 1, 0
      %v360 = vsel %vm352, 1, 0
      %v361 = vsel %vm353, 1, 0
      %v362 = vsel %vm354, 1, 0
      %v363 = vsel %vm355, 1, 0
      %v364 = vsel %vm356, 1, 0
      %v365 = vsel %vm357, 1, 0
      %vm366 = vcmp.eq.s32.totalorder %v358, 1
      %vm367 = vcmp.eq.s32.totalorder %v359, 1
      %vm368 = vcmp.eq.s32.totalorder %v360, 1
      %vm369 = vcmp.eq.s32.totalorder %v361, 1
      %vm370 = vcmp.eq.s32.totalorder %v362, 1
      %vm371 = vcmp.eq.s32.totalorder %v363, 1
      %vm372 = vcmp.eq.s32.totalorder %v364, 1
      %vm373 = vcmp.eq.s32.totalorder %v365, 1
      %v374 = vsel %vm366, %v293, 0.0
      %v375 = vsel %vm366, %v294, 0.0
      %v376 = vsel %vm367, %v295, 0.0
      %v377 = vsel %vm367, %v296, 0.0
      %v378 = vsel %vm368, %v297, 0.0
      %v379 = vsel %vm368, %v298, 0.0
      %v380 = vsel %vm369, %v299, 0.0
      %v381 = vsel %vm369, %v300, 0.0
      %v382 = vsel %vm370, %v301, 0.0
      %v383 = vsel %vm370, %v302, 0.0
      %v384 = vsel %vm371, %v303, 0.0
      %v385 = vsel %vm371, %v304, 0.0
      %v386 = vsel %vm372, %v305, 0.0
      %v387 = vsel %vm372, %v306, 0.0
      %v388 = vsel %vm373, %v307, 0.0
      %v389 = vsel %vm373, %v308, 0.0
      %vm406 = vcmask 1040384
      %v407 = vrot.slane %v374, 7
      %v408 = vrot.slane %v375, 7
      %v409 = vsel %vm406, %v407, %v408
      %v410 = vrot.slane %v376, 7
      %v411 = vrot.slane %v377, 7
      %v412 = vsel %vm406, %v410, %v411
      %v413 = vrot.slane %v378, 7
      %v414 = vrot.slane %v379, 7
      %v415 = vsel %vm406, %v413, %v414
      %v416 = vrot.slane %v380, 7
      %v417 = vrot.slane %v381, 7
      %v418 = vsel %vm406, %v416, %v417
      %v419 = vrot.slane %v382, 7
      %v420 = vrot.slane %v383, 7
      %v421 = vsel %vm406, %v419, %v420
      %v422 = vrot.slane %v384, 7
      %v423 = vrot.slane %v385, 7
      %v424 = vsel %vm406, %v422, %v423
      %v425 = vrot.slane %v386, 7
      %v426 = vrot.slane %v387, 7
      %v427 = vsel %vm406, %v425, %v426
      %v428 = vrot.slane %v388, 7
      %v429 = vrot.slane %v389, 7
      %v430 = vsel %vm406, %v428, %v429
      %v455 = vsel %vm406, 0.0, %v407
      %v456 = vsel %vm406, 0.0, %v410
      %v457 = vsel %vm406, 0.0, %v413
      %v458 = vsel %vm406, 0.0, %v416
      %v459 = vsel %vm406, 0.0, %v419
      %v460 = vsel %vm406, 0.0, %v422
      %v461 = vsel %vm406, 0.0, %v425
      %v462 = vsel %vm406, 0.0, %v428
      %v463 = vsel %vm406, %v408, 0.0
      %v464 = vsel %vm406, %v411, 0.0
      %v465 = vsel %vm406, %v414, 0.0
      %v466 = vsel %vm406, %v417, 0.0
      %v467 = vsel %vm406, %v420, 0.0
      %v468 = vsel %vm406, %v423, 0.0
      %v469 = vsel %vm406, %v426, 0.0
      %v470 = vsel %vm406, %v429, 0.0
      %v471 = vpack.c.bf16 %v409, %v455
      %v472 = vpack.c.bf16 %v463, %v463
      %v473 = vpack.c.bf16 %v412, %v456
      %v474 = vpack.c.bf16 %v464, %v464
      %v475 = vpack.c.bf16 %v415, %v457
      %v476 = vpack.c.bf16 %v465, %v465
      %v477 = vpack.c.bf16 %v418, %v458
      %v478 = vpack.c.bf16 %v466, %v466
      %v479 = vpack.c.bf16 %v421, %v459
      %v480 = vpack.c.bf16 %v467, %v467
      %v481 = vpack.c.bf16 %v424, %v460
      %v482 = vpack.c.bf16 %v468, %v468
      %v483 = vpack.c.bf16 %v427, %v461
      %v484 = vpack.c.bf16 %v469, %v469
      %v485 = vpack.c.bf16 %v430, %v462
      %v486 = vpack.c.bf16 %v470, %v470
      %v503 = vunpack.c.l.b16 %v471
      %v504 = vunpack.c.h.b16 %v471
      %v505 = vunpack.c.l.b16 %v472
      %v506 = vunpack.c.l.b16 %v473
      %v507 = vunpack.c.h.b16 %v473
      %v508 = vunpack.c.l.b16 %v474
      %v509 = vunpack.c.l.b16 %v475
      %v510 = vunpack.c.h.b16 %v475
      %v511 = vunpack.c.l.b16 %v476
      %v512 = vunpack.c.l.b16 %v477
      %v513 = vunpack.c.h.b16 %v477
      %v514 = vunpack.c.l.b16 %v478
      %v515 = vunpack.c.l.b16 %v479
      %v516 = vunpack.c.h.b16 %v479
      %v517 = vunpack.c.l.b16 %v480
      %v518 = vunpack.c.l.b16 %v481
      %v519 = vunpack.c.h.b16 %v481
      %v520 = vunpack.c.l.b16 %v482
      %v521 = vunpack.c.l.b16 %v483
      %v522 = vunpack.c.h.b16 %v483
      %v523 = vunpack.c.l.b16 %v484
      %v524 = vunpack.c.l.b16 %v485
      %v525 = vunpack.c.h.b16 %v485
      %v526 = vunpack.c.l.b16 %v486
      %v527 = vpack.c.b16 %v503, %v503
      %v528 = vpack.c.b16 %v504, %v504
      %v529 = vpack.c.b16 %v505, %v505
      %v530 = vpack.c.b16 %v506, %v506
      %v531 = vpack.c.b16 %v507, %v507
      %v532 = vpack.c.b16 %v508, %v508
      %v533 = vpack.c.b16 %v509, %v509
      %v534 = vpack.c.b16 %v510, %v510
      %v535 = vpack.c.b16 %v511, %v511
      %v536 = vpack.c.b16 %v512, %v512
      %v537 = vpack.c.b16 %v513, %v513
      %v538 = vpack.c.b16 %v514, %v514
      %v539 = vpack.c.b16 %v515, %v515
      %v540 = vpack.c.b16 %v516, %v516
      %v541 = vpack.c.b16 %v517, %v517
      %v542 = vpack.c.b16 %v518, %v518
      %v543 = vpack.c.b16 %v519, %v519
      %v544 = vpack.c.b16 %v520, %v520
      %v545 = vpack.c.b16 %v521, %v521
      %v546 = vpack.c.b16 %v522, %v522
      %v547 = vpack.c.b16 %v523, %v523
      %v548 = vpack.c.b16 %v524, %v524
      %v549 = vpack.c.b16 %v525, %v525
      %v550 = vpack.c.b16 %v526, %v526
      %vm575 = vcmask 60416
      %576 = vst.msk [vmem:[%s213] sm:$0xf] %vm575, %v527
      %577 = vst.msk [vmem:[%s213 + $0x4] sm:$0xf] %vm575, %v528
      %vm578 = vcmask 57344
      %579 = vst.msk [vmem:[%s213 + $0x8] sm:$0x1] %vm578, %v529
      %580 = vst.msk [vmem:[%s213 + $0xc] sm:$0xf] %vm575, %v530
      %581 = vst.msk [vmem:[%s213 + $0x10] sm:$0xf] %vm575, %v531
      %582 = vst.msk [vmem:[%s213 + $0x14] sm:$0x1] %vm578, %v532
      %583 = vst.msk [vmem:[%s213 + $0x18] sm:$0xf] %vm575, %v533
      %584 = vst.msk [vmem:[%s213 + $0x1c] sm:$0xf] %vm575, %v534
      %585 = vst.msk [vmem:[%s213 + $0x20] sm:$0x1] %vm578, %v535
      %586 = vst.msk [vmem:[%s213 + $0x24] sm:$0xf] %vm575, %v536
      %587 = vst.msk [vmem:[%s213 + $0x28] sm:$0xf] %vm575, %v537
      %588 = vst.msk [vmem:[%s213 + $0x2c] sm:$0x1] %vm578, %v538
      %589 = vst.msk [vmem:[%s213 + $0x30] sm:$0xf] %vm575, %v539
      %590 = vst.msk [vmem:[%s213 + $0x34] sm:$0xf] %vm575, %v540
      %591 = vst.msk [vmem:[%s213 + $0x38] sm:$0x1] %vm578, %v541
      %592 = vst.msk [vmem:[%s213 + $0x3c] sm:$0xf] %vm575, %v542
      %593 = vst.msk [vmem:[%s213 + $0x40] sm:$0xf] %vm575, %v543
      %594 = vst.msk [vmem:[%s213 + $0x44] sm:$0x1] %vm578, %v544
      %595 = vst.msk [vmem:[%s213 + $0x48] sm:$0xf] %vm575, %v545
      %596 = vst.msk [vmem:[%s213 + $0x4c] sm:$0xf] %vm575, %v546
      %597 = vst.msk [vmem:[%s213 + $0x50] sm:$0x1] %vm578, %v547
      %598 = vst.msk [vmem:[%s213 + $0x54] sm:$0xf] %vm575, %v548
      %599 = vst.msk [vmem:[%s213 + $0x58] sm:$0xf] %vm575, %v549
      %600 = vst.msk [vmem:[%s213 + $0x5c] sm:$0x1] %vm578, %v550
      %s601 = smul.u32 8, %s19
      %p602 = scmp.lt.s32.totalorder %s18, 1
      %s603 = scalar_select %p602, %s18, 1
      %p604 = scmp.lt.s32.totalorder %s601, 23
      %s605 = scalar_select %p604, %s601, 23
      %s606 = smul.addr %s605, 3
      %s607 = smul.addr %s603, 72
      %s608 = sadd.s32 %s606, %s607
      %s609 = smul.addr %s608, 4
      %s610 = scalar_lea.vmem %s3, %s609
      // Predicated region
      $region33: #{_lambda_.5} parent=31 // pred_check
        %p611 = pneg %p116
      $region34: #{_lambda_.5} parent=31 // pred_check_branch
        %613 = sbr.rel (%p611) target = $region36
      $region35: #{_lambda_.5} parent=31 // pred_region
        %s614 = smul.u32 8, %s19
      $region36: #{_lambda_.5} parent=31 // pred_fallthru
        _
    $region32: #{_lambda_.5} parent=5 // pred_fallthru
      _
    %p615 = scmp.le.s32.totalorder 2, %s9
    // Predicated region
    $region37: #{_lambda_.5} parent=5 // pred_check
      %p616 = pneg %p615
    $region38: #{_lambda_.5} parent=5 // pred_check_branch
      %618 = sbr.rel (%p616) target = $region40
    $region39: #{_lambda_.5} parent=5 // pred_region
      %s619 = ssub.s32 %s9, 2
      // Predicated region
      $region41: #{_lambda_.5} parent=39 // pred_check
        %p620 = pneg %p122
      $region42: #{_lambda_.5} parent=39 // pred_check_branch
        %622 = sbr.rel (%p620) target = $region44
      $region43: #{_lambda_.5} parent=39 // pred_region
        %s623 = smul.u32 8, %s21
        %p624 = scmp.lt.s32.totalorder %s20, 1
        %s625 = scalar_select %p624, %s20, 1
        %p626 = scmp.lt.s32.totalorder %s623, 23
        %s627 = scalar_select %p626, %s623, 23
        %s628 = smul.addr %s627, 3
        %s629 = smul.addr %s625, 72
        %s630 = sadd.s32 %s628, %s629
        %s631 = smul.addr %s630, 4
        %s632 = scalar_lea.vmem %s3, %s631
      $region44: #{_lambda_.5} parent=39 // pred_fallthru
        _
    $region40: #{_lambda_.5} parent=5 // pred_fallthru
      _
  $region6: #{_lambda_.5} parent=0 // loop_footer
    %s13 = sadd.s32 1, %s9
  $region7: #{_lambda_.5} parent=0 // loop_footer_branch
    %8 = sbr.rel target = $region3
  $region8: #{_lambda_.5} parent=0 // loop_exit
    _

// kernel: _lambda_.4
$region0: #{_lambda_.4}
  #allocation0 [shape = 'u32[]', space=smem, size = 0x4, offset = 0x4, fixed_abs, tag = 'smem constant byte address 0x4 - core index']
  #allocation1 [shape = 'u32[144,128]{1,0:T(1,128)}', space=vmem, size = 0x12000, scoped, tag = 'internal scratch']
  %s0 = inlined_call_operand.vmem [shape: bf16[2,26,18,4], index: 0, kind: input, shape index: {}]
  %s1 = inlined_call_operand.vmem [shape: bf16[3,12,8], index: 1, kind: input, shape index: {}]
  %s2 = inlined_call_operand.vmem [shape: bf16[2,24,16,8], index: 2, kind: output, shape index: {0}]
  %s3 = inlined_call_operand.vmem [shape: f32[2,1,8], index: 3, kind: output, shape index: {1}]
  %s4 = inlined_call_operand.vmem [shape: f32[2,1,8], index: 4, kind: output, shape index: {2}]
  %5 = xla_tuple %s2, %s3, %s4
  %s6 = sld [smem:[#allocation0]]
  $region61: #{_lambda_.4} parent=0
    _
  %s8 = ssub.s32 1, %s6
  %s9 = scalar_select 0, %s8, %s6
  loop: start=0, step=1, limit=8
  $region2: #{_lambda_.4} parent=0 // loop_pre_header
    _
  $region3: #{_lambda_.4} parent=0 // loop_header
    %s11 = sphi 0, %s15
    %p12 = scmp.ge.s32.totalorder %s11, 8
    %s18 = sphi 0, %s30
    %s19 = sphi 0, %s26
    %s20 = sphi 0, %s18
    %s21 = sphi 0, %s19
    %s22 = sphi 0, %s20
    %s23 = sphi 0, %s21
    %s33 = sphi 0, %s35
    %s36 = sphi 0, %s33
    %s37 = sphi 0, %s36
    %s53 = sphi 0, %s37
    %s57 = sphi 0, %s57
    %s59 = sphi 0, %s57
    %s60 = sphi 0, %s59
    %s74 = sphi 0, %s60
    %s82 = sphi 0, %s84
    %s85 = sphi 0, %s82
    %s86 = sphi 0, %s85
    %s102 = sphi 0, %s86
    %s108 = sphi 0, %s110
    %s111 = sphi 0, %s108
    %s112 = sphi 0, %s111
    %s128 = sphi 0, %s112
    %s134 = sphi 0, %s136
    %s137 = sphi 0, %s134
    %s138 = sphi 0, %s137
    %s154 = sphi 0, %s138
  $region4: #{_lambda_.4} parent=0 // loop_header_branch
    %14 = sbr.rel (%p12) target = $region8
  $region5: #{_lambda_.4} parent=0 // loop_body
    %s16 = ssub.s32 %s11, 1
    %s17 = ssub.s32 %s11, 2
    %s24 = sadd.s32 1, %s19
    %p25 = scmp.ge.s32.totalorder %s24, 3
    %s26 = scalar_select %p25, 0, %s24
    %s27 = sadd.s32 1, %s18
    %s28 = scalar_select %p25, %s27, %s18
    %p29 = scmp.ge.s32.totalorder %s28, 2
    %s30 = scalar_select %p29, 0, %s28
    %s31 = ssub.s32 %s18, %s30
    %p32 = scmp.eq.s32.totalorder %s31, 0
    %s34 = sadd.s32 %s33, 1
    %s35 = scalar_select %p32, %s33, %s34
    %p38 = pneg %p32
    %p39 = scmp.eq.s32.totalorder %s11, 5
    %p40 = por %p38, %p39
    %p41 = scmp.ne.s32.totalorder %s33, %s36
    %p42 = scmp.eq.s32.totalorder %s11, 0
    %p43 = por %p41, %p42
    %p44 = scmp.ne.s32.totalorder %s33, %s36
    %p45 = scmp.eq.s32.totalorder %s16, 5
    %p46 = por %p44, %p45
    %p47 = scmp.ne.s32.totalorder %s36, %s37
    %p48 = scmp.eq.s32.totalorder %s16, 0
    %p49 = por %p47, %p48
    %p50 = scmp.ne.s32.totalorder %s36, %s37
    %p51 = scmp.eq.s32.totalorder %s17, 5
    %p52 = por %p50, %p51
    %p54 = scmp.ne.s32.totalorder %s37, %s53
    %p55 = scmp.eq.s32.totalorder %s17, 0
    %p56 = por %p54, %p55
    %s58 = sadd.s32 %s57, 1
    %p61 = scmp.eq.s32.totalorder %s11, 5
    %p62 = scmp.ne.s32.totalorder %s57, %s59
    %p63 = scmp.eq.s32.totalorder %s11, 0
    %p64 = por %p62, %p63
    %p65 = scmp.ne.s32.totalorder %s57, %s59
    %p66 = scmp.eq.s32.totalorder %s16, 5
    %p67 = por %p65, %p66
    %p68 = scmp.ne.s32.totalorder %s59, %s60
    %p69 = scmp.eq.s32.totalorder %s16, 0
    %p70 = por %p68, %p69
    %p71 = scmp.ne.s32.totalorder %s59, %s60
    %p72 = scmp.eq.s32.totalorder %s17, 5
    %p73 = por %p71, %p72
    %p75 = scmp.ne.s32.totalorder %s60, %s74
    %p76 = scmp.eq.s32.totalorder %s17, 0
    %p77 = por %p75, %p76
    %s78 = ssub.s32 %s18, %s30
    %s79 = ssub.s32 %s19, %s26
    %s80 = sor.u32 %s78, %s79
    %p81 = scmp.eq.s32.totalorder %s80, 0
    %s83 = sadd.s32 %s82, 1
    %s84 = scalar_select %p81, %s82, %s83
    %p87 = pneg %p81
    %p88 = scmp.eq.s32.totalorder %s11, 5
    %p89 = por %p87, %p88
    %p90 = scmp.ne.s32.totalorder %s82, %s85
    %p91 = scmp.eq.s32.totalorder %s11, 0
    %p92 = por %p90, %p91
    %p93 = scmp.ne.s32.totalorder %s82, %s85
    %p94 = scmp.eq.s32.totalorder %s16, 5
    %p95 = por %p93, %p94
    %p96 = scmp.ne.s32.totalorder %s85, %s86
    %p97 = scmp.eq.s32.totalorder %s16, 0
    %p98 = por %p96, %p97
    %p99 = scmp.ne.s32.totalorder %s85, %s86
    %p100 = scmp.eq.s32.totalorder %s17, 5
    %p101 = por %p99, %p100
    %p103 = scmp.ne.s32.totalorder %s86, %s102
    %p104 = scmp.eq.s32.totalorder %s17, 0
    %p105 = por %p103, %p104
    %s106 = ssub.s32 %s18, %s30
    %p107 = scmp.eq.s32.totalorder %s106, 0
    %s109 = sadd.s32 %s108, 1
    %s110 = scalar_select %p107, %s108, %s109
    %p113 = pneg %p107
    %p114 = scmp.eq.s32.totalorder %s11, 5
    %p115 = por %p113, %p114
    %p116 = scmp.ne.s32.totalorder %s108, %s111
    %p117 = scmp.eq.s32.totalorder %s11, 0
    %p118 = por %p116, %p117
    %p119 = scmp.ne.s32.totalorder %s108, %s111
    %p120 = scmp.eq.s32.totalorder %s16, 5
    %p121 = por %p119, %p120
    %p122 = scmp.ne.s32.totalorder %s111, %s112
    %p123 = scmp.eq.s32.totalorder %s16, 0
    %p124 = por %p122, %p123
    %p125 = scmp.ne.s32.totalorder %s111, %s112
    %p126 = scmp.eq.s32.totalorder %s17, 5
    %p127 = por %p125, %p126
    %p129 = scmp.ne.s32.totalorder %s112, %s128
    %p130 = scmp.eq.s32.totalorder %s17, 0
    %p131 = por %p129, %p130
    %s132 = ssub.s32 %s18, %s30
    %p133 = scmp.eq.s32.totalorder %s132, 0
    %s135 = sadd.s32 %s134, 1
    %s136 = scalar_select %p133, %s134, %s135
    %p139 = pneg %p133
    %p140 = scmp.eq.s32.totalorder %s11, 5
    %p141 = por %p139, %p140
    %p142 = scmp.ne.s32.totalorder %s134, %s137
    %p143 = scmp.eq.s32.totalorder %s11, 0
    %p144 = por %p142, %p143
    %p145 = scmp.ne.s32.totalorder %s134, %s137
    %p146 = scmp.eq.s32.totalorder %s16, 5
    %p147 = por %p145, %p146
    %p148 = scmp.ne.s32.totalorder %s137, %s138
    %p149 = scmp.eq.s32.totalorder %s16, 0
    %p150 = por %p148, %p149
    %p151 = scmp.ne.s32.totalorder %s137, %s138
    %p152 = scmp.eq.s32.totalorder %s17, 5
    %p153 = por %p151, %p152
    %p155 = scmp.ne.s32.totalorder %s138, %s154
    %p156 = scmp.eq.s32.totalorder %s17, 0
    %p157 = por %p155, %p156
    %p158 = scmp.le.s32.totalorder 1, %s11
    %p159 = scmp.lt.s32.totalorder %s11, 7
    %p160 = pnand %p158, %p159
    %p161 = pneg %p160
    // Predicated region
    $region9: #{_lambda_.4} parent=5 // pred_check
      _
    $region10: #{_lambda_.4} parent=5 // pred_check_branch
      %163 = sbr.rel (%p160) target = $region12
    $region11: #{_lambda_.4} parent=5 // pred_region
      %s164 = ssub.s32 %s11, 1
      // Predicated region
      $region13: #{_lambda_.4} parent=11 // pred_check
        %p165 = pneg %p49
      $region14: #{_lambda_.4} parent=11 // pred_check_branch
        %167 = sbr.rel (%p165) target = $region16
      $region15: #{_lambda_.4} parent=11 // pred_region
        %p168 = scmp.lt.s32.totalorder %s20, 1
        %s169 = scalar_select %p168, %s20, 1
        %s170 = smul.addr %s169, 78
        %s171 = smul.addr %s170, 4
        %s172 = scalar_lea.vmem %s0, %s171
      $region16: #{_lambda_.4} parent=11 // pred_fallthru
        _
      // Predicated region
      $region17: #{_lambda_.4} parent=11 // pred_check
        %p173 = pneg %p70
      $region18: #{_lambda_.4} parent=11 // pred_check_branch
        %175 = sbr.rel (%p173) target = $region20
      $region19: #{_lambda_.4} parent=11 // pred_region
        _
      $region20: #{_lambda_.4} parent=11 // pred_fallthru
        _
    $region12: #{_lambda_.4} parent=5 // pred_fallthru
      _
    %p176 = scmp.lt.s32.totalorder %s11, 6
    // Predicated region
    $region21: #{_lambda_.4} parent=5 // pred_check
      %p177 = pneg %p176
    $region22: #{_lambda_.4} parent=5 // pred_check_branch
      %179 = sbr.rel (%p177) target = $region24
    $region23: #{_lambda_.4} parent=5 // pred_region
      _
    $region24: #{_lambda_.4} parent=5 // pred_fallthru
      _
    %p180 = scmp.le.s32.totalorder 1, %s11
    %p181 = scmp.lt.s32.totalorder %s11, 7
    %p182 = pnand %p180, %p181
    %p183 = pneg %p182
    // Predicated region
    $region25: #{_lambda_.4} parent=5 // pred_check
      _
    $region26: #{_lambda_.4} parent=5 // pred_check_branch
      %185 = sbr.rel (%p182) target = $region28
    $region27: #{_lambda_.4} parent=5 // pred_region
      %s186 = ssub.s32 %s11, 1
      %p187 = scmp.lt.s32.totalorder %s20, 1
      %s188 = scalar_select %p187, %s20, 1
      %s189 = smul.addr %s188, 78
      %s190 = smul.addr %s189, 4
      %s191 = scalar_lea.vmem %s0, %s190
      %p192 = pneg %p49
      %p193 = pneg %p46
      %p194 = pneg %p70
      %p195 = pneg %p67
      %p196 = pneg %p98
      %p197 = pneg %p95
      %s198 = smul.u32 8, %s21
      %p199 = scmp.lt.s32.totalorder %s20, 1
      %s200 = scalar_select %p199, %s20, 1
      %p201 = scmp.lt.s32.totalorder %s198, 23
      %s202 = scalar_select %p201, %s198, 23
      %s203 = smul.addr %s202, 2
      %s204 = smul.addr %s200, 48
      %s205 = sadd.s32 %s203, %s204
      %s206 = smul.addr %s205, 4
      %s207 = scalar_lea.vmem %s2, %s206
      %p208 = pneg %p124
      %p209 = pneg %p121
      %p210 = scmp.lt.s32.totalorder %s20, 1
      %s211 = scalar_select %p210, %s20, 1
      %s212 = scalar_lea.vmem %s3, %s211
      %p213 = pneg %p150
      %p214 = pneg %p147
      %p215 = scmp.lt.s32.totalorder %s20, 1
      %s216 = scalar_select %p215, %s20, 1
      %s217 = scalar_lea.vmem %s4, %s216
      %p218 = scmp.lt.s32.totalorder %s20, 1
      %s219 = scalar_select %p218, %s20, 1
      %s220 = smul.addr %s219, 78
      %s221 = smul.addr %s220, 4
      %s222 = scalar_lea.vmem %s0, %s221
      %s223 = smul.u32 8, %s21
      %p224 = scmp.lt.s32.totalorder %s20, 1
      %s225 = scalar_select %p224, %s20, 1
      %p226 = scmp.lt.s32.totalorder %s223, 23
      %s227 = scalar_select %p226, %s223, 23
      %s228 = smul.addr %s227, 2
      %s229 = smul.addr %s225, 48
      %s230 = sadd.s32 %s228, %s229
      %s231 = smul.addr %s230, 4
      %s232 = scalar_lea.vmem %s2, %s231
      %s233 = smul.u32 8, %s21
      %p234 = scmp.lt.s32.totalorder %s20, 1
      %s235 = scalar_select %p234, %s20, 1
      %s236 = scalar_lea.vmem %s3, %s235
      %p237 = scmp.lt.s32.totalorder %s20, 1
      %s238 = scalar_select %p237, %s20, 1
      %s239 = scalar_lea.vmem %s4, %s238
      %s241 = smul.u32 %s21, 8
      %s242 = smul.u32 %s241, 3
      %s243 = smul.addr %s242, 4
      %s244 = scalar_lea.vmem %s222, %s243
      %v245 = vld [vmem:[%s244] sm:$0xf]
      %v246 = vld [vmem:[%s244 + $0x4] sm:$0xf]
      %v247 = vld [vmem:[%s244 + $0x8] sm:$0x1]
      %v248 = vld [vmem:[%s244 + $0xc] sm:$0xf]
      %v249 = vld [vmem:[%s244 + $0x10] sm:$0xf]
      %v250 = vld [vmem:[%s244 + $0x14] sm:$0x1]
      %v251 = vld [vmem:[%s244 + $0x18] sm:$0xf]
      %v252 = vld [vmem:[%s244 + $0x1c] sm:$0xf]
      %v253 = vld [vmem:[%s244 + $0x20] sm:$0x1]
      %v254 = vld [vmem:[%s244 + $0x24] sm:$0xf]
      %v255 = vld [vmem:[%s244 + $0x28] sm:$0xf]
      %v256 = vld [vmem:[%s244 + $0x2c] sm:$0x1]
      %v257 = vld [vmem:[%s244 + $0x30] sm:$0xf]
      %v258 = vld [vmem:[%s244 + $0x34] sm:$0xf]
      %v259 = vld [vmem:[%s244 + $0x38] sm:$0x1]
      %v260 = vld [vmem:[%s244 + $0x3c] sm:$0xf]
      %v261 = vld [vmem:[%s244 + $0x40] sm:$0xf]
      %v262 = vld [vmem:[%s244 + $0x44] sm:$0x1]
      %v263 = vld [vmem:[%s244 + $0x48] sm:$0xf]
      %v264 = vld [vmem:[%s244 + $0x4c] sm:$0xf]
      %v265 = vld [vmem:[%s244 + $0x50] sm:$0x1]
      %v266 = vld [vmem:[%s244 + $0x54] sm:$0xf]
      %v267 = vld [vmem:[%s244 + $0x58] sm:$0xf]
      %v268 = vld [vmem:[%s244 + $0x5c] sm:$0x1]
      %v285 = vunpack.c.l.b16 %v245
      %v286 = vunpack.c.l.b16 %v246
      %v287 = vunpack.c.l.b16 %v248
      %v288 = vunpack.c.l.b16 %v249
      %v289 = vunpack.c.l.b16 %v251
      %v290 = vunpack.c.l.b16 %v252
      %v291 = vunpack.c.l.b16 %v254
      %v292 = vunpack.c.l.b16 %v255
      %v293 = vunpack.c.l.b16 %v257
      %v294 = vunpack.c.l.b16 %v258
      %v295 = vunpack.c.l.b16 %v260
      %v296 = vunpack.c.l.b16 %v261
      %v297 = vunpack.c.l.b16 %v263
      %v298 = vunpack.c.l.b16 %v264
      %v299 = vunpack.c.l.b16 %v266
      %v300 = vunpack.c.l.b16 %v267
      %v301 = vpack.c.b16 %v286, %v285
      %v302 = vpack.c.b16 %v288, %v287
      %v303 = vpack.c.b16 %v290, %v289
      %v304 = vpack.c.b16 %v292, %v291
      %v305 = vpack.c.b16 %v294, %v293
      %v306 = vpack.c.b16 %v296, %v295
      %v307 = vpack.c.b16 %v298, %v297
      %v308 = vpack.c.b16 %v300, %v299
      %v317 = vunpack.c.l.b16 %v247
      %v318 = vunpack.c.l.b16 %v250
      %v319 = vunpack.c.l.b16 %v253
      %v320 = vunpack.c.l.b16 %v256
      %v321 = vunpack.c.l.b16 %v259
      %v322 = vunpack.c.l.b16 %v262
      %v323 = vunpack.c.l.b16 %v265
      %v324 = vunpack.c.l.b16 %v268
      %v325 = vpack.c.b16 %v317, %v317
      %v326 = vpack.c.b16 %v318, %v318
      %v327 = vpack.c.b16 %v319, %v319
      %v328 = vpack.c.b16 %v320, %v320
      %v329 = vpack.c.b16 %v321, %v321
      %v330 = vpack.c.b16 %v322, %v322
      %v331 = vpack.c.b16 %v323, %v323
      %v332 = vpack.c.b16 %v324, %v324
      %vm333 = vsmask.f32 7424
      %v335 = vshrl.u32 %v301, 16
      %v337 = vshll.u32 %v301, 16
      %v339 = vrot.slane %v337, 1
      %v340 = vor.u32 %v335, %v339
      %v342 = vshll.u32 %v325, 16
      %v344 = vrot.slane %v342, 1
      %v345 = vsel %vm333, %v340, %v344
      %v347 = vshrl.u32 %v302, 16
      %v349 = vshll.u32 %v302, 16
      %v351 = vrot.slane %v349, 1
      %v352 = vor.u32 %v347, %v351
      %v354 = vshll.u32 %v326, 16
      %v356 = vrot.slane %v354, 1
      %v357 = vsel %vm333, %v352, %v356
      %v359 = vshrl.u32 %v303, 16
      %v361 = vshll.u32 %v303, 16
      %v363 = vrot.slane %v361, 1
      %v364 = vor.u32 %v359, %v363
      %v366 = vshll.u32 %v327, 16
      %v368 = vrot.slane %v366, 1
      %v369 = vsel %vm333, %v364, %v368
      %v371 = vshrl.u32 %v304, 16
      %v373 = vshll.u32 %v304, 16
      %v375 = vrot.slane %v373, 1
      %v376 = vor.u32 %v371, %v375
      %v378 = vshll.u32 %v328, 16
      %v380 = vrot.slane %v378, 1
      %v381 = vsel %vm333, %v376, %v380
      %v383 = vshrl.u32 %v305, 16
      %v385 = vshll.u32 %v305, 16
      %v387 = vrot.slane %v385, 1
      %v388 = vor.u32 %v383, %v387
      %v390 = vshll.u32 %v329, 16
      %v392 = vrot.slane %v390, 1
      %v393 = vsel %vm333, %v388, %v392
      %v395 = vshrl.u32 %v306, 16
      %v397 = vshll.u32 %v306, 16
      %v399 = vrot.slane %v397, 1
      %v400 = vor.u32 %v395, %v399
      %v402 = vshll.u32 %v330, 16
      %v404 = vrot.slane %v402, 1
      %v405 = vsel %vm333, %v400, %v404
      %v407 = vshrl.u32 %v307, 16
      %v409 = vshll.u32 %v307, 16
      %v411 = vrot.slane %v409, 1
      %v412 = vor.u32 %v407, %v411
      %v414 = vshll.u32 %v331, 16
      %v416 = vrot.slane %v414, 1
      %v417 = vsel %vm333, %v412, %v416
      %v419 = vshrl.u32 %v308, 16
      %v421 = vshll.u32 %v308, 16
      %v423 = vrot.slane %v421, 1
      %v424 = vor.u32 %v419, %v423
      %v426 = vshll.u32 %v332, 16
      %v428 = vrot.slane %v426, 1
      %v429 = vsel %vm333, %v424, %v428
      %430 = vrot.lane.b32.xlu0 %v345, 4
      %v431 = vpop.permute.xlu0 %430
      %432 = vrot.lane.b32.xlu0 %v357, 4
      %v433 = vpop.permute.xlu0 %432
      %434 = vrot.lane.b32.xlu0 %v369, 4
      %v435 = vpop.permute.xlu0 %434
      %436 = vrot.lane.b32.xlu0 %v381, 4
      %v437 = vpop.permute.xlu0 %436
      %438 = vrot.lane.b32.xlu0 %v393, 4
      %v439 = vpop.permute.xlu0 %438
      %440 = vrot.lane.b32.xlu0 %v405, 4
      %v441 = vpop.permute.xlu0 %440
      %442 = vrot.lane.b32.xlu0 %v417, 4
      %v443 = vpop.permute.xlu0 %442
      %444 = vrot.lane.b32.xlu0 %v429, 4
      %v445 = vpop.permute.xlu0 %444
      %vm446 = vcmask 1046528
      %v447 = vrot.slane %v301, 1
      %v448 = vrot.slane %v325, 1
      %v449 = vsel %vm446, %v447, %v448
      %v450 = vrot.slane %v302, 1
      %v451 = vrot.slane %v326, 1
      %v452 = vsel %vm446, %v450, %v451
      %v453 = vrot.slane %v303, 1
      %v454 = vrot.slane %v327, 1
      %v455 = vsel %vm446, %v453, %v454
      %v456 = vrot.slane %v304, 1
      %v457 = vrot.slane %v328, 1
      %v458 = vsel %vm446, %v456, %v457
      %v459 = vrot.slane %v305, 1
      %v460 = vrot.slane %v329, 1
      %v461 = vsel %vm446, %v459, %v460
      %v462 = vrot.slane %v306, 1
      %v463 = vrot.slane %v330, 1
      %v464 = vsel %vm446, %v462, %v463
      %v465 = vrot.slane %v307, 1
      %v466 = vrot.slane %v331, 1
      %v467 = vsel %vm446, %v465, %v466
      %v468 = vrot.slane %v308, 1
      %v469 = vrot.slane %v332, 1
      %v470 = vsel %vm446, %v468, %v469
      %471 = vrot.lane.b32.xlu0 %v449, 8
      %v472 = vpop.permute.xlu0 %471
      %473 = vrot.lane.b32.xlu0 %v452, 8
      %v474 = vpop.permute.xlu0 %473
      %475 = vrot.lane.b32.xlu0 %v455, 8
      %v476 = vpop.permute.xlu0 %475
      %477 = vrot.lane.b32.xlu0 %v458, 8
      %v478 = vpop.permute.xlu0 %477
      %479 = vrot.lane.b32.xlu0 %v461, 8
      %v480 = vpop.permute.xlu0 %479
      %481 = vrot.lane.b32.xlu0 %v464, 8
      %v482 = vpop.permute.xlu0 %481
      %483 = vrot.lane.b32.xlu0 %v467, 8
      %v484 = vpop.permute.xlu0 %483
      %485 = vrot.lane.b32.xlu0 %v470, 8
      %v486 = vpop.permute.xlu0 %485
      %vm487 = vcmask 31744
      %v489 = vsel %vm487, %v301, %v431
      %v491 = vsel %vm487, %v302, %v433
      %v493 = vsel %vm487, %v303, %v435
      %v495 = vsel %vm487, %v304, %v437
      %v497 = vsel %vm487, %v305, %v439
      %v499 = vsel %vm487, %v306, %v441
      %v501 = vsel %vm487, %v307, %v443
      %v503 = vsel %vm487, %v308, %v445
      %vm504 = vcmask 64512
      %v506 = vsel %vm504, %v489, %v472
      %v508 = vsel %vm504, %v491, %v474
      %v510 = vsel %vm504, %v493, %v476
      %v512 = vsel %vm504, %v495, %v478
      %v514 = vsel %vm504, %v497, %v480
      %v516 = vsel %vm504, %v499, %v482
      %v518 = vsel %vm504, %v501, %v484
      %v520 = vsel %vm504, %v503, %v486
      %v521 = vld [vmem:[%s1] sm:$0xf]
      %v522 = vld [vmem:[%s1 + $0x4] sm:$0x3]
      %s523 = sadd.s32 %s241, 1
      %s524 = smul.u32 %s523, 3
      %s525 = smul.addr %s524, 4
      %s526 = scalar_lea.vmem %s222, %s525
      %v527 = vld [vmem:[%s526] sm:$0xf]
      %v528 = vld [vmem:[%s526 + $0x4] sm:$0xf]
      %v529 = vld [vmem:[%s526 + $0x8] sm:$0x1]
      %v530 = vld [vmem:[%s526 + $0xc] sm:$0xf]
      %v531 = vld [vmem:[%s526 + $0x10] sm:$0xf]
      %v532 = vld [vmem:[%s526 + $0x14] sm:$0x1]
      %v533 = vld [vmem:[%s526 + $0x18] sm:$0xf]
      %v534 = vld [vmem:[%s526 + $0x1c] sm:$0xf]
      %v535 = vld [vmem:[%s526 + $0x20] sm:$0x1]
      %v536 = vld [vmem:[%s526 + $0x24] sm:$0xf]
      %v537 = vld [vmem:[%s526 + $0x28] sm:$0xf]
      %v538 = vld [vmem:[%s526 + $0x2c] sm:$0x1]
      %v539 = vld [vmem:[%s526 + $0x30] sm:$0xf]
      %v540 = vld [vmem:[%s526 + $0x34] sm:$0xf]
      %v541 = vld [vmem:[%s526 + $0x38] sm:$0x1]
      %v542 = vld [vmem:[%s526 + $0x3c] sm:$0xf]
      %v543 = vld [vmem:[%s526 + $0x40] sm:$0xf]
      %v544 = vld [vmem:[%s526 + $0x44] sm:$0x1]
      %v545 = vld [vmem:[%s526 + $0x48] sm:$0xf]
      %v546 = vld [vmem:[%s526 + $0x4c] sm:$0xf]
      %v547 = vld [vmem:[%s526 + $0x50] sm:$0x1]
      %v548 = vld [vmem:[%s526 + $0x54] sm:$0xf]
      %v549 = vld [vmem:[%s526 + $0x58] sm:$0xf]
      %v550 = vld [vmem:[%s526 + $0x5c] sm:$0x1]
      %v567 = vunpack.c.l.b16 %v527
      %v568 = vunpack.c.l.b16 %v528
      %v569 = vunpack.c.l.b16 %v530
      %v570 = vunpack.c.l.b16 %v531
      %v571 = vunpack.c.l.b16 %v533
      %v572 = vunpack.c.l.b16 %v534
      %v573 = vunpack.c.l.b16 %v536
      %v574 = vunpack.c.l.b16 %v537
      %v575 = vunpack.c.l.b16 %v539
      %v576 = vunpack.c.l.b16 %v540
      %v577 = vunpack.c.l.b16 %v542
      %v578 = vunpack.c.l.b16 %v543
      %v579 = vunpack.c.l.b16 %v545
      %v580 = vunpack.c.l.b16 %v546
      %v581 = vunpack.c.l.b16 %v548
      %v582 = vunpack.c.l.b16 %v549
      %v583 = vpack.c.b16 %v568, %v567
      %v584 = vpack.c.b16 %v570, %v569
      %v585 = vpack.c.b16 %v572, %v571
      %v586 = vpack.c.b16 %v574, %v573
      %v587 = vpack.c.b16 %v576, %v575
      %v588 = vpack.c.b16 %v578, %v577
      %v589 = vpack.c.b16 %v580, %v579
      %v590 = vpack.c.b16 %v582, %v581
      %v599 = vunpack.c.l.b16 %v529
      %v600 = vunpack.c.l.b16 %v532
      %v601 = vunpack.c.l.b16 %v535
      %v602 = vunpack.c.l.b16 %v538
      %v603 = vunpack.c.l.b16 %v541
      %v604 = vunpack.c.l.b16 %v544
      %v605 = vunpack.c.l.b16 %v547
      %v606 = vunpack.c.l.b16 %v550
      %v607 = vpack.c.b16 %v599, %v599
      %v608 = vpack.c.b16 %v600, %v600
      %v609 = vpack.c.b16 %v601, %v601
      %v610 = vpack.c.b16 %v602, %v602
      %v611 = vpack.c.b16 %v603, %v603
      %v612 = vpack.c.b16 %v604, %v604
      %v613 = vpack.c.b16 %v605, %v605
      %v614 = vpack.c.b16 %v606, %v606
      %v616 = vshrl.u32 %v583, 16
      %v618 = vshll.u32 %v583, 16
      %v620 = vrot.slane %v618, 1
      %v621 = vor.u32 %v616, %v620
      %v623 = vshll.u32 %v607, 16
      %v625 = vrot.slane %v623, 1
      %v626 = vsel %vm333, %v621, %v625
      %v628 = vshrl.u32 %v584, 16
      %v630 = vshll.u32 %v584, 16
      %v632 = vrot.slane %v630, 1
      %v633 = vor.u32 %v628, %v632
      %v635 = vshll.u32 %v608, 16
      %v637 = vrot.slane %v635, 1
      %v638 = vsel %vm333, %v633, %v637
      %v640 = vshrl.u32 %v585, 16
      %v642 = vshll.u32 %v585, 16
      %v644 = vrot.slane %v642, 1
      %v645 = vor.u32 %v640, %v644
      %v647 = vshll.u32 %v609, 16
      %v649 = vrot.slane %v647, 1
      %v650 = vsel %vm333, %v645, %v649
      %v652 = vshrl.u32 %v586, 16
      %v654 = vshll.u32 %v586, 16
      %v656 = vrot.slane %v654, 1
      %v657 = vor.u32 %v652, %v656
      %v659 = vshll.u32 %v610, 16
      %v661 = vrot.slane %v659, 1
      %v662 = vsel %vm333, %v657, %v661
      %v664 = vshrl.u32 %v587, 16
      %v666 = vshll.u32 %v587, 16
      %v668 = vrot.slane %v666, 1
      %v669 = vor.u32 %v664, %v668
      %v671 = vshll.u32 %v611, 16
      %v673 = vrot.slane %v671, 1
      %v674 = vsel %vm333, %v669, %v673
      %v676 = vshrl.u32 %v588, 16
      %v678 = vshll.u32 %v588, 16
      %v680 = vrot.slane %v678, 1
      %v681 = vor.u32 %v676, %v680
      %v683 = vshll.u32 %v612, 16
      %v685 = vrot.slane %v683, 1
      %v686 = vsel %vm333, %v681, %v685
      %v688 = vshrl.u32 %v589, 16
      %v690 = vshll.u32 %v589, 16
      %v692 = vrot.slane %v690, 1
      %v693 = vor.u32 %v688, %v692
      %v695 = vshll.u32 %v613, 16
      %v697 = vrot.slane %v695, 1
      %v698 = vsel %vm333, %v693, %v697
      %v700 = vshrl.u32 %v590, 16
      %v702 = vshll.u32 %v590, 16
      %v704 = vrot.slane %v702, 1
      %v705 = vor.u32 %v700, %v704
      %v707 = vshll.u32 %v614, 16
      %v709 = vrot.slane %v707, 1
      %v710 = vsel %vm333, %v705, %v709
      %711 = vrot.lane.b32.xlu0 %v626, 4
      %v712 = vpop.permute.xlu0 %711
      %713 = vrot.lane.b32.xlu0 %v638, 4
      %v714 = vpop.permute.xlu0 %713
      %715 = vrot.lane.b32.xlu0 %v650, 4
      %v716 = vpop.permute.xlu0 %715
      %717 = vrot.lane.b32.xlu0 %v662, 4
      %v718 = vpop.permute.xlu0 %717
      %719 = vrot.lane.b32.xlu0 %v674, 4
      %v720 = vpop.permute.xlu0 %719
      %721 = vrot.lane.b32.xlu0 %v686, 4
      %v722 = vpop.permute.xlu0 %721
      %723 = vrot.lane.b32.xlu0 %v698, 4
      %v724 = vpop.permute.xlu0 %723
      %725 = vrot.lane.b32.xlu0 %v710, 4
      %v726 = vpop.permute.xlu0 %725
      %v727 = vrot.slane %v583, 1
      %v728 = vrot.slane %v607, 1
      %v729 = vsel %vm446, %v727, %v728
      %v730 = vrot.slane %v584, 1
      %v731 = vrot.slane %v608, 1
      %v732 = vsel %vm446, %v730, %v731
      %v733 = vrot.slane %v585, 1
      %v734 = vrot.slane %v609, 1
      %v735 = vsel %vm446, %v733, %v734
      %v736 = vrot.slane %v586, 1
      %v737 = vrot.slane %v610, 1
      %v738 = vsel %vm446, %v736, %v737
      %v739 = vrot.slane %v587, 1
      %v740 = vrot.slane %v611, 1
      %v741 = vsel %vm446, %v739, %v740
      %v742 = vrot.slane %v588, 1
      %v743 = vrot.slane %v612, 1
      %v744 = vsel %vm446, %v742, %v743
      %v745 = vrot.slane %v589, 1
      %v746 = vrot.slane %v613, 1
      %v747 = vsel %vm446, %v745, %v746
      %v748 = vrot.slane %v590, 1
      %v749 = vrot.slane %v614, 1
      %v750 = vsel %vm446, %v748, %v749
      %751 = vrot.lane.b32.xlu0 %v729, 8
      %v752 = vpop.permute.xlu0 %751
      %753 = vrot.lane.b32.xlu0 %v732, 8
      %v754 = vpop.permute.xlu0 %753
      %755 = vrot.lane.b32.xlu0 %v735, 8
      %v756 = vpop.permute.xlu0 %755
      %757 = vrot.lane.b32.xlu0 %v738, 8
      %v758 = vpop.permute.xlu0 %757
      %759 = vrot.lane.b32.xlu0 %v741, 8
      %v760 = vpop.permute.xlu0 %759
      %761 = vrot.lane.b32.xlu0 %v744, 8
      %v762 = vpop.permute.xlu0 %761
      %763 = vrot.lane.b32.xlu0 %v747, 8
      %v764 = vpop.permute.xlu0 %763
      %765 = vrot.lane.b32.xlu0 %v750, 8
      %v766 = vpop.permute.xlu0 %765
      %v768 = vsel %vm487, %v583, %v712
      %v770 = vsel %vm487, %v584, %v714
      %v772 = vsel %vm487, %v585, %v716
      %v774 = vsel %vm487, %v586, %v718
      %v776 = vsel %vm487, %v587, %v720
      %v778 = vsel %vm487, %v588, %v722
      %v780 = vsel %vm487, %v589, %v724
      %v782 = vsel %vm487, %v590, %v726
      %v784 = vsel %vm504, %v768, %v752
      %v786 = vsel %vm504, %v770, %v754
      %v788 = vsel %vm504, %v772, %v756
      %v790 = vsel %vm504, %v774, %v758
      %v792 = vsel %vm504, %v776, %v760
      %v794 = vsel %vm504, %v778, %v762
      %v796 = vsel %vm504, %v780, %v764
      %v798 = vsel %vm504, %v782, %v766
      %s799 = scalar_lea.vmem %s1, 8
      %v800 = vld [vmem:[%s799] sm:$0xf]
      %v801 = vld [vmem:[%s799 + $0x4] sm:$0x3]
      %v804 = vunpack.c.l.b16 %v800
      %v805 = vunpack.c.l.b16 %v801
      %v806 = vpack.c.b16 %v805, %v804
      %vm807 = vcmask 97280
      %v808 = vsel %vm807, %v784, 0
      %v810 = vsel %vm807, %v786, 0
      %v812 = vsel %vm807, %v788, 0
      %v814 = vsel %vm807, %v790, 0
      %v816 = vsel %vm807, %v792, 0
      %v818 = vsel %vm807, %v794, 0
      %v820 = vsel %vm807, %v796, 0
      %v822 = vsel %vm807, %v798, 0
      %vm824 = vcmask 1045504
      %v826 = vsel %vm824, %v806, 0
      %828 = vmatprep.subr.bf16.mxu0 0
      %829 = vmatpush1.bf16.msra.mxu0 %v826
      %830 = vmatprep.subr.bf16.mxu0 0
      %831 = vmatpush1.bf16.msra.mxu0 0
      %832 = vmatprep.subr.bf16.mxu0 0
      %833 = vmatpush1.bf16.msra.mxu0 0
      %834 = vmatprep.subr.bf16.mxu0 0
      %835 = vmatpush1.bf16.msra.mxu0 0
      %836 = vmatprep.subr.bf16.mxu0 0
      %837 = vmatpush1.bf16.msra.mxu0 0
      %838 = vmatprep.subr.bf16.mxu0 0
      %839 = vmatpush1.bf16.msra.mxu0 0
      %840 = vmatprep.subr.bf16.mxu0 0
      %841 = vmatpush1.bf16.msra.mxu0 0
      %842 = vmatprep.subr.bf16.mxu0 0
      %843 = vmatpush1.bf16.msra.mxu0 0
      %844 = vmatprep.subr.bf16.mxu0 0
      %845 = vmatpush1.bf16.msra.mxu0 0
      %846 = vmatprep.subr.bf16.mxu0 0
      %847 = vmatpush1.bf16.msra.mxu0 0
      %848 = vmatprep.subr.bf16.mxu0 0
      %849 = vmatpush1.bf16.msra.mxu0 0
      %850 = vmatprep.subr.bf16.mxu0 0
      %851 = vmatpush1.bf16.msra.mxu0 0
      %852 = vmatprep.subr.bf16.mxu0 0
      %853 = vmatpush1.bf16.msra.mxu0 0
      %854 = vmatprep.subr.bf16.mxu0 0
      %855 = vmatpush1.bf16.msra.mxu0 0
      %856 = vmatprep.subr.bf16.mxu0 0
      %857 = vmatpush1.bf16.msra.mxu0 0
      %858 = vmatprep.subr.bf16.mxu0 0
      %859 = vmatpush1.bf16.msra.mxu0 0
      %860 = vmatprep.mubr.bf16.mxu0 0
      %861 = vmatmul.mubr.bf16.gmra.mrb[0].mxu0 %v808
      %v862 = vpop.f32.mrb[0].mxu0
      %v863 = vadd.f32 0.0, %v862
      %v864 = vpop.f32.mrb[0].mxu0
      %v865 = vpop.f32.mrb[0].mxu0
      %v866 = vadd.f32 0.0, %v865
      %v867 = vpop.f32.mrb[0].mxu0
      %868 = vmatprep.mubr.bf16.mxu0 0
      %869 = vmatmul.mubr.bf16.gmra.mrb[0].mxu0 %v810
      %v870 = vpop.f32.mrb[0].mxu0
      %v871 = vadd.f32 0.0, %v870
      %v872 = vpop.f32.mrb[0].mxu0
      %v873 = vpop.f32.mrb[0].mxu0
      %v874 = vadd.f32 0.0, %v873
      %v875 = vpop.f32.mrb[0].mxu0
      %876 = vmatprep.mubr.bf16.mxu0 0
      %877 = vmatmul.mubr.bf16.gmra.mrb[0].mxu0 %v812
      %v878 = vpop.f32.mrb[0].mxu0
      %v879 = vadd.f32 0.0, %v878
      %v880 = vpop.f32.mrb[0].mxu0
      %v881 = vpop.f32.mrb[0].mxu0
      %v882 = vadd.f32 0.0, %v881
      %v883 = vpop.f32.mrb[0].mxu0
      %884 = vmatprep.mubr.bf16.mxu0 0
      %885 = vmatmul.mubr.bf16.gmra.mrb[0].mxu0 %v814
      %v886 = vpop.f32.mrb[0].mxu0
      %v887 = vadd.f32 0.0, %v886
      %v888 = vpop.f32.mrb[0].mxu0
      %v889 = vpop.f32.mrb[0].mxu0
      %v890 = vadd.f32 0.0, %v889
      %v891 = vpop.f32.mrb[0].mxu0
      %892 = vmatprep.mubr.bf16.mxu0 0
      %893 = vmatmul.mubr.bf16.gmra.mrb[0].mxu0 %v816
      %v894 = vpop.f32.mrb[0].mxu0
      %v895 = vadd.f32 0.0, %v894
      %v896 = vpop.f32.mrb[0].mxu0
      %v897 = vpop.f32.mrb[0].mxu0
      %v898 = vadd.f32 0.0, %v897
      %v899 = vpop.f32.mrb[0].mxu0
      %900 = vmatprep.mubr.bf16.mxu0 0
      %901 = vmatmul.mubr.bf16.gmra.mrb[0].mxu0 %v818
      %v902 = vpop.f32.mrb[0].mxu0
      %v903 = vadd.f32 0.0, %v902
      %v904 = vpop.f32.mrb[0].mxu0
      %v905 = vpop.f32.mrb[0].mxu0
      %v906 = vadd.f32 0.0, %v905
      %v907 = vpop.f32.mrb[0].mxu0
      %908 = vmatprep.mubr.bf16.mxu0 0
      %909 = vmatmul.mubr.bf16.gmra.mrb[0].mxu0 %v820
      %v910 = vpop.f32.mrb[0].mxu0
      %v911 = vadd.f32 0.0, %v910
      %v912 = vpop.f32.mrb[0].mxu0
      %v913 = vpop.f32.mrb[0].mxu0
      %v914 = vadd.f32 0.0, %v913
      %v915 = vpop.f32.mrb[0].mxu0
      %916 = vmatprep.mubr.bf16.mxu0 0
      %917 = vmatmul.mubr.bf16.gmra.mrb[0].mxu0 %v822
      %v918 = vpop.f32.mrb[0].mxu0
      %v919 = vadd.f32 0.0, %v918
      %v920 = vpop.f32.mrb[0].mxu0
      %v921 = vpop.f32.mrb[0].mxu0
      %v922 = vadd.f32 0.0, %v921
      %v923 = vpop.f32.mrb[0].mxu0
      %924 = vdwg.mxu0
      %v927 = vunpack.c.l.b16 %v521
      %v928 = vunpack.c.l.b16 %v522
      %v929 = vpack.c.b16 %v928, %v927
      %v930 = vsel %vm807, %v506, 0
      %v932 = vsel %vm807, %v508, 0
      %v934 = vsel %vm807, %v510, 0
      %v936 = vsel %vm807, %v512, 0
      %v938 = vsel %vm807, %v514, 0
      %v940 = vsel %vm807, %v516, 0
      %v942 = vsel %vm807, %v518, 0
      %v944 = vsel %vm807, %v520, 0
      %v947 = vsel %vm824, %v929, 0
      %949 = vmatprep.subr.bf16.mxu0 0
      %950 = vmatpush1.bf16.msra.mxu0 %v947
      %951 = vmatprep.subr.bf16.mxu0 0
      %952 = vmatpush1.bf16.msra.mxu0 0
      %953 = vmatprep.subr.bf16.mxu0 0
      %954 = vmatpush1.bf16.msra.mxu0 0
      %955 = vmatprep.subr.bf16.mxu0 0
      %956 = vmatpush1.bf16.msra.mxu0 0
      %957 = vmatprep.subr.bf16.mxu0 0
      %958 = vmatpush1.bf16.msra.mxu0 0
      %959 = vmatprep.subr.bf16.mxu0 0
      %960 = vmatpush1.bf16.msra.mxu0 0
      %961 = vmatprep.subr.bf16.mxu0 0
      %962 = vmatpush1.bf16.msra.mxu0 0
      %963 = vmatprep.subr.bf16.mxu0 0
      %964 = vmatpush1.bf16.msra.mxu0 0
      %965 = vmatprep.subr.bf16.mxu0 0
      %966 = vmatpush1.bf16.msra.mxu0 0
      %967 = vmatprep.subr.bf16.mxu0 0
      %968 = vmatpush1.bf16.msra.mxu0 0
      %969 = vmatprep.subr.bf16.mxu0 0
      %970 = vmatpush1.bf16.msra.mxu0 0
      %971 = vmatprep.subr.bf16.mxu0 0
      %972 = vmatpush1.bf16.msra.mxu0 0
      %973 = vmatprep.subr.bf16.mxu0 0
      %974 = vmatpush1.bf16.msra.mxu0 0
      %975 = vmatprep.subr.bf16.mxu0 0
      %976 = vmatpush1.bf16.msra.mxu0 0
      %977 = vmatprep.subr.bf16.mxu0 0
      %978 = vmatpush1.bf16.msra.mxu0 0
      %979 = vmatprep.subr.bf16.mxu0 0
      %980 = vmatpush1.bf16.msra.mxu0 0
      %981 = vmatprep.mubr.bf16.mxu0 0
      %982 = vmatmul.mubr.bf16.gmra.mrb[0].mxu0 %v930
      %v983 = vpop.f32.mrb[0].mxu0
      %v984 = vadd.f32 %v863, %v983
      %v985 = vpop.f32.mrb[0].mxu0
      %v986 = vpop.f32.mrb[0].mxu0
      %v987 = vadd.f32 %v866, %v986
      %v988 = vpop.f32.mrb[0].mxu0
      %989 = vmatprep.mubr.bf16.mxu0 0
      %990 = vmatmul.mubr.bf16.gmra.mrb[0].mxu0 %v932
      %v991 = vpop.f32.mrb[0].mxu0
      %v992 = vadd.f32 %v871, %v991
      %v993 = vpop.f32.mrb[0].mxu0
      %v994 = vpop.f32.mrb[0].mxu0
      %v995 = vadd.f32 %v874, %v994
      %v996 = vpop.f32.mrb[0].mxu0
      %997 = vmatprep.mubr.bf16.mxu0 0
      %998 = vmatmul.mubr.bf16.gmra.mrb[0].mxu0 %v934
      %v999 = vpop.f32.mrb[0].mxu0
      %v1000 = vadd.f32 %v879, %v999
      %v1001 = vpop.f32.mrb[0].mxu0
      %v1002 = vpop.f32.mrb[0].mxu0
      %v1003 = vadd.f32 %v882, %v1002
      %v1004 = vpop.f32.mrb[0].mxu0
      %1005 = vmatprep.mubr.bf16.mxu0 0
      %1006 = vmatmul.mubr.bf16.gmra.mrb[0].mxu0 %v936
      %v1007 = vpop.f32.mrb[0].mxu0
      %v1008 = vadd.f32 %v887, %v1007
      %v1009 = vpop.f32.mrb[0].mxu0
      %v1010 = vpop.f32.mrb[0].mxu0
      %v1011 = vadd.f32 %v890, %v1010
      %v1012 = vpop.f32.mrb[0].mxu0
      %1013 = vmatprep.mubr.bf16.mxu0 0
      %1014 = vmatmul.mubr.bf16.gmra.mrb[0].mxu0 %v938
      %v1015 = vpop.f32.mrb[0].mxu0
      %v1016 = vadd.f32 %v895, %v1015
      %v1017 = vpop.f32.mrb[0].mxu0
      %v1018 = vpop.f32.mrb[0].mxu0
      %v1019 = vadd.f32 %v898, %v1018
      %v1020 = vpop.f32.mrb[0].mxu0
      %1021 = vmatprep.mubr.bf16.mxu0 0
      %1022 = vmatmul.mubr.bf16.gmra.mrb[0].mxu0 %v940
      %v1023 = vpop.f32.mrb[0].mxu0
      %v1024 = vadd.f32 %v903, %v1023
      %v1025 = vpop.f32.mrb[0].mxu0
      %v1026 = vpop.f32.mrb[0].mxu0
      %v1027 = vadd.f32 %v906, %v1026
      %v1028 = vpop.f32.mrb[0].mxu0
      %1029 = vmatprep.mubr.bf16.mxu0 0
      %1030 = vmatmul.mubr.bf16.gmra.mrb[0].mxu0 %v942
      %v1031 = vpop.f32.mrb[0].mxu0
      %v1032 = vadd.f32 %v911, %v1031
      %v1033 = vpop.f32.mrb[0].mxu0
      %v1034 = vpop.f32.mrb[0].mxu0
      %v1035 = vadd.f32 %v914, %v1034
      %v1036 = vpop.f32.mrb[0].mxu0
      %1037 = vmatprep.mubr.bf16.mxu0 0
      %1038 = vmatmul.mubr.bf16.gmra.mrb[0].mxu0 %v944
      %v1039 = vpop.f32.mrb[0].mxu0
      %v1040 = vadd.f32 %v919, %v1039
      %v1041 = vpop.f32.mrb[0].mxu0
      %v1042 = vpop.f32.mrb[0].mxu0
      %v1043 = vadd.f32 %v922, %v1042
      %v1044 = vpop.f32.mrb[0].mxu0
      %1045 = vdwg.mxu0
      %s1046 = sadd.s32 %s241, 2
      %s1047 = smul.u32 %s1046, 3
      %s1048 = smul.addr %s1047, 4
      %s1049 = scalar_lea.vmem %s222, %s1048
      %v1050 = vld [vmem:[%s1049] sm:$0xf]
      %v1051 = vld [vmem:[%s1049 + $0x4] sm:$0xf]
      %v1052 = vld [vmem:[%s1049 + $0x8] sm:$0x1]
      %v1053 = vld [vmem:[%s1049 + $0xc] sm:$0xf]
      %v1054 = vld [vmem:[%s1049 + $0x10] sm:$0xf]
      %v1055 = vld [vmem:[%s1049 + $0x14] sm:$0x1]
      %v1056 = vld [vmem:[%s1049 + $0x18] sm:$0xf]
      %v1057 = vld [vmem:[%s1049 + $0x1c] sm:$0xf]
      %v1058 = vld [vmem:[%s1049 + $0x20] sm:$0x1]
      %v1059 = vld [vmem:[%s1049 + $0x24] sm:$0xf]
      %v1060 = vld [vmem:[%s1049 + $0x28] sm:$0xf]
      %v1061 = vld [vmem:[%s1049 + $0x2c] sm:$0x1]
      %v1062 = vld [vmem:[%s1049 + $0x30] sm:$0xf]
      %v1063 = vld [vmem:[%s1049 + $0x34] sm:$0xf]
      %v1064 = vld [vmem:[%s1049 + $0x38] sm:$0x1]
      %v1065 = vld [vmem:[%s1049 + $0x3c] sm:$0xf]
      %v1066 = vld [vmem:[%s1049 + $0x40] sm:$0xf]
      %v1067 = vld [vmem:[%s1049 + $0x44] sm:$0x1]
      %v1068 = vld [vmem:[%s1049 + $0x48] sm:$0xf]
      %v1069 = vld [vmem:[%s1049 + $0x4c] sm:$0xf]
      %v1070 = vld [vmem:[%s1049 + $0x50] sm:$0x1]
      %v1071 = vld [vmem:[%s1049 + $0x54] sm:$0xf]
      %v1072 = vld [vmem:[%s1049 + $0x58] sm:$0xf]
      %v1073 = vld [vmem:[%s1049 + $0x5c] sm:$0x1]
      %v1090 = vunpack.c.l.b16 %v1050
      %v1091 = vunpack.c.l.b16 %v1051
      %v1092 = vunpack.c.l.b16 %v1053
      %v1093 = vunpack.c.l.b16 %v1054
      %v1094 = vunpack.c.l.b16 %v1056
      %v1095 = vunpack.c.l.b16 %v1057
      %v1096 = vunpack.c.l.b16 %v1059
      %v1097 = vunpack.c.l.b16 %v1060
      %v1098 = vunpack.c.l.b16 %v1062
      %v1099 = vunpack.c.l.b16 %v1063
      %v1100 = vunpack.c.l.b16 %v1065
      %v1101 = vunpack.c.l.b16 %v1066
      %v1102 = vunpack.c.l.b16 %v1068
      %v1103 = vunpack.c.l.b16 %v1069
      %v1104 = vunpack.c.l.b16 %v1071
      %v1105 = vunpack.c.l.b16 %v1072
      %v1106 = vpack.c.b16 %v1091, %v1090
      %v1107 = vpack.c.b16 %v1093, %v1092
      %v1108 = vpack.c.b16 %v1095, %v1094
      %v1109 = vpack.c.b16 %v1097, %v1096
      %v1110 = vpack.c.b16 %v1099, %v1098
      %v1111 = vpack.c.b16 %v1101, %v1100
      %v1112 = vpack.c.b16 %v1103, %v1102
      %v1113 = vpack.c.b16 %v1105, %v1104
      %v1122 = vunpack.c.l.b16 %v1052
      %v1123 = vunpack.c.l.b16 %v1055
      %v1124 = vunpack.c.l.b16 %v1058
      %v1125 = vunpack.c.l.b16 %v1061
      %v1126 = vunpack.c.l.b16 %v1064
      %v1127 = vunpack.c.l.b16 %v1067
      %v1128 = vunpack.c.l.b16 %v1070
      %v1129 = vunpack.c.l.b16 %v1073
      %v1130 = vpack.c.b16 %v1122, %v1122
      %v1131 = vpack.c.b16 %v1123, %v1123
      %v1132 = vpack.c.b16 %v1124, %v1124
      %v1133 = vpack.c.b16 %v1125, %v1125
      %v1134 = vpack.c.b16 %v1126, %v1126
      %v1135 = vpack.c.b16 %v1127, %v1127
      %v1136 = vpack.c.b16 %v1128, %v1128
      %v1137 = vpack.c.b16 %v1129, %v1129
      %v1139 = vshrl.u32 %v1106, 16
      %v1141 = vshll.u32 %v1106, 16
      %v1143 = vrot.slane %v1141, 1
      %v1144 = vor.u32 %v1139, %v1143
      %v1146 = vshll.u32 %v1130, 16
      %v1148 = vrot.slane %v1146, 1
      %v1149 = vsel %vm333, %v1144, %v1148
      %v1151 = vshrl.u32 %v1107, 16
      %v1153 = vshll.u32 %v1107, 16
      %v1155 = vrot.slane %v1153, 1
      %v1156 = vor.u32 %v1151, %v1155
      %v1158 = vshll.u32 %v1131, 16
      %v1160 = vrot.slane %v1158, 1
      %v1161 = vsel %vm333, %v1156, %v1160
      %v1163 = vshrl.u32 %v1108, 16
      %v1165 = vshll.u32 %v1108, 16
      %v1167 = vrot.slane %v1165, 1
      %v1168 = vor.u32 %v1163, %v1167
      %v1170 = vshll.u32 %v1132, 16
      %v1172 = vrot.slane %v1170, 1
      %v1173 = vsel %vm333, %v1168, %v1172
      %v1175 = vshrl.u32 %v1109, 16
      %v1177 = vshll.u32 %v1109, 16
      %v1179 = vrot.slane %v1177, 1
      %v1180 = vor.u32 %v1175, %v1179
      %v1182 = vshll.u32 %v1133, 16
      %v1184 = vrot.slane %v1182, 1
      %v1185 = vsel %vm333, %v1180, %v1184
      %v1187 = vshrl.u32 %v1110, 16
      %v1189 = vshll.u32 %v1110, 16
      %v1191 = vrot.slane %v1189, 1
      %v1192 = vor.u32 %v1187, %v1191
      %v1194 = vshll.u32 %v1134, 16
      %v1196 = vrot.slane %v1194, 1
      %v1197 = vsel %vm333, %v1192, %v1196
      %v1199 = vshrl.u32 %v1111, 16
      %v1201 = vshll.u32 %v1111, 16
      %v1203 = vrot.slane %v1201, 1
      %v1204 = vor.u32 %v1199, %v1203
      %v1206 = vshll.u32 %v1135, 16
      %v1208 = vrot.slane %v1206, 1
      %v1209 = vsel %vm333, %v1204, %v1208
      %v1211 = vshrl.u32 %v1112, 16
      %v1213 = vshll.u32 %v1112, 16
      %v1215 = vrot.slane %v1213, 1
      %v1216 = vor.u32 %v1211, %v1215
      %v1218 = vshll.u32 %v1136, 16
      %v1220 = vrot.slane %v1218, 1
      %v1221 = vsel %vm333, %v1216, %v1220
      %v1223 = vshrl.u32 %v1113, 16
      %v1225 = vshll.u32 %v1113, 16
      %v1227 = vrot.slane %v1225, 1
      %v1228 = vor.u32 %v1223, %v1227
      %v1230 = vshll.u32 %v1137, 16
      %v1232 = vrot.slane %v1230, 1
      %v1233 = vsel %vm333, %v1228, %v1232
      %1234 = vrot.lane.b32.xlu0 %v1149, 4
      %v1235 = vpop.permute.xlu0 %1234
      %1236 = vrot.lane.b32.xlu0 %v1161, 4
      %v1237 = vpop.permute.xlu0 %1236
      %1238 = vrot.lane.b32.xlu0 %v1173, 4
      %v1239 = vpop.permute.xlu0 %1238
      %1240 = vrot.lane.b32.xlu0 %v1185, 4
      %v1241 = vpop.permute.xlu0 %1240
      %1242 = vrot.lane.b32.xlu0 %v1197, 4
      %v1243 = vpop.permute.xlu0 %1242
      %1244 = vrot.lane.b32.xlu0 %v1209, 4
      %v1245 = vpop.permute.xlu0 %1244
      %1246 = vrot.lane.b32.xlu0 %v1221, 4
      %v1247 = vpop.permute.xlu0 %1246
      %1248 = vrot.lane.b32.xlu0 %v1233, 4
      %v1249 = vpop.permute.xlu0 %1248
      %v1250 = vrot.slane %v1106, 1
      %v1251 = vrot.slane %v1130, 1
      %v1252 = vsel %vm446, %v1250, %v1251
      %v1253 = vrot.slane %v1107, 1
      %v1254 = vrot.slane %v1131, 1
      %v1255 = vsel %vm446, %v1253, %v1254
      %v1256 = vrot.slane %v1108, 1
      %v1257 = vrot.slane %v1132, 1
      %v1258 = vsel %vm446, %v1256, %v1257
      %v1259 = vrot.slane %v1109, 1
      %v1260 = vrot.slane %v1133, 1
      %v1261 = vsel %vm446, %v1259, %v1260
      %v1262 = vrot.slane %v1110, 1
      %v1263 = vrot.slane %v1134, 1
      %v1264 = vsel %vm446, %v1262, %v1263
      %v1265 = vrot.slane %v1111, 1
      %v1266 = vrot.slane %v1135, 1
      %v1267 = vsel %vm446, %v1265, %v1266
      %v1268 = vrot.slane %v1112, 1
      %v1269 = vrot.slane %v1136, 1
      %v1270 = vsel %vm446, %v1268, %v1269
      %v1271 = vrot.slane %v1113, 1
      %v1272 = vrot.slane %v1137, 1
      %v1273 = vsel %vm446, %v1271, %v1272
      %1274 = vrot.lane.b32.xlu0 %v1252, 8
      %v1275 = vpop.permute.xlu0 %1274
      %1276 = vrot.lane.b32.xlu0 %v1255, 8
      %v1277 = vpop.permute.xlu0 %1276
      %1278 = vrot.lane.b32.xlu0 %v1258, 8
      %v1279 = vpop.permute.xlu0 %1278
      %1280 = vrot.lane.b32.xlu0 %v1261, 8
      %v1281 = vpop.permute.xlu0 %1280
      %1282 = vrot.lane.b32.xlu0 %v1264, 8
      %v1283 = vpop.permute.xlu0 %1282
      %1284 = vrot.lane.b32.xlu0 %v1267, 8
      %v1285 = vpop.permute.xlu0 %1284
      %1286 = vrot.lane.b32.xlu0 %v1270, 8
      %v1287 = vpop.permute.xlu0 %1286
      %1288 = vrot.lane.b32.xlu0 %v1273, 8
      %v1289 = vpop.permute.xlu0 %1288
      %v1291 = vsel %vm487, %v1106, %v1235
      %v1293 = vsel %vm487, %v1107, %v1237
      %v1295 = vsel %vm487, %v1108, %v1239
      %v1297 = vsel %vm487, %v1109, %v1241
      %v1299 = vsel %vm487, %v1110, %v1243
      %v1301 = vsel %vm487, %v1111, %v1245
      %v1303 = vsel %vm487, %v1112, %v1247
      %v1305 = vsel %vm487, %v1113, %v1249
      %v1307 = vsel %vm504, %v1291, %v1275
      %v1309 = vsel %vm504, %v1293, %v1277
      %v1311 = vsel %vm504, %v1295, %v1279
      %v1313 = vsel %vm504, %v1297, %v1281
      %v1315 = vsel %vm504, %v1299, %v1283
      %v1317 = vsel %vm504, %v1301, %v1285
      %v1319 = vsel %vm504, %v1303, %v1287
      %v1321 = vsel %vm504, %v1305, %v1289
      %s1322 = scalar_lea.vmem %s1, 16
      %v1323 = vld [vmem:[%s1322] sm:$0xf]
      %v1324 = vld [vmem:[%s1322 + $0x4] sm:$0x3]
      %v1327 = vunpack.c.l.b16 %v1323
      %v1328 = vunpack.c.l.b16 %v1324
      %v1329 = vpack.c.b16 %v1328, %v1327
      %v1330 = vsel %vm807, %v1307, 0
      %v1332 = vsel %vm807, %v1309, 0
      %v1334 = vsel %vm807, %v1311, 0
      %v1336 = vsel %vm807, %v1313, 0
      %v1338 = vsel %vm807, %v1315, 0
      %v1340 = vsel %vm807, %v1317, 0
      %v1342 = vsel %vm807, %v1319, 0
      %v1344 = vsel %vm807, %v1321, 0
      %v1347 = vsel %vm824, %v1329, 0
      %1349 = vmatprep.subr.bf16.mxu0 0
      %1350 = vmatpush1.bf16.msra.mxu0 %v1347
      %1351 = vmatprep.subr.bf16.mxu0 0
      %1352 = vmatpush1.bf16.msra.mxu0 0
      %1353 = vmatprep.subr.bf16.mxu0 0
      %1354 = vmatpush1.bf16.msra.mxu0 0
      %1355 = vmatprep.subr.bf16.mxu0 0
      %1356 = vmatpush1.bf16.msra.mxu0 0
      %1357 = vmatprep.subr.bf16.mxu0 0
      %1358 = vmatpush1.bf16.msra.mxu0 0
      %1359 = vmatprep.subr.bf16.mxu0 0
      %1360 = vmatpush1.bf16.msra.mxu0 0
      %1361 = vmatprep.subr.bf16.mxu0 0
      %1362 = vmatpush1.bf16.msra.mxu0 0
      %1363 = vmatprep.subr.bf16.mxu0 0
      %1364 = vmatpush1.bf16.msra.mxu0 0
      %1365 = vmatprep.subr.bf16.mxu0 0
      %1366 = vmatpush1.bf16.msra.mxu0 0
      %1367 = vmatprep.subr.bf16.mxu0 0
      %1368 = vmatpush1.bf16.msra.mxu0 0
      %1369 = vmatprep.subr.bf16.mxu0 0
      %1370 = vmatpush1.bf16.msra.mxu0 0
      %1371 = vmatprep.subr.bf16.mxu0 0
      %1372 = vmatpush1.bf16.msra.mxu0 0
      %1373 = vmatprep.subr.bf16.mxu0 0
      %1374 = vmatpush1.bf16.msra.mxu0 0
      %1375 = vmatprep.subr.bf16.mxu0 0
      %1376 = vmatpush1.bf16.msra.mxu0 0
      %1377 = vmatprep.subr.bf16.mxu0 0
      %1378 = vmatpush1.bf16.msra.mxu0 0
      %1379 = vmatprep.subr.bf16.mxu0 0
      %1380 = vmatpush1.bf16.msra.mxu0 0
      %1381 = vmatprep.mubr.bf16.mxu0 0
      %1382 = vmatmul.mubr.bf16.gmra.mrb[0].mxu0 %v1330
      %v1383 = vpop.f32.mrb[0].mxu0
      %v1384 = vadd.f32 0.0, %v1383
      %v1385 = vpop.f32.mrb[0].mxu0
      %v1386 = vpop.f32.mrb[0].mxu0
      %v1387 = vadd.f32 0.0, %v1386
      %v1388 = vpop.f32.mrb[0].mxu0
      %1389 = vmatprep.mubr.bf16.mxu0 0
      %1390 = vmatmul.mubr.bf16.gmra.mrb[0].mxu0 %v1332
      %v1391 = vpop.f32.mrb[0].mxu0
      %v1392 = vadd.f32 0.0, %v1391
      %v1393 = vpop.f32.mrb[0].mxu0
      %v1394 = vpop.f32.mrb[0].mxu0
      %v1395 = vadd.f32 0.0, %v1394
      %v1396 = vpop.f32.mrb[0].mxu0
      %1397 = vmatprep.mubr.bf16.mxu0 0
      %1398 = vmatmul.mubr.bf16.gmra.mrb[0].mxu0 %v1334
      %v1399 = vpop.f32.mrb[0].mxu0
      %v1400 = vadd.f32 0.0, %v1399
      %v1401 = vpop.f32.mrb[0].mxu0
      %v1402 = vpop.f32.mrb[0].mxu0
      %v1403 = vadd.f32 0.0, %v1402
      %v1404 = vpop.f32.mrb[0].mxu0
      %1405 = vmatprep.mubr.bf16.mxu0 0
      %1406 = vmatmul.mubr.bf16.gmra.mrb[0].mxu0 %v1336
      %v1407 = vpop.f32.mrb[0].mxu0
      %v1408 = vadd.f32 0.0, %v1407
      %v1409 = vpop.f32.mrb[0].mxu0
      %v1410 = vpop.f32.mrb[0].mxu0
      %v1411 = vadd.f32 0.0, %v1410
      %v1412 = vpop.f32.mrb[0].mxu0
      %1413 = vmatprep.mubr.bf16.mxu0 0
      %1414 = vmatmul.mubr.bf16.gmra.mrb[0].mxu0 %v1338
      %v1415 = vpop.f32.mrb[0].mxu0
      %v1416 = vadd.f32 0.0, %v1415
      %v1417 = vpop.f32.mrb[0].mxu0
      %v1418 = vpop.f32.mrb[0].mxu0
      %v1419 = vadd.f32 0.0, %v1418
      %v1420 = vpop.f32.mrb[0].mxu0
      %1421 = vmatprep.mubr.bf16.mxu0 0
      %1422 = vmatmul.mubr.bf16.gmra.mrb[0].mxu0 %v1340
      %v1423 = vpop.f32.mrb[0].mxu0
      %v1424 = vadd.f32 0.0, %v1423
      %v1425 = vpop.f32.mrb[0].mxu0
      %v1426 = vpop.f32.mrb[0].mxu0
      %v1427 = vadd.f32 0.0, %v1426
      %v1428 = vpop.f32.mrb[0].mxu0
      %1429 = vmatprep.mubr.bf16.mxu0 0
      %1430 = vmatmul.mubr.bf16.gmra.mrb[0].mxu0 %v1342
      %v1431 = vpop.f32.mrb[0].mxu0
      %v1432 = vadd.f32 0.0, %v1431
      %v1433 = vpop.f32.mrb[0].mxu0
      %v1434 = vpop.f32.mrb[0].mxu0
      %v1435 = vadd.f32 0.0, %v1434
      %v1436 = vpop.f32.mrb[0].mxu0
      %1437 = vmatprep.mubr.bf16.mxu0 0
      %1438 = vmatmul.mubr.bf16.gmra.mrb[0].mxu0 %v1344
      %v1439 = vpop.f32.mrb[0].mxu0
      %v1440 = vadd.f32 0.0, %v1439
      %v1441 = vpop.f32.mrb[0].mxu0
      %v1442 = vpop.f32.mrb[0].mxu0
      %v1443 = vadd.f32 0.0, %v1442
      %v1444 = vpop.f32.mrb[0].mxu0
      %1445 = vdwg.mxu0
      %v1446 = vadd.f32 %v984, %v1384
      %v1447 = vadd.f32 %v987, %v1387
      %v1448 = vadd.f32 %v992, %v1392
      %v1449 = vadd.f32 %v995, %v1395
      %v1450 = vadd.f32 %v1000, %v1400
      %v1451 = vadd.f32 %v1003, %v1403
      %v1452 = vadd.f32 %v1008, %v1408
      %v1453 = vadd.f32 %v1011, %v1411
      %v1454 = vadd.f32 %v1016, %v1416
      %v1455 = vadd.f32 %v1019, %v1419
      %v1456 = vadd.f32 %v1024, %v1424
      %v1457 = vadd.f32 %v1027, %v1427
      %v1458 = vadd.f32 %v1032, %v1432
      %v1459 = vadd.f32 %v1035, %v1435
      %v1460 = vadd.f32 %v1040, %v1440
      %v1461 = vadd.f32 %v1043, %v1443
      %v1462 = vlaneseq
      %v1463 = vshrl.u32 %v1462, 7
      %v1464 = vstv %s241
      %v1465 = vadd.s32 %v1464, %v1463
      %vm1466 = vcmp.ge.s32.totalorder %v1465, 1
      %vm1467 = vcmp.le.s32.totalorder %v1465, 16
      %vm1468 = vmand %vm1466, %vm1467
      %v1469 = vsel %vm1468, 1, 0
      %v1470 = vlaneseq
      %v1471 = vshrl.u32 %v1470, 7
      %v1472 = vsub.s32 0, %v1471
      %v1473 = vrot.slane %v1469, %v1472
      %v1474 = vlaneseq
      %v1475 = vshrl.u32 %v1474, 7
      %v1476 = vsub.s32 1, %v1475
      %v1477 = vrot.slane %v1469, %v1476
      %v1478 = vlaneseq
      %v1479 = vshrl.u32 %v1478, 7
      %v1480 = vsub.s32 2, %v1479
      %v1481 = vrot.slane %v1469, %v1480
      %v1482 = vlaneseq
      %v1483 = vshrl.u32 %v1482, 7
      %v1484 = vsub.s32 3, %v1483
      %v1485 = vrot.slane %v1469, %v1484
      %v1486 = vlaneseq
      %v1487 = vshrl.u32 %v1486, 7
      %v1488 = vsub.s32 4, %v1487
      %v1489 = vrot.slane %v1469, %v1488
      %v1490 = vlaneseq
      %v1491 = vshrl.u32 %v1490, 7
      %v1492 = vsub.s32 5, %v1491
      %v1493 = vrot.slane %v1469, %v1492
      %v1494 = vlaneseq
      %v1495 = vshrl.u32 %v1494, 7
      %v1496 = vsub.s32 6, %v1495
      %v1497 = vrot.slane %v1469, %v1496
      %v1498 = vlaneseq
      %v1499 = vshrl.u32 %v1498, 7
      %v1500 = vsub.s32 7, %v1499
      %v1501 = vrot.slane %v1469, %v1500
      %vm1502 = vcmp.ne.s32.totalorder %v1473, 0
      %vm1503 = vcmp.ne.s32.totalorder %v1477, 0
      %vm1504 = vcmp.ne.s32.totalorder %v1481, 0
      %vm1505 = vcmp.ne.s32.totalorder %v1485, 0
      %vm1506 = vcmp.ne.s32.totalorder %v1489, 0
      %vm1507 = vcmp.ne.s32.totalorder %v1493, 0
      %vm1508 = vcmp.ne.s32.totalorder %v1497, 0
      %vm1509 = vcmp.ne.s32.totalorder %v1501, 0
      %v1510 = vsel %vm1502, 1, 0
      %v1511 = vsel %vm1503, 1, 0
      %v1512 = vsel %vm1504, 1, 0
      %v1513 = vsel %vm1505, 1, 0
      %v1514 = vsel %vm1506, 1, 0
      %v1515 = vsel %vm1507, 1, 0
      %v1516 = vsel %vm1508, 1, 0
      %v1517 = vsel %vm1509, 1, 0
      %vm1518 = vcmp.eq.s32.totalorder %v1510, 1
      %vm1519 = vcmp.eq.s32.totalorder %v1511, 1
      %vm1520 = vcmp.eq.s32.totalorder %v1512, 1
      %vm1521 = vcmp.eq.s32.totalorder %v1513, 1
      %vm1522 = vcmp.eq.s32.totalorder %v1514, 1
      %vm1523 = vcmp.eq.s32.totalorder %v1515, 1
      %vm1524 = vcmp.eq.s32.totalorder %v1516, 1
      %vm1525 = vcmp.eq.s32.totalorder %v1517, 1
      %v1526 = vsel %vm1518, %v1446, 0.0
      %v1527 = vsel %vm1518, %v1447, 0.0
      %v1528 = vsel %vm1519, %v1448, 0.0
      %v1529 = vsel %vm1519, %v1449, 0.0
      %v1530 = vsel %vm1520, %v1450, 0.0
      %v1531 = vsel %vm1520, %v1451, 0.0
      %v1532 = vsel %vm1521, %v1452, 0.0
      %v1533 = vsel %vm1521, %v1453, 0.0
      %v1534 = vsel %vm1522, %v1454, 0.0
      %v1535 = vsel %vm1522, %v1455, 0.0
      %v1536 = vsel %vm1523, %v1456, 0.0
      %v1537 = vsel %vm1523, %v1457, 0.0
      %v1538 = vsel %vm1524, %v1458, 0.0
      %v1539 = vsel %vm1524, %v1459, 0.0
      %v1540 = vsel %vm1525, %v1460, 0.0
      %v1541 = vsel %vm1525, %v1461, 0.0
      %v1542 = vpack.c.bf16 %v1527, %v1526
      %v1543 = vpack.c.bf16 %v1529, %v1528
      %v1544 = vpack.c.bf16 %v1531, %v1530
      %v1545 = vpack.c.bf16 %v1533, %v1532
      %v1546 = vpack.c.bf16 %v1535, %v1534
      %v1547 = vpack.c.bf16 %v1537, %v1536
      %v1548 = vpack.c.bf16 %v1539, %v1538
      %v1549 = vpack.c.bf16 %v1541, %v1540
      %v1558 = vunpack.c.l.b16 %v1542
      %v1559 = vunpack.c.h.b16 %v1542
      %v1560 = vunpack.c.l.b16 %v1543
      %v1561 = vunpack.c.h.b16 %v1543
      %v1562 = vunpack.c.l.b16 %v1544
      %v1563 = vunpack.c.h.b16 %v1544
      %v1564 = vunpack.c.l.b16 %v1545
      %v1565 = vunpack.c.h.b16 %v1545
      %v1566 = vunpack.c.l.b16 %v1546
      %v1567 = vunpack.c.h.b16 %v1546
      %v1568 = vunpack.c.l.b16 %v1547
      %v1569 = vunpack.c.h.b16 %v1547
      %v1570 = vunpack.c.l.b16 %v1548
      %v1571 = vunpack.c.h.b16 %v1548
      %v1572 = vunpack.c.l.b16 %v1549
      %v1573 = vunpack.c.h.b16 %v1549
      %v1574 = vpack.c.b16 %v1558, %v1558
      %v1575 = vpack.c.b16 %v1559, %v1559
      %v1576 = vpack.c.b16 %v1560, %v1560
      %v1577 = vpack.c.b16 %v1561, %v1561
      %v1578 = vpack.c.b16 %v1562, %v1562
      %v1579 = vpack.c.b16 %v1563, %v1563
      %v1580 = vpack.c.b16 %v1564, %v1564
      %v1581 = vpack.c.b16 %v1565, %v1565
      %v1582 = vpack.c.b16 %v1566, %v1566
      %v1583 = vpack.c.b16 %v1567, %v1567
      %v1584 = vpack.c.b16 %v1568, %v1568
      %v1585 = vpack.c.b16 %v1569, %v1569
      %v1586 = vpack.c.b16 %v1570, %v1570
      %v1587 = vpack.c.b16 %v1571, %v1571
      %v1588 = vpack.c.b16 %v1572, %v1572
      %v1589 = vpack.c.b16 %v1573, %v1573
      %vm1606 = vcmask 60416
      %1607 = vst.msk [vmem:[%s232] sm:$0xf] %vm1606, %v1574
      %1608 = vst.msk [vmem:[%s232 + $0x4] sm:$0xf] %vm1606, %v1575
      %1609 = vst.msk [vmem:[%s232 + $0x8] sm:$0xf] %vm1606, %v1576
      %1610 = vst.msk [vmem:[%s232 + $0xc] sm:$0xf] %vm1606, %v1577
      %1611 = vst.msk [vmem:[%s232 + $0x10] sm:$0xf] %vm1606, %v1578
      %1612 = vst.msk [vmem:[%s232 + $0x14] sm:$0xf] %vm1606, %v1579
      %1613 = vst.msk [vmem:[%s232 + $0x18] sm:$0xf] %vm1606, %v1580
      %1614 = vst.msk [vmem:[%s232 + $0x1c] sm:$0xf] %vm1606, %v1581
      %1615 = vst.msk [vmem:[%s232 + $0x20] sm:$0xf] %vm1606, %v1582
      %1616 = vst.msk [vmem:[%s232 + $0x24] sm:$0xf] %vm1606, %v1583
      %1617 = vst.msk [vmem:[%s232 + $0x28] sm:$0xf] %vm1606, %v1584
      %1618 = vst.msk [vmem:[%s232 + $0x2c] sm:$0xf] %vm1606, %v1585
      %1619 = vst.msk [vmem:[%s232 + $0x30] sm:$0xf] %vm1606, %v1586
      %1620 = vst.msk [vmem:[%s232 + $0x34] sm:$0xf] %vm1606, %v1587
      %1621 = vst.msk [vmem:[%s232 + $0x38] sm:$0xf] %vm1606, %v1588
      %1622 = vst.msk [vmem:[%s232 + $0x3c] sm:$0xf] %vm1606, %v1589
      %p1623 = scmp.eq.s32.totalorder %s21, 0
      // Predicated region
      $region29: #{_lambda_.4} parent=27 // pred_check
        %p1624 = pneg %p1623
      $region30: #{_lambda_.4} parent=27 // pred_check_branch
        %1626 = sbr.rel (%p1624) target = $region32
      $region31: #{_lambda_.4} parent=27 // pred_region
        %vm1627 = vcmask 57344
        %1628 = vst.msk [vmem:[%s236] sm:$0x1] %vm1627, 0.0
        %1629 = vst.msk [vmem:[%s239] sm:$0x1] %vm1627, 0.0
      $region32: #{_lambda_.4} parent=27 // pred_fallthru
        _
      %v1630 = vld [vmem:[%s236] sm:$0x1]
      %v1631 = vsel %vm504, %v1526, 0.0
      %v1632 = vsel %vm504, %v1527, 0.0
      %v1633 = vadd.f32 %v1631, %v1632
      %v1634 = vsel %vm504, %v1528, 0.0
      %v1635 = vadd.f32 %v1633, %v1634
      %v1636 = vsel %vm504, %v1529, 0.0
      %v1637 = vadd.f32 %v1635, %v1636
      %v1638 = vsel %vm504, %v1530, 0.0
      %v1639 = vadd.f32 %v1637, %v1638
      %v1640 = vsel %vm504, %v1531, 0.0
      %v1641 = vadd.f32 %v1639, %v1640
      %v1642 = vsel %vm504, %v1532, 0.0
      %v1643 = vadd.f32 %v1641, %v1642
      %v1644 = vsel %vm504, %v1533, 0.0
      %v1645 = vadd.f32 %v1643, %v1644
      %v1646 = vsel %vm504, %v1534, 0.0
      %v1647 = vadd.f32 %v1645, %v1646
      %v1648 = vsel %vm504, %v1535, 0.0
      %v1649 = vadd.f32 %v1647, %v1648
      %v1650 = vsel %vm504, %v1536, 0.0
      %v1651 = vadd.f32 %v1649, %v1650
      %v1652 = vsel %vm504, %v1537, 0.0
      %v1653 = vadd.f32 %v1651, %v1652
      %v1654 = vsel %vm504, %v1538, 0.0
      %v1655 = vadd.f32 %v1653, %v1654
      %v1656 = vsel %vm504, %v1539, 0.0
      %v1657 = vadd.f32 %v1655, %v1656
      %v1658 = vsel %vm504, %v1540, 0.0
      %v1659 = vadd.f32 %v1657, %v1658
      %v1660 = vsel %vm504, %v1541, 0.0
      %v1661 = vadd.f32 %v1659, %v1660
      %v1662 = vrot.slane %v1661, 4
      %v1663 = vadd.f32 %v1661, %v1662
      %v1664 = vrot.slane %v1663, 2
      %v1665 = vadd.f32 %v1663, %v1664
      %v1666 = vrot.slane %v1665, 1
      %v1667 = vadd.f32 %v1665, %v1666
      %v1668 = vadd.f32 %v1630, %v1667
      %vm1669 = vcmask 57344
      %1670 = vst.msk [vmem:[%s236] sm:$0x1] %vm1669, %v1668
      %v1671 = vld [vmem:[%s239] sm:$0x1]
      %v1672 = vmul.f32 %v1526, %v1526
      %v1673 = vmul.f32 %v1527, %v1527
      %v1674 = vmul.f32 %v1528, %v1528
      %v1675 = vmul.f32 %v1529, %v1529
      %v1676 = vmul.f32 %v1530, %v1530
      %v1677 = vmul.f32 %v1531, %v1531
      %v1678 = vmul.f32 %v1532, %v1532
      %v1679 = vmul.f32 %v1533, %v1533
      %v1680 = vmul.f32 %v1534, %v1534
      %v1681 = vmul.f32 %v1535, %v1535
      %v1682 = vmul.f32 %v1536, %v1536
      %v1683 = vmul.f32 %v1537, %v1537
      %v1684 = vmul.f32 %v1538, %v1538
      %v1685 = vmul.f32 %v1539, %v1539
      %v1686 = vmul.f32 %v1540, %v1540
      %v1687 = vmul.f32 %v1541, %v1541
      %v1688 = vsel %vm504, %v1672, 0.0
      %v1689 = vsel %vm504, %v1673, 0.0
      %v1690 = vadd.f32 %v1688, %v1689
      %v1691 = vsel %vm504, %v1674, 0.0
      %v1692 = vadd.f32 %v1690, %v1691
      %v1693 = vsel %vm504, %v1675, 0.0
      %v1694 = vadd.f32 %v1692, %v1693
      %v1695 = vsel %vm504, %v1676, 0.0
      %v1696 = vadd.f32 %v1694, %v1695
      %v1697 = vsel %vm504, %v1677, 0.0
      %v1698 = vadd.f32 %v1696, %v1697
      %v1699 = vsel %vm504, %v1678, 0.0
      %v1700 = vadd.f32 %v1698, %v1699
      %v1701 = vsel %vm504, %v1679, 0.0
      %v1702 = vadd.f32 %v1700, %v1701
      %v1703 = vsel %vm504, %v1680, 0.0
      %v1704 = vadd.f32 %v1702, %v1703
      %v1705 = vsel %vm504, %v1681, 0.0
      %v1706 = vadd.f32 %v1704, %v1705
      %v1707 = vsel %vm504, %v1682, 0.0
      %v1708 = vadd.f32 %v1706, %v1707
      %v1709 = vsel %vm504, %v1683, 0.0
      %v1710 = vadd.f32 %v1708, %v1709
      %v1711 = vsel %vm504, %v1684, 0.0
      %v1712 = vadd.f32 %v1710, %v1711
      %v1713 = vsel %vm504, %v1685, 0.0
      %v1714 = vadd.f32 %v1712, %v1713
      %v1715 = vsel %vm504, %v1686, 0.0
      %v1716 = vadd.f32 %v1714, %v1715
      %v1717 = vsel %vm504, %v1687, 0.0
      %v1718 = vadd.f32 %v1716, %v1717
      %v1719 = vrot.slane %v1718, 4
      %v1720 = vadd.f32 %v1718, %v1719
      %v1721 = vrot.slane %v1720, 2
      %v1722 = vadd.f32 %v1720, %v1721
      %v1723 = vrot.slane %v1722, 1
      %v1724 = vadd.f32 %v1722, %v1723
      %v1725 = vadd.f32 %v1671, %v1724
      %1726 = vst.msk [vmem:[%s239] sm:$0x1] %vm1669, %v1725
      %s1727 = smul.u32 8, %s21
      %p1728 = scmp.lt.s32.totalorder %s20, 1
      %s1729 = scalar_select %p1728, %s20, 1
      %p1730 = scmp.lt.s32.totalorder %s1727, 23
      %s1731 = scalar_select %p1730, %s1727, 23
      %s1732 = smul.addr %s1731, 2
      %s1733 = smul.addr %s1729, 48
      %s1734 = sadd.s32 %s1732, %s1733
      %s1735 = smul.addr %s1734, 4
      %s1736 = scalar_lea.vmem %s2, %s1735
      %p1737 = scmp.lt.s32.totalorder %s20, 1
      %s1738 = scalar_select %p1737, %s20, 1
      %s1739 = scalar_lea.vmem %s3, %s1738
      %p1740 = scmp.lt.s32.totalorder %s20, 1
      %s1741 = scalar_select %p1740, %s20, 1
      %s1742 = scalar_lea.vmem %s4, %s1741
      // Predicated region
      $region33: #{_lambda_.4} parent=27 // pred_check
        %p1743 = pneg %p95
      $region34: #{_lambda_.4} parent=27 // pred_check_branch
        %1745 = sbr.rel (%p1743) target = $region36
      $region35: #{_lambda_.4} parent=27 // pred_region
        %s1746 = smul.u32 8, %s21
      $region36: #{_lambda_.4} parent=27 // pred_fallthru
        _
      // Predicated region
      $region37: #{_lambda_.4} parent=27 // pred_check
        %p1747 = pneg %p121
      $region38: #{_lambda_.4} parent=27 // pred_check_branch
        %1749 = sbr.rel (%p1747) target = $region40
      $region39: #{_lambda_.4} parent=27 // pred_region
        _
      $region40: #{_lambda_.4} parent=27 // pred_fallthru
        _
      // Predicated region
      $region41: #{_lambda_.4} parent=27 // pred_check
        %p1750 = pneg %p147
      $region42: #{_lambda_.4} parent=27 // pred_check_branch
        %1752 = sbr.rel (%p1750) target = $region44
      $region43: #{_lambda_.4} parent=27 // pred_region
        _
      $region44: #{_lambda_.4} parent=27 // pred_fallthru
        _
    $region28: #{_lambda_.4} parent=5 // pred_fallthru
      _
    %p1753 = scmp.le.s32.totalorder 2, %s11
    // Predicated region
    $region45: #{_lambda_.4} parent=5 // pred_check
      %p1754 = pneg %p1753
    $region46: #{_lambda_.4} parent=5 // pred_check_branch
      %1756 = sbr.rel (%p1754) target = $region48
    $region47: #{_lambda_.4} parent=5 // pred_region
      %s1757 = ssub.s32 %s11, 2
      // Predicated region
      $region49: #{_lambda_.4} parent=47 // pred_check
        %p1758 = pneg %p101
      $region50: #{_lambda_.4} parent=47 // pred_check_branch
        %1760 = sbr.rel (%p1758) target = $region52
      $region51: #{_lambda_.4} parent=47 // pred_region
        %s1761 = smul.u32 8, %s23
        %p1762 = scmp.lt.s32.totalorder %s22, 1
        %s1763 = scalar_select %p1762, %s22, 1
        %p1764 = scmp.lt.s32.totalorder %s1761, 23
        %s1765 = scalar_select %p1764, %s1761, 23
        %s1766 = smul.addr %s1765, 2
        %s1767 = smul.addr %s1763, 48
        %s1768 = sadd.s32 %s1766, %s1767
        %s1769 = smul.addr %s1768, 4
        %s1770 = scalar_lea.vmem %s2, %s1769
      $region52: #{_lambda_.4} parent=47 // pred_fallthru
        _
      // Predicated region
      $region53: #{_lambda_.4} parent=47 // pred_check
        %p1771 = pneg %p127
      $region54: #{_lambda_.4} parent=47 // pred_check_branch
        %1773 = sbr.rel (%p1771) target = $region56
      $region55: #{_lambda_.4} parent=47 // pred_region
        %p1774 = scmp.lt.s32.totalorder %s22, 1
        %s1775 = scalar_select %p1774, %s22, 1
        %s1776 = scalar_lea.vmem %s3, %s1775
      $region56: #{_lambda_.4} parent=47 // pred_fallthru
        _
      // Predicated region
      $region57: #{_lambda_.4} parent=47 // pred_check
        %p1777 = pneg %p153
      $region58: #{_lambda_.4} parent=47 // pred_check_branch
        %1779 = sbr.rel (%p1777) target = $region60
      $region59: #{_lambda_.4} parent=47 // pred_region
        %p1780 = scmp.lt.s32.totalorder %s22, 1
        %s1781 = scalar_select %p1780, %s22, 1
        %s1782 = scalar_lea.vmem %s4, %s1781
      $region60: #{_lambda_.4} parent=47 // pred_fallthru
        _
    $region48: #{_lambda_.4} parent=5 // pred_fallthru
      _
  $region6: #{_lambda_.4} parent=0 // loop_footer
    %s15 = sadd.s32 1, %s11
  $region7: #{_lambda_.4} parent=0 // loop_footer_branch
    %10 = sbr.rel target = $region3
  $region8: #{_lambda_.4} parent=0 // loop_exit
    _

// kernel: _lambda_.6
$region0: #{_lambda_.6}
  #allocation0 [shape = 'u32[]', space=smem, size = 0x4, offset = 0x4, fixed_abs, tag = 'smem constant byte address 0x4 - core index']
  #allocation1 [shape = 'u32[144,128]{1,0:T(1,128)}', space=vmem, size = 0x12000, scoped, tag = 'internal scratch']
  %s0 = inlined_call_operand.vmem [shape: bf16[2,24,18,8], index: 0, kind: input, shape index: {}]
  %s1 = inlined_call_operand.vmem [shape: bf16[3,24,8], index: 1, kind: input, shape index: {}]
  %s2 = inlined_call_operand.vmem [shape: bf16[2,16,16,8], index: 2, kind: output, shape index: {0}]
  %s3 = inlined_call_operand.vmem [shape: f32[2,1,8], index: 3, kind: output, shape index: {1}]
  %s4 = inlined_call_operand.vmem [shape: f32[2,1,8], index: 4, kind: output, shape index: {2}]
  %5 = xla_tuple %s2, %s3, %s4
  %s6 = sld [smem:[#allocation0]]
  $region61: #{_lambda_.6} parent=0
    _
  %s8 = ssub.s32 1, %s6
  %s9 = scalar_select 0, %s8, %s6
  loop: start=0, step=1, limit=6
  $region2: #{_lambda_.6} parent=0 // loop_pre_header
    _
  $region3: #{_lambda_.6} parent=0 // loop_header
    %s11 = sphi 0, %s15
    %p12 = scmp.ge.s32.totalorder %s11, 6
    %s18 = sphi 0, %s30
    %s19 = sphi 0, %s26
    %s20 = sphi 0, %s18
    %s21 = sphi 0, %s19
    %s22 = sphi 0, %s20
    %s23 = sphi 0, %s21
    %s33 = sphi 0, %s35
    %s36 = sphi 0, %s33
    %s37 = sphi 0, %s36
    %s53 = sphi 0, %s37
    %s57 = sphi 0, %s57
    %s59 = sphi 0, %s57
    %s60 = sphi 0, %s59
    %s74 = sphi 0, %s60
    %s82 = sphi 0, %s84
    %s85 = sphi 0, %s82
    %s86 = sphi 0, %s85
    %s102 = sphi 0, %s86
    %s108 = sphi 0, %s110
    %s111 = sphi 0, %s108
    %s112 = sphi 0, %s111
    %s128 = sphi 0, %s112
    %s134 = sphi 0, %s136
    %s137 = sphi 0, %s134
    %s138 = sphi 0, %s137
    %s154 = sphi 0, %s138
  $region4: #{_lambda_.6} parent=0 // loop_header_branch
    %14 = sbr.rel (%p12) target = $region8
  $region5: #{_lambda_.6} parent=0 // loop_body
    %s16 = ssub.s32 %s11, 1
    %s17 = ssub.s32 %s11, 2
    %s24 = sadd.s32 1, %s19
    %p25 = scmp.ge.s32.totalorder %s24, 2
    %s26 = scalar_select %p25, 0, %s24
    %s27 = sadd.s32 1, %s18
    %s28 = scalar_select %p25, %s27, %s18
    %p29 = scmp.ge.s32.totalorder %s28, 2
    %s30 = scalar_select %p29, 0, %s28
    %s31 = ssub.s32 %s18, %s30
    %p32 = scmp.eq.s32.totalorder %s31, 0
    %s34 = sadd.s32 %s33, 1
    %s35 = scalar_select %p32, %s33, %s34
    %p38 = pneg %p32
    %p39 = scmp.eq.s32.totalorder %s11, 3
    %p40 = por %p38, %p39
    %p41 = scmp.ne.s32.totalorder %s33, %s36
    %p42 = scmp.eq.s32.totalorder %s11, 0
    %p43 = por %p41, %p42
    %p44 = scmp.ne.s32.totalorder %s33, %s36
    %p45 = scmp.eq.s32.totalorder %s16, 3
    %p46 = por %p44, %p45
    %p47 = scmp.ne.s32.totalorder %s36, %s37
    %p48 = scmp.eq.s32.totalorder %s16, 0
    %p49 = por %p47, %p48
    %p50 = scmp.ne.s32.totalorder %s36, %s37
    %p51 = scmp.eq.s32.totalorder %s17, 3
    %p52 = por %p50, %p51
    %p54 = scmp.ne.s32.totalorder %s37, %s53
    %p55 = scmp.eq.s32.totalorder %s17, 0
    %p56 = por %p54, %p55
    %s58 = sadd.s32 %s57, 1
    %p61 = scmp.eq.s32.totalorder %s11, 3
    %p62 = scmp.ne.s32.totalorder %s57, %s59
    %p63 = scmp.eq.s32.totalorder %s11, 0
    %p64 = por %p62, %p63
    %p65 = scmp.ne.s32.totalorder %s57, %s59
    %p66 = scmp.eq.s32.totalorder %s16, 3
    %p67 = por %p65, %p66
    %p68 = scmp.ne.s32.totalorder %s59, %s60
    %p69 = scmp.eq.s32.totalorder %s16, 0
    %p70 = por %p68, %p69
    %p71 = scmp.ne.s32.totalorder %s59, %s60
    %p72 = scmp.eq.s32.totalorder %s17, 3
    %p73 = por %p71, %p72
    %p75 = scmp.ne.s32.totalorder %s60, %s74
    %p76 = scmp.eq.s32.totalorder %s17, 0
    %p77 = por %p75, %p76
    %s78 = ssub.s32 %s18, %s30
    %s79 = ssub.s32 %s19, %s26
    %s80 = sor.u32 %s78, %s79
    %p81 = scmp.eq.s32.totalorder %s80, 0
    %s83 = sadd.s32 %s82, 1
    %s84 = scalar_select %p81, %s82, %s83
    %p87 = pneg %p81
    %p88 = scmp.eq.s32.totalorder %s11, 3
    %p89 = por %p87, %p88
    %p90 = scmp.ne.s32.totalorder %s82, %s85
    %p91 = scmp.eq.s32.totalorder %s11, 0
    %p92 = por %p90, %p91
    %p93 = scmp.ne.s32.totalorder %s82, %s85
    %p94 = scmp.eq.s32.totalorder %s16, 3
    %p95 = por %p93, %p94
    %p96 = scmp.ne.s32.totalorder %s85, %s86
    %p97 = scmp.eq.s32.totalorder %s16, 0
    %p98 = por %p96, %p97
    %p99 = scmp.ne.s32.totalorder %s85, %s86
    %p100 = scmp.eq.s32.totalorder %s17, 3
    %p101 = por %p99, %p100
    %p103 = scmp.ne.s32.totalorder %s86, %s102
    %p104 = scmp.eq.s32.totalorder %s17, 0
    %p105 = por %p103, %p104
    %s106 = ssub.s32 %s18, %s30
    %p107 = scmp.eq.s32.totalorder %s106, 0
    %s109 = sadd.s32 %s108, 1
    %s110 = scalar_select %p107, %s108, %s109
    %p113 = pneg %p107
    %p114 = scmp.eq.s32.totalorder %s11, 3
    %p115 = por %p113, %p114
    %p116 = scmp.ne.s32.totalorder %s108, %s111
    %p117 = scmp.eq.s32.totalorder %s11, 0
    %p118 = por %p116, %p117
    %p119 = scmp.ne.s32.totalorder %s108, %s111
    %p120 = scmp.eq.s32.totalorder %s16, 3
    %p121 = por %p119, %p120
    %p122 = scmp.ne.s32.totalorder %s111, %s112
    %p123 = scmp.eq.s32.totalorder %s16, 0
    %p124 = por %p122, %p123
    %p125 = scmp.ne.s32.totalorder %s111, %s112
    %p126 = scmp.eq.s32.totalorder %s17, 3
    %p127 = por %p125, %p126
    %p129 = scmp.ne.s32.totalorder %s112, %s128
    %p130 = scmp.eq.s32.totalorder %s17, 0
    %p131 = por %p129, %p130
    %s132 = ssub.s32 %s18, %s30
    %p133 = scmp.eq.s32.totalorder %s132, 0
    %s135 = sadd.s32 %s134, 1
    %s136 = scalar_select %p133, %s134, %s135
    %p139 = pneg %p133
    %p140 = scmp.eq.s32.totalorder %s11, 3
    %p141 = por %p139, %p140
    %p142 = scmp.ne.s32.totalorder %s134, %s137
    %p143 = scmp.eq.s32.totalorder %s11, 0
    %p144 = por %p142, %p143
    %p145 = scmp.ne.s32.totalorder %s134, %s137
    %p146 = scmp.eq.s32.totalorder %s16, 3
    %p147 = por %p145, %p146
    %p148 = scmp.ne.s32.totalorder %s137, %s138
    %p149 = scmp.eq.s32.totalorder %s16, 0
    %p150 = por %p148, %p149
    %p151 = scmp.ne.s32.totalorder %s137, %s138
    %p152 = scmp.eq.s32.totalorder %s17, 3
    %p153 = por %p151, %p152
    %p155 = scmp.ne.s32.totalorder %s138, %s154
    %p156 = scmp.eq.s32.totalorder %s17, 0
    %p157 = por %p155, %p156
    %p158 = scmp.le.s32.totalorder 1, %s11
    %p159 = scmp.lt.s32.totalorder %s11, 5
    %p160 = pnand %p158, %p159
    %p161 = pneg %p160
    // Predicated region
    $region9: #{_lambda_.6} parent=5 // pred_check
      _
    $region10: #{_lambda_.6} parent=5 // pred_check_branch
      %163 = sbr.rel (%p160) target = $region12
    $region11: #{_lambda_.6} parent=5 // pred_region
      %s164 = ssub.s32 %s11, 1
      // Predicated region
      $region13: #{_lambda_.6} parent=11 // pred_check
        %p165 = pneg %p49
      $region14: #{_lambda_.6} parent=11 // pred_check_branch
        %167 = sbr.rel (%p165) target = $region16
      $region15: #{_lambda_.6} parent=11 // pred_region
        %p168 = scmp.lt.s32.totalorder %s20, 1
        %s169 = scalar_select %p168, %s20, 1
        %s170 = smul.addr %s169, 72
        %s171 = smul.addr %s170, 4
        %s172 = scalar_lea.vmem %s0, %s171
      $region16: #{_lambda_.6} parent=11 // pred_fallthru
        _
      // Predicated region
      $region17: #{_lambda_.6} parent=11 // pred_check
        %p173 = pneg %p70
      $region18: #{_lambda_.6} parent=11 // pred_check_branch
        %175 = sbr.rel (%p173) target = $region20
      $region19: #{_lambda_.6} parent=11 // pred_region
        _
      $region20: #{_lambda_.6} parent=11 // pred_fallthru
        _
    $region12: #{_lambda_.6} parent=5 // pred_fallthru
      _
    %p176 = scmp.lt.s32.totalorder %s11, 4
    // Predicated region
    $region21: #{_lambda_.6} parent=5 // pred_check
      %p177 = pneg %p176
    $region22: #{_lambda_.6} parent=5 // pred_check_branch
      %179 = sbr.rel (%p177) target = $region24
    $region23: #{_lambda_.6} parent=5 // pred_region
      _
    $region24: #{_lambda_.6} parent=5 // pred_fallthru
      _
    %p180 = scmp.le.s32.totalorder 1, %s11
    %p181 = scmp.lt.s32.totalorder %s11, 5
    %p182 = pnand %p180, %p181
    %p183 = pneg %p182
    // Predicated region
    $region25: #{_lambda_.6} parent=5 // pred_check
      _
    $region26: #{_lambda_.6} parent=5 // pred_check_branch
      %185 = sbr.rel (%p182) target = $region28
    $region27: #{_lambda_.6} parent=5 // pred_region
      %s186 = ssub.s32 %s11, 1
      %p187 = scmp.lt.s32.totalorder %s20, 1
      %s188 = scalar_select %p187, %s20, 1
      %s189 = smul.addr %s188, 72
      %s190 = smul.addr %s189, 4
      %s191 = scalar_lea.vmem %s0, %s190
      %p192 = pneg %p49
      %p193 = pneg %p46
      %p194 = pneg %p70
      %p195 = pneg %p67
      %p196 = pneg %p98
      %p197 = pneg %p95
      %s198 = smul.u32 8, %s21
      %p199 = scmp.lt.s32.totalorder %s20, 1
      %s200 = scalar_select %p199, %s20, 1
      %p201 = scmp.lt.s32.totalorder %s198, 15
      %s202 = scalar_select %p201, %s198, 15
      %s203 = smul.addr %s202, 2
      %s204 = smul.addr %s200, 32
      %s205 = sadd.s32 %s203, %s204
      %s206 = smul.addr %s205, 4
      %s207 = scalar_lea.vmem %s2, %s206
      %p208 = pneg %p124
      %p209 = pneg %p121
      %p210 = scmp.lt.s32.totalorder %s20, 1
      %s211 = scalar_select %p210, %s20, 1
      %s212 = scalar_lea.vmem %s3, %s211
      %p213 = pneg %p150
      %p214 = pneg %p147
      %p215 = scmp.lt.s32.totalorder %s20, 1
      %s216 = scalar_select %p215, %s20, 1
      %s217 = scalar_lea.vmem %s4, %s216
      %p218 = scmp.lt.s32.totalorder %s20, 1
      %s219 = scalar_select %p218, %s20, 1
      %s220 = smul.addr %s219, 72
      %s221 = smul.addr %s220, 4
      %s222 = scalar_lea.vmem %s0, %s221
      %s223 = smul.u32 8, %s21
      %p224 = scmp.lt.s32.totalorder %s20, 1
      %s225 = scalar_select %p224, %s20, 1
      %p226 = scmp.lt.s32.totalorder %s223, 15
      %s227 = scalar_select %p226, %s223, 15
      %s228 = smul.addr %s227, 2
      %s229 = smul.addr %s225, 32
      %s230 = sadd.s32 %s228, %s229
      %s231 = smul.addr %s230, 4
      %s232 = scalar_lea.vmem %s2, %s231
      %s233 = smul.u32 8, %s21
      %p234 = scmp.lt.s32.totalorder %s20, 1
      %s235 = scalar_select %p234, %s20, 1
      %s236 = scalar_lea.vmem %s3, %s235
      %p237 = scmp.lt.s32.totalorder %s20, 1
      %s238 = scalar_select %p237, %s20, 1
      %s239 = scalar_lea.vmem %s4, %s238
      %s241 = smul.u32 %s21, 8
      %s242 = smul.u32 %s241, 3
      %s243 = smul.addr %s242, 4
      %s244 = scalar_lea.vmem %s222, %s243
      %v245 = vld [vmem:[%s244] sm:$0xf]
      %v246 = vld [vmem:[%s244 + $0x4] sm:$0xf]
      %v247 = vld [vmem:[%s244 + $0x8] sm:$0x1]
      %v248 = vld [vmem:[%s244 + $0xc] sm:$0xf]
      %v249 = vld [vmem:[%s244 + $0x10] sm:$0xf]
      %v250 = vld [vmem:[%s244 + $0x14] sm:$0x1]
      %v251 = vld [vmem:[%s244 + $0x18] sm:$0xf]
      %v252 = vld [vmem:[%s244 + $0x1c] sm:$0xf]
      %v253 = vld [vmem:[%s244 + $0x20] sm:$0x1]
      %v254 = vld [vmem:[%s244 + $0x24] sm:$0xf]
      %v255 = vld [vmem:[%s244 + $0x28] sm:$0xf]
      %v256 = vld [vmem:[%s244 + $0x2c] sm:$0x1]
      %v257 = vld [vmem:[%s244 + $0x30] sm:$0xf]
      %v258 = vld [vmem:[%s244 + $0x34] sm:$0xf]
      %v259 = vld [vmem:[%s244 + $0x38] sm:$0x1]
      %v260 = vld [vmem:[%s244 + $0x3c] sm:$0xf]
      %v261 = vld [vmem:[%s244 + $0x40] sm:$0xf]
      %v262 = vld [vmem:[%s244 + $0x44] sm:$0x1]
      %v263 = vld [vmem:[%s244 + $0x48] sm:$0xf]
      %v264 = vld [vmem:[%s244 + $0x4c] sm:$0xf]
      %v265 = vld [vmem:[%s244 + $0x50] sm:$0x1]
      %v266 = vld [vmem:[%s244 + $0x54] sm:$0xf]
      %v267 = vld [vmem:[%s244 + $0x58] sm:$0xf]
      %v268 = vld [vmem:[%s244 + $0x5c] sm:$0x1]
      %v285 = vunpack.c.l.b16 %v245
      %v286 = vunpack.c.l.b16 %v246
      %v287 = vunpack.c.l.b16 %v248
      %v288 = vunpack.c.l.b16 %v249
      %v289 = vunpack.c.l.b16 %v251
      %v290 = vunpack.c.l.b16 %v252
      %v291 = vunpack.c.l.b16 %v254
      %v292 = vunpack.c.l.b16 %v255
      %v293 = vunpack.c.l.b16 %v257
      %v294 = vunpack.c.l.b16 %v258
      %v295 = vunpack.c.l.b16 %v260
      %v296 = vunpack.c.l.b16 %v261
      %v297 = vunpack.c.l.b16 %v263
      %v298 = vunpack.c.l.b16 %v264
      %v299 = vunpack.c.l.b16 %v266
      %v300 = vunpack.c.l.b16 %v267
      %v301 = vpack.c.b16 %v286, %v285
      %v302 = vpack.c.b16 %v288, %v287
      %v303 = vpack.c.b16 %v290, %v289
      %v304 = vpack.c.b16 %v292, %v291
      %v305 = vpack.c.b16 %v294, %v293
      %v306 = vpack.c.b16 %v296, %v295
      %v307 = vpack.c.b16 %v298, %v297
      %v308 = vpack.c.b16 %v300, %v299
      %v317 = vunpack.c.l.b16 %v247
      %v318 = vunpack.c.l.b16 %v250
      %v319 = vunpack.c.l.b16 %v253
      %v320 = vunpack.c.l.b16 %v256
      %v321 = vunpack.c.l.b16 %v259
      %v322 = vunpack.c.l.b16 %v262
      %v323 = vunpack.c.l.b16 %v265
      %v324 = vunpack.c.l.b16 %v268
      %v325 = vpack.c.b16 %v317, %v317
      %v326 = vpack.c.b16 %v318, %v318
      %v327 = vpack.c.b16 %v319, %v319
      %v328 = vpack.c.b16 %v320, %v320
      %v329 = vpack.c.b16 %v321, %v321
      %v330 = vpack.c.b16 %v322, %v322
      %v331 = vpack.c.b16 %v323, %v323
      %v332 = vpack.c.b16 %v324, %v324
      %vm333 = vsmask.f32 7424
      %v335 = vshrl.u32 %v301, 16
      %v337 = vshll.u32 %v301, 16
      %v339 = vrot.slane %v337, 1
      %v340 = vor.u32 %v335, %v339
      %v342 = vshll.u32 %v325, 16
      %v344 = vrot.slane %v342, 1
      %v345 = vsel %vm333, %v340, %v344
      %v347 = vshrl.u32 %v302, 16
      %v349 = vshll.u32 %v302, 16
      %v351 = vrot.slane %v349, 1
      %v352 = vor.u32 %v347, %v351
      %v354 = vshll.u32 %v326, 16
      %v356 = vrot.slane %v354, 1
      %v357 = vsel %vm333, %v352, %v356
      %v359 = vshrl.u32 %v303, 16
      %v361 = vshll.u32 %v303, 16
      %v363 = vrot.slane %v361, 1
      %v364 = vor.u32 %v359, %v363
      %v366 = vshll.u32 %v327, 16
      %v368 = vrot.slane %v366, 1
      %v369 = vsel %vm333, %v364, %v368
      %v371 = vshrl.u32 %v304, 16
      %v373 = vshll.u32 %v304, 16
      %v375 = vrot.slane %v373, 1
      %v376 = vor.u32 %v371, %v375
      %v378 = vshll.u32 %v328, 16
      %v380 = vrot.slane %v378, 1
      %v381 = vsel %vm333, %v376, %v380
      %v383 = vshrl.u32 %v305, 16
      %v385 = vshll.u32 %v305, 16
      %v387 = vrot.slane %v385, 1
      %v388 = vor.u32 %v383, %v387
      %v390 = vshll.u32 %v329, 16
      %v392 = vrot.slane %v390, 1
      %v393 = vsel %vm333, %v388, %v392
      %v395 = vshrl.u32 %v306, 16
      %v397 = vshll.u32 %v306, 16
      %v399 = vrot.slane %v397, 1
      %v400 = vor.u32 %v395, %v399
      %v402 = vshll.u32 %v330, 16
      %v404 = vrot.slane %v402, 1
      %v405 = vsel %vm333, %v400, %v404
      %v407 = vshrl.u32 %v307, 16
      %v409 = vshll.u32 %v307, 16
      %v411 = vrot.slane %v409, 1
      %v412 = vor.u32 %v407, %v411
      %v414 = vshll.u32 %v331, 16
      %v416 = vrot.slane %v414, 1
      %v417 = vsel %vm333, %v412, %v416
      %v419 = vshrl.u32 %v308, 16
      %v421 = vshll.u32 %v308, 16
      %v423 = vrot.slane %v421, 1
      %v424 = vor.u32 %v419, %v423
      %v426 = vshll.u32 %v332, 16
      %v428 = vrot.slane %v426, 1
      %v429 = vsel %vm333, %v424, %v428
      %430 = vrot.lane.b32.xlu0 %v345, 8
      %v431 = vpop.permute.xlu0 %430
      %432 = vrot.lane.b32.xlu0 %v357, 8
      %v433 = vpop.permute.xlu0 %432
      %434 = vrot.lane.b32.xlu0 %v369, 8
      %v435 = vpop.permute.xlu0 %434
      %436 = vrot.lane.b32.xlu0 %v381, 8
      %v437 = vpop.permute.xlu0 %436
      %438 = vrot.lane.b32.xlu0 %v393, 8
      %v439 = vpop.permute.xlu0 %438
      %440 = vrot.lane.b32.xlu0 %v405, 8
      %v441 = vpop.permute.xlu0 %440
      %442 = vrot.lane.b32.xlu0 %v417, 8
      %v443 = vpop.permute.xlu0 %442
      %444 = vrot.lane.b32.xlu0 %v429, 8
      %v445 = vpop.permute.xlu0 %444
      %vm446 = vcmask 1046528
      %v447 = vrot.slane %v301, 1
      %v448 = vrot.slane %v325, 1
      %v449 = vsel %vm446, %v447, %v448
      %v450 = vrot.slane %v302, 1
      %v451 = vrot.slane %v326, 1
      %v452 = vsel %vm446, %v450, %v451
      %v453 = vrot.slane %v303, 1
      %v454 = vrot.slane %v327, 1
      %v455 = vsel %vm446, %v453, %v454
      %v456 = vrot.slane %v304, 1
      %v457 = vrot.slane %v328, 1
      %v458 = vsel %vm446, %v456, %v457
      %v459 = vrot.slane %v305, 1
      %v460 = vrot.slane %v329, 1
      %v461 = vsel %vm446, %v459, %v460
      %v462 = vrot.slane %v306, 1
      %v463 = vrot.slane %v330, 1
      %v464 = vsel %vm446, %v462, %v463
      %v465 = vrot.slane %v307, 1
      %v466 = vrot.slane %v331, 1
      %v467 = vsel %vm446, %v465, %v466
      %v468 = vrot.slane %v308, 1
      %v469 = vrot.slane %v332, 1
      %v470 = vsel %vm446, %v468, %v469
      %471 = vrot.lane.b32.xlu0 %v449, 16
      %v472 = vpop.permute.xlu0 %471
      %473 = vrot.lane.b32.xlu0 %v452, 16
      %v474 = vpop.permute.xlu0 %473
      %475 = vrot.lane.b32.xlu0 %v455, 16
      %v476 = vpop.permute.xlu0 %475
      %477 = vrot.lane.b32.xlu0 %v458, 16
      %v478 = vpop.permute.xlu0 %477
      %479 = vrot.lane.b32.xlu0 %v461, 16
      %v480 = vpop.permute.xlu0 %479
      %481 = vrot.lane.b32.xlu0 %v464, 16
      %v482 = vpop.permute.xlu0 %481
      %483 = vrot.lane.b32.xlu0 %v467, 16
      %v484 = vpop.permute.xlu0 %483
      %485 = vrot.lane.b32.xlu0 %v470, 16
      %v486 = vpop.permute.xlu0 %485
      %vm487 = vcmask 64512
      %v489 = vsel %vm487, %v301, %v431
      %v491 = vsel %vm487, %v302, %v433
      %v493 = vsel %vm487, %v303, %v435
      %v495 = vsel %vm487, %v304, %v437
      %v497 = vsel %vm487, %v305, %v439
      %v499 = vsel %vm487, %v306, %v441
      %v501 = vsel %vm487, %v307, %v443
      %v503 = vsel %vm487, %v308, %v445
      %vm504 = vcmask 130048
      %v506 = vsel %vm504, %v489, %v472
      %v508 = vsel %vm504, %v491, %v474
      %v510 = vsel %vm504, %v493, %v476
      %v512 = vsel %vm504, %v495, %v478
      %v514 = vsel %vm504, %v497, %v480
      %v516 = vsel %vm504, %v499, %v482
      %v518 = vsel %vm504, %v501, %v484
      %v520 = vsel %vm504, %v503, %v486
      %v521 = vld [vmem:[%s1] sm:$0xf]
      %v522 = vld [vmem:[%s1 + $0x4] sm:$0xf]
      %v523 = vld [vmem:[%s1 + $0x8] sm:$0xf]
      %s524 = sadd.s32 %s241, 1
      %s525 = smul.u32 %s524, 3
      %s526 = smul.addr %s525, 4
      %s527 = scalar_lea.vmem %s222, %s526
      %v528 = vld [vmem:[%s527] sm:$0xf]
      %v529 = vld [vmem:[%s527 + $0x4] sm:$0xf]
      %v530 = vld [vmem:[%s527 + $0x8] sm:$0x1]
      %v531 = vld [vmem:[%s527 + $0xc] sm:$0xf]
      %v532 = vld [vmem:[%s527 + $0x10] sm:$0xf]
      %v533 = vld [vmem:[%s527 + $0x14] sm:$0x1]
      %v534 = vld [vmem:[%s527 + $0x18] sm:$0xf]
      %v535 = vld [vmem:[%s527 + $0x1c] sm:$0xf]
      %v536 = vld [vmem:[%s527 + $0x20] sm:$0x1]
      %v537 = vld [vmem:[%s527 + $0x24] sm:$0xf]
      %v538 = vld [vmem:[%s527 + $0x28] sm:$0xf]
      %v539 = vld [vmem:[%s527 + $0x2c] sm:$0x1]
      %v540 = vld [vmem:[%s527 + $0x30] sm:$0xf]
      %v541 = vld [vmem:[%s527 + $0x34] sm:$0xf]
      %v542 = vld [vmem:[%s527 + $0x38] sm:$0x1]
      %v543 = vld [vmem:[%s527 + $0x3c] sm:$0xf]
      %v544 = vld [vmem:[%s527 + $0x40] sm:$0xf]
      %v545 = vld [vmem:[%s527 + $0x44] sm:$0x1]
      %v546 = vld [vmem:[%s527 + $0x48] sm:$0xf]
      %v547 = vld [vmem:[%s527 + $0x4c] sm:$0xf]
      %v548 = vld [vmem:[%s527 + $0x50] sm:$0x1]
      %v549 = vld [vmem:[%s527 + $0x54] sm:$0xf]
      %v550 = vld [vmem:[%s527 + $0x58] sm:$0xf]
      %v551 = vld [vmem:[%s527 + $0x5c] sm:$0x1]
      %v568 = vunpack.c.l.b16 %v528
      %v569 = vunpack.c.l.b16 %v529
      %v570 = vunpack.c.l.b16 %v531
      %v571 = vunpack.c.l.b16 %v532
      %v572 = vunpack.c.l.b16 %v534
      %v573 = vunpack.c.l.b16 %v535
      %v574 = vunpack.c.l.b16 %v537
      %v575 = vunpack.c.l.b16 %v538
      %v576 = vunpack.c.l.b16 %v540
      %v577 = vunpack.c.l.b16 %v541
      %v578 = vunpack.c.l.b16 %v543
      %v579 = vunpack.c.l.b16 %v544
      %v580 = vunpack.c.l.b16 %v546
      %v581 = vunpack.c.l.b16 %v547
      %v582 = vunpack.c.l.b16 %v549
      %v583 = vunpack.c.l.b16 %v550
      %v584 = vpack.c.b16 %v569, %v568
      %v585 = vpack.c.b16 %v571, %v570
      %v586 = vpack.c.b16 %v573, %v572
      %v587 = vpack.c.b16 %v575, %v574
      %v588 = vpack.c.b16 %v577, %v576
      %v589 = vpack.c.b16 %v579, %v578
      %v590 = vpack.c.b16 %v581, %v580
      %v591 = vpack.c.b16 %v583, %v582
      %v600 = vunpack.c.l.b16 %v530
      %v601 = vunpack.c.l.b16 %v533
      %v602 = vunpack.c.l.b16 %v536
      %v603 = vunpack.c.l.b16 %v539
      %v604 = vunpack.c.l.b16 %v542
      %v605 = vunpack.c.l.b16 %v545
      %v606 = vunpack.c.l.b16 %v548
      %v607 = vunpack.c.l.b16 %v551
      %v608 = vpack.c.b16 %v600, %v600
      %v609 = vpack.c.b16 %v601, %v601
      %v610 = vpack.c.b16 %v602, %v602
      %v611 = vpack.c.b16 %v603, %v603
      %v612 = vpack.c.b16 %v604, %v604
      %v613 = vpack.c.b16 %v605, %v605
      %v614 = vpack.c.b16 %v606, %v606
      %v615 = vpack.c.b16 %v607, %v607
      %v617 = vshrl.u32 %v584, 16
      %v619 = vshll.u32 %v584, 16
      %v621 = vrot.slane %v619, 1
      %v622 = vor.u32 %v617, %v621
      %v624 = vshll.u32 %v608, 16
      %v626 = vrot.slane %v624, 1
      %v627 = vsel %vm333, %v622, %v626
      %v629 = vshrl.u32 %v585, 16
      %v631 = vshll.u32 %v585, 16
      %v633 = vrot.slane %v631, 1
      %v634 = vor.u32 %v629, %v633
      %v636 = vshll.u32 %v609, 16
      %v638 = vrot.slane %v636, 1
      %v639 = vsel %vm333, %v634, %v638
      %v641 = vshrl.u32 %v586, 16
      %v643 = vshll.u32 %v586, 16
      %v645 = vrot.slane %v643, 1
      %v646 = vor.u32 %v641, %v645
      %v648 = vshll.u32 %v610, 16
      %v650 = vrot.slane %v648, 1
      %v651 = vsel %vm333, %v646, %v650
      %v653 = vshrl.u32 %v587, 16
      %v655 = vshll.u32 %v587, 16
      %v657 = vrot.slane %v655, 1
      %v658 = vor.u32 %v653, %v657
      %v660 = vshll.u32 %v611, 16
      %v662 = vrot.slane %v660, 1
      %v663 = vsel %vm333, %v658, %v662
      %v665 = vshrl.u32 %v588, 16
      %v667 = vshll.u32 %v588, 16
      %v669 = vrot.slane %v667, 1
      %v670 = vor.u32 %v665, %v669
      %v672 = vshll.u32 %v612, 16
      %v674 = vrot.slane %v672, 1
      %v675 = vsel %vm333, %v670, %v674
      %v677 = vshrl.u32 %v589, 16
      %v679 = vshll.u32 %v589, 16
      %v681 = vrot.slane %v679, 1
      %v682 = vor.u32 %v677, %v681
      %v684 = vshll.u32 %v613, 16
      %v686 = vrot.slane %v684, 1
      %v687 = vsel %vm333, %v682, %v686
      %v689 = vshrl.u32 %v590, 16
      %v691 = vshll.u32 %v590, 16
      %v693 = vrot.slane %v691, 1
      %v694 = vor.u32 %v689, %v693
      %v696 = vshll.u32 %v614, 16
      %v698 = vrot.slane %v696, 1
      %v699 = vsel %vm333, %v694, %v698
      %v701 = vshrl.u32 %v591, 16
      %v703 = vshll.u32 %v591, 16
      %v705 = vrot.slane %v703, 1
      %v706 = vor.u32 %v701, %v705
      %v708 = vshll.u32 %v615, 16
      %v710 = vrot.slane %v708, 1
      %v711 = vsel %vm333, %v706, %v710
      %712 = vrot.lane.b32.xlu0 %v627, 8
      %v713 = vpop.permute.xlu0 %712
      %714 = vrot.lane.b32.xlu0 %v639, 8
      %v715 = vpop.permute.xlu0 %714
      %716 = vrot.lane.b32.xlu0 %v651, 8
      %v717 = vpop.permute.xlu0 %716
      %718 = vrot.lane.b32.xlu0 %v663, 8
      %v719 = vpop.permute.xlu0 %718
      %720 = vrot.lane.b32.xlu0 %v675, 8
      %v721 = vpop.permute.xlu0 %720
      %722 = vrot.lane.b32.xlu0 %v687, 8
      %v723 = vpop.permute.xlu0 %722
      %724 = vrot.lane.b32.xlu0 %v699, 8
      %v725 = vpop.permute.xlu0 %724
      %726 = vrot.lane.b32.xlu0 %v711, 8
      %v727 = vpop.permute.xlu0 %726
      %v728 = vrot.slane %v584, 1
      %v729 = vrot.slane %v608, 1
      %v730 = vsel %vm446, %v728, %v729
      %v731 = vrot.slane %v585, 1
      %v732 = vrot.slane %v609, 1
      %v733 = vsel %vm446, %v731, %v732
      %v734 = vrot.slane %v586, 1
      %v735 = vrot.slane %v610, 1
      %v736 = vsel %vm446, %v734, %v735
      %v737 = vrot.slane %v587, 1
      %v738 = vrot.slane %v611, 1
      %v739 = vsel %vm446, %v737, %v738
      %v740 = vrot.slane %v588, 1
      %v741 = vrot.slane %v612, 1
      %v742 = vsel %vm446, %v740, %v741
      %v743 = vrot.slane %v589, 1
      %v744 = vrot.slane %v613, 1
      %v745 = vsel %vm446, %v743, %v744
      %v746 = vrot.slane %v590, 1
      %v747 = vrot.slane %v614, 1
      %v748 = vsel %vm446, %v746, %v747
      %v749 = vrot.slane %v591, 1
      %v750 = vrot.slane %v615, 1
      %v751 = vsel %vm446, %v749, %v750
      %752 = vrot.lane.b32.xlu0 %v730, 16
      %v753 = vpop.permute.xlu0 %752
      %754 = vrot.lane.b32.xlu0 %v733, 16
      %v755 = vpop.permute.xlu0 %754
      %756 = vrot.lane.b32.xlu0 %v736, 16
      %v757 = vpop.permute.xlu0 %756
      %758 = vrot.lane.b32.xlu0 %v739, 16
      %v759 = vpop.permute.xlu0 %758
      %760 = vrot.lane.b32.xlu0 %v742, 16
      %v761 = vpop.permute.xlu0 %760
      %762 = vrot.lane.b32.xlu0 %v745, 16
      %v763 = vpop.permute.xlu0 %762
      %764 = vrot.lane.b32.xlu0 %v748, 16
      %v765 = vpop.permute.xlu0 %764
      %766 = vrot.lane.b32.xlu0 %v751, 16
      %v767 = vpop.permute.xlu0 %766
      %v769 = vsel %vm487, %v584, %v713
      %v771 = vsel %vm487, %v585, %v715
      %v773 = vsel %vm487, %v586, %v717
      %v775 = vsel %vm487, %v587, %v719
      %v777 = vsel %vm487, %v588, %v721
      %v779 = vsel %vm487, %v589, %v723
      %v781 = vsel %vm487, %v590, %v725
      %v783 = vsel %vm487, %v591, %v727
      %v785 = vsel %vm504, %v769, %v753
      %v787 = vsel %vm504, %v771, %v755
      %v789 = vsel %vm504, %v773, %v757
      %v791 = vsel %vm504, %v775, %v759
      %v793 = vsel %vm504, %v777, %v761
      %v795 = vsel %vm504, %v779, %v763
      %v797 = vsel %vm504, %v781, %v765
      %v799 = vsel %vm504, %v783, %v767
      %s800 = scalar_lea.vmem %s1, 12
      %v801 = vld [vmem:[%s800] sm:$0xf]
      %v802 = vld [vmem:[%s800 + $0x4] sm:$0xf]
      %v803 = vld [vmem:[%s800 + $0x8] sm:$0xf]
      %v807 = vunpack.c.l.b16 %v801
      %v808 = vunpack.c.l.b16 %v802
      %v809 = vunpack.c.l.b16 %v803
      %v810 = vpack.c.b16 %v808, %v807
      %v811 = vpack.c.b16 %v809, %v809
      %vm813 = vcmask 195584
      %v814 = vsel %vm813, %v785, 0
      %v816 = vsel %vm813, %v787, 0
      %v818 = vsel %vm813, %v789, 0
      %v820 = vsel %vm813, %v791, 0
      %v822 = vsel %vm813, %v793, 0
      %v824 = vsel %vm813, %v795, 0
      %v826 = vsel %vm813, %v797, 0
      %v828 = vsel %vm813, %v799, 0
      %vm830 = vcmask 1043456
      %v832 = vsel %vm830, %v811, 0
      %834 = vmatprep.subr.bf16.mxu0 0
      %835 = vmatpush1.bf16.msra.mxu0 %v810
      %836 = vmatprep.subr.bf16.mxu0 0
      %837 = vmatpush1.bf16.msra.mxu0 %v832
      %838 = vmatprep.subr.bf16.mxu0 0
      %839 = vmatpush1.bf16.msra.mxu0 0
      %840 = vmatprep.subr.bf16.mxu0 0
      %841 = vmatpush1.bf16.msra.mxu0 0
      %842 = vmatprep.subr.bf16.mxu0 0
      %843 = vmatpush1.bf16.msra.mxu0 0
      %844 = vmatprep.subr.bf16.mxu0 0
      %845 = vmatpush1.bf16.msra.mxu0 0
      %846 = vmatprep.subr.bf16.mxu0 0
      %847 = vmatpush1.bf16.msra.mxu0 0
      %848 = vmatprep.subr.bf16.mxu0 0
      %849 = vmatpush1.bf16.msra.mxu0 0
      %850 = vmatprep.subr.bf16.mxu0 0
      %851 = vmatpush1.bf16.msra.mxu0 0
      %852 = vmatprep.subr.bf16.mxu0 0
      %853 = vmatpush1.bf16.msra.mxu0 0
      %854 = vmatprep.subr.bf16.mxu0 0
      %855 = vmatpush1.bf16.msra.mxu0 0
      %856 = vmatprep.subr.bf16.mxu0 0
      %857 = vmatpush1.bf16.msra.mxu0 0
      %858 = vmatprep.subr.bf16.mxu0 0
      %859 = vmatpush1.bf16.msra.mxu0 0
      %860 = vmatprep.subr.bf16.mxu0 0
      %861 = vmatpush1.bf16.msra.mxu0 0
      %862 = vmatprep.subr.bf16.mxu0 0
      %863 = vmatpush1.bf16.msra.mxu0 0
      %864 = vmatprep.subr.bf16.mxu0 0
      %865 = vmatpush1.bf16.msra.mxu0 0
      %866 = vmatprep.mubr.bf16.mxu0 0
      %867 = vmatmul.mubr.bf16.gmra.mrb[0].mxu0 %v814
      %v868 = vpop.f32.mrb[0].mxu0
      %v869 = vadd.f32 0.0, %v868
      %v870 = vpop.f32.mrb[0].mxu0
      %v871 = vpop.f32.mrb[0].mxu0
      %v872 = vadd.f32 0.0, %v871
      %v873 = vpop.f32.mrb[0].mxu0
      %874 = vmatprep.mubr.bf16.mxu0 0
      %875 = vmatmul.mubr.bf16.gmra.mrb[0].mxu0 %v816
      %v876 = vpop.f32.mrb[0].mxu0
      %v877 = vadd.f32 0.0, %v876
      %v878 = vpop.f32.mrb[0].mxu0
      %v879 = vpop.f32.mrb[0].mxu0
      %v880 = vadd.f32 0.0, %v879
      %v881 = vpop.f32.mrb[0].mxu0
      %882 = vmatprep.mubr.bf16.mxu0 0
      %883 = vmatmul.mubr.bf16.gmra.mrb[0].mxu0 %v818
      %v884 = vpop.f32.mrb[0].mxu0
      %v885 = vadd.f32 0.0, %v884
      %v886 = vpop.f32.mrb[0].mxu0
      %v887 = vpop.f32.mrb[0].mxu0
      %v888 = vadd.f32 0.0, %v887
      %v889 = vpop.f32.mrb[0].mxu0
      %890 = vmatprep.mubr.bf16.mxu0 0
      %891 = vmatmul.mubr.bf16.gmra.mrb[0].mxu0 %v820
      %v892 = vpop.f32.mrb[0].mxu0
      %v893 = vadd.f32 0.0, %v892
      %v894 = vpop.f32.mrb[0].mxu0
      %v895 = vpop.f32.mrb[0].mxu0
      %v896 = vadd.f32 0.0, %v895
      %v897 = vpop.f32.mrb[0].mxu0
      %898 = vmatprep.mubr.bf16.mxu0 0
      %899 = vmatmul.mubr.bf16.gmra.mrb[0].mxu0 %v822
      %v900 = vpop.f32.mrb[0].mxu0
      %v901 = vadd.f32 0.0, %v900
      %v902 = vpop.f32.mrb[0].mxu0
      %v903 = vpop.f32.mrb[0].mxu0
      %v904 = vadd.f32 0.0, %v903
      %v905 = vpop.f32.mrb[0].mxu0
      %906 = vmatprep.mubr.bf16.mxu0 0
      %907 = vmatmul.mubr.bf16.gmra.mrb[0].mxu0 %v824
      %v908 = vpop.f32.mrb[0].mxu0
      %v909 = vadd.f32 0.0, %v908
      %v910 = vpop.f32.mrb[0].mxu0
      %v911 = vpop.f32.mrb[0].mxu0
      %v912 = vadd.f32 0.0, %v911
      %v913 = vpop.f32.mrb[0].mxu0
      %914 = vmatprep.mubr.bf16.mxu0 0
      %915 = vmatmul.mubr.bf16.gmra.mrb[0].mxu0 %v826
      %v916 = vpop.f32.mrb[0].mxu0
      %v917 = vadd.f32 0.0, %v916
      %v918 = vpop.f32.mrb[0].mxu0
      %v919 = vpop.f32.mrb[0].mxu0
      %v920 = vadd.f32 0.0, %v919
      %v921 = vpop.f32.mrb[0].mxu0
      %922 = vmatprep.mubr.bf16.mxu0 0
      %923 = vmatmul.mubr.bf16.gmra.mrb[0].mxu0 %v828
      %v924 = vpop.f32.mrb[0].mxu0
      %v925 = vadd.f32 0.0, %v924
      %v926 = vpop.f32.mrb[0].mxu0
      %v927 = vpop.f32.mrb[0].mxu0
      %v928 = vadd.f32 0.0, %v927
      %v929 = vpop.f32.mrb[0].mxu0
      %930 = vdwg.mxu0
      %v934 = vunpack.c.l.b16 %v521
      %v935 = vunpack.c.l.b16 %v522
      %v936 = vunpack.c.l.b16 %v523
      %v937 = vpack.c.b16 %v935, %v934
      %v938 = vpack.c.b16 %v936, %v936
      %v940 = vsel %vm813, %v506, 0
      %v942 = vsel %vm813, %v508, 0
      %v944 = vsel %vm813, %v510, 0
      %v946 = vsel %vm813, %v512, 0
      %v948 = vsel %vm813, %v514, 0
      %v950 = vsel %vm813, %v516, 0
      %v952 = vsel %vm813, %v518, 0
      %v954 = vsel %vm813, %v520, 0
      %v957 = vsel %vm830, %v938, 0
      %959 = vmatprep.subr.bf16.mxu0 0
      %960 = vmatpush1.bf16.msra.mxu0 %v937
      %961 = vmatprep.subr.bf16.mxu0 0
      %962 = vmatpush1.bf16.msra.mxu0 %v957
      %963 = vmatprep.subr.bf16.mxu0 0
      %964 = vmatpush1.bf16.msra.mxu0 0
      %965 = vmatprep.subr.bf16.mxu0 0
      %966 = vmatpush1.bf16.msra.mxu0 0
      %967 = vmatprep.subr.bf16.mxu0 0
      %968 = vmatpush1.bf16.msra.mxu0 0
      %969 = vmatprep.subr.bf16.mxu0 0
      %970 = vmatpush1.bf16.msra.mxu0 0
      %971 = vmatprep.subr.bf16.mxu0 0
      %972 = vmatpush1.bf16.msra.mxu0 0
      %973 = vmatprep.subr.bf16.mxu0 0
      %974 = vmatpush1.bf16.msra.mxu0 0
      %975 = vmatprep.subr.bf16.mxu0 0
      %976 = vmatpush1.bf16.msra.mxu0 0
      %977 = vmatprep.subr.bf16.mxu0 0
      %978 = vmatpush1.bf16.msra.mxu0 0
      %979 = vmatprep.subr.bf16.mxu0 0
      %980 = vmatpush1.bf16.msra.mxu0 0
      %981 = vmatprep.subr.bf16.mxu0 0
      %982 = vmatpush1.bf16.msra.mxu0 0
      %983 = vmatprep.subr.bf16.mxu0 0
      %984 = vmatpush1.bf16.msra.mxu0 0
      %985 = vmatprep.subr.bf16.mxu0 0
      %986 = vmatpush1.bf16.msra.mxu0 0
      %987 = vmatprep.subr.bf16.mxu0 0
      %988 = vmatpush1.bf16.msra.mxu0 0
      %989 = vmatprep.subr.bf16.mxu0 0
      %990 = vmatpush1.bf16.msra.mxu0 0
      %991 = vmatprep.mubr.bf16.mxu0 0
      %992 = vmatmul.mubr.bf16.gmra.mrb[0].mxu0 %v940
      %v993 = vpop.f32.mrb[0].mxu0
      %v994 = vadd.f32 %v869, %v993
      %v995 = vpop.f32.mrb[0].mxu0
      %v996 = vpop.f32.mrb[0].mxu0
      %v997 = vadd.f32 %v872, %v996
      %v998 = vpop.f32.mrb[0].mxu0
      %999 = vmatprep.mubr.bf16.mxu0 0
      %1000 = vmatmul.mubr.bf16.gmra.mrb[0].mxu0 %v942
      %v1001 = vpop.f32.mrb[0].mxu0
      %v1002 = vadd.f32 %v877, %v1001
      %v1003 = vpop.f32.mrb[0].mxu0
      %v1004 = vpop.f32.mrb[0].mxu0
      %v1005 = vadd.f32 %v880, %v1004
      %v1006 = vpop.f32.mrb[0].mxu0
      %1007 = vmatprep.mubr.bf16.mxu0 0
      %1008 = vmatmul.mubr.bf16.gmra.mrb[0].mxu0 %v944
      %v1009 = vpop.f32.mrb[0].mxu0
      %v1010 = vadd.f32 %v885, %v1009
      %v1011 = vpop.f32.mrb[0].mxu0
      %v1012 = vpop.f32.mrb[0].mxu0
      %v1013 = vadd.f32 %v888, %v1012
      %v1014 = vpop.f32.mrb[0].mxu0
      %1015 = vmatprep.mubr.bf16.mxu0 0
      %1016 = vmatmul.mubr.bf16.gmra.mrb[0].mxu0 %v946
      %v1017 = vpop.f32.mrb[0].mxu0
      %v1018 = vadd.f32 %v893, %v1017
      %v1019 = vpop.f32.mrb[0].mxu0
      %v1020 = vpop.f32.mrb[0].mxu0
      %v1021 = vadd.f32 %v896, %v1020
      %v1022 = vpop.f32.mrb[0].mxu0
      %1023 = vmatprep.mubr.bf16.mxu0 0
      %1024 = vmatmul.mubr.bf16.gmra.mrb[0].mxu0 %v948
      %v1025 = vpop.f32.mrb[0].mxu0
      %v1026 = vadd.f32 %v901, %v1025
      %v1027 = vpop.f32.mrb[0].mxu0
      %v1028 = vpop.f32.mrb[0].mxu0
      %v1029 = vadd.f32 %v904, %v1028
      %v1030 = vpop.f32.mrb[0].mxu0
      %1031 = vmatprep.mubr.bf16.mxu0 0
      %1032 = vmatmul.mubr.bf16.gmra.mrb[0].mxu0 %v950
      %v1033 = vpop.f32.mrb[0].mxu0
      %v1034 = vadd.f32 %v909, %v1033
      %v1035 = vpop.f32.mrb[0].mxu0
      %v1036 = vpop.f32.mrb[0].mxu0
      %v1037 = vadd.f32 %v912, %v1036
      %v1038 = vpop.f32.mrb[0].mxu0
      %1039 = vmatprep.mubr.bf16.mxu0 0
      %1040 = vmatmul.mubr.bf16.gmra.mrb[0].mxu0 %v952
      %v1041 = vpop.f32.mrb[0].mxu0
      %v1042 = vadd.f32 %v917, %v1041
      %v1043 = vpop.f32.mrb[0].mxu0
      %v1044 = vpop.f32.mrb[0].mxu0
      %v1045 = vadd.f32 %v920, %v1044
      %v1046 = vpop.f32.mrb[0].mxu0
      %1047 = vmatprep.mubr.bf16.mxu0 0
      %1048 = vmatmul.mubr.bf16.gmra.mrb[0].mxu0 %v954
      %v1049 = vpop.f32.mrb[0].mxu0
      %v1050 = vadd.f32 %v925, %v1049
      %v1051 = vpop.f32.mrb[0].mxu0
      %v1052 = vpop.f32.mrb[0].mxu0
      %v1053 = vadd.f32 %v928, %v1052
      %v1054 = vpop.f32.mrb[0].mxu0
      %1055 = vdwg.mxu0
      %s1056 = sadd.s32 %s241, 2
      %s1057 = smul.u32 %s1056, 3
      %s1058 = smul.addr %s1057, 4
      %s1059 = scalar_lea.vmem %s222, %s1058
      %v1060 = vld [vmem:[%s1059] sm:$0xf]
      %v1061 = vld [vmem:[%s1059 + $0x4] sm:$0xf]
      %v1062 = vld [vmem:[%s1059 + $0x8] sm:$0x1]
      %v1063 = vld [vmem:[%s1059 + $0xc] sm:$0xf]
      %v1064 = vld [vmem:[%s1059 + $0x10] sm:$0xf]
      %v1065 = vld [vmem:[%s1059 + $0x14] sm:$0x1]
      %v1066 = vld [vmem:[%s1059 + $0x18] sm:$0xf]
      %v1067 = vld [vmem:[%s1059 + $0x1c] sm:$0xf]
      %v1068 = vld [vmem:[%s1059 + $0x20] sm:$0x1]
      %v1069 = vld [vmem:[%s1059 + $0x24] sm:$0xf]
      %v1070 = vld [vmem:[%s1059 + $0x28] sm:$0xf]
      %v1071 = vld [vmem:[%s1059 + $0x2c] sm:$0x1]
      %v1072 = vld [vmem:[%s1059 + $0x30] sm:$0xf]
      %v1073 = vld [vmem:[%s1059 + $0x34] sm:$0xf]
      %v1074 = vld [vmem:[%s1059 + $0x38] sm:$0x1]
      %v1075 = vld [vmem:[%s1059 + $0x3c] sm:$0xf]
      %v1076 = vld [vmem:[%s1059 + $0x40] sm:$0xf]
      %v1077 = vld [vmem:[%s1059 + $0x44] sm:$0x1]
      %v1078 = vld [vmem:[%s1059 + $0x48] sm:$0xf]
      %v1079 = vld [vmem:[%s1059 + $0x4c] sm:$0xf]
      %v1080 = vld [vmem:[%s1059 + $0x50] sm:$0x1]
      %v1081 = vld [vmem:[%s1059 + $0x54] sm:$0xf]
      %v1082 = vld [vmem:[%s1059 + $0x58] sm:$0xf]
      %v1083 = vld [vmem:[%s1059 + $0x5c] sm:$0x1]
      %v1100 = vunpack.c.l.b16 %v1060
      %v1101 = vunpack.c.l.b16 %v1061
      %v1102 = vunpack.c.l.b16 %v1063
      %v1103 = vunpack.c.l.b16 %v1064
      %v1104 = vunpack.c.l.b16 %v1066
      %v1105 = vunpack.c.l.b16 %v1067
      %v1106 = vunpack.c.l.b16 %v1069
      %v1107 = vunpack.c.l.b16 %v1070
      %v1108 = vunpack.c.l.b16 %v1072
      %v1109 = vunpack.c.l.b16 %v1073
      %v1110 = vunpack.c.l.b16 %v1075
      %v1111 = vunpack.c.l.b16 %v1076
      %v1112 = vunpack.c.l.b16 %v1078
      %v1113 = vunpack.c.l.b16 %v1079
      %v1114 = vunpack.c.l.b16 %v1081
      %v1115 = vunpack.c.l.b16 %v1082
      %v1116 = vpack.c.b16 %v1101, %v1100
      %v1117 = vpack.c.b16 %v1103, %v1102
      %v1118 = vpack.c.b16 %v1105, %v1104
      %v1119 = vpack.c.b16 %v1107, %v1106
      %v1120 = vpack.c.b16 %v1109, %v1108
      %v1121 = vpack.c.b16 %v1111, %v1110
      %v1122 = vpack.c.b16 %v1113, %v1112
      %v1123 = vpack.c.b16 %v1115, %v1114
      %v1132 = vunpack.c.l.b16 %v1062
      %v1133 = vunpack.c.l.b16 %v1065
      %v1134 = vunpack.c.l.b16 %v1068
      %v1135 = vunpack.c.l.b16 %v1071
      %v1136 = vunpack.c.l.b16 %v1074
      %v1137 = vunpack.c.l.b16 %v1077
      %v1138 = vunpack.c.l.b16 %v1080
      %v1139 = vunpack.c.l.b16 %v1083
      %v1140 = vpack.c.b16 %v1132, %v1132
      %v1141 = vpack.c.b16 %v1133, %v1133
      %v1142 = vpack.c.b16 %v1134, %v1134
      %v1143 = vpack.c.b16 %v1135, %v1135
      %v1144 = vpack.c.b16 %v1136, %v1136
      %v1145 = vpack.c.b16 %v1137, %v1137
      %v1146 = vpack.c.b16 %v1138, %v1138
      %v1147 = vpack.c.b16 %v1139, %v1139
      %v1149 = vshrl.u32 %v1116, 16
      %v1151 = vshll.u32 %v1116, 16
      %v1153 = vrot.slane %v1151, 1
      %v1154 = vor.u32 %v1149, %v1153
      %v1156 = vshll.u32 %v1140, 16
      %v1158 = vrot.slane %v1156, 1
      %v1159 = vsel %vm333, %v1154, %v1158
      %v1161 = vshrl.u32 %v1117, 16
      %v1163 = vshll.u32 %v1117, 16
      %v1165 = vrot.slane %v1163, 1
      %v1166 = vor.u32 %v1161, %v1165
      %v1168 = vshll.u32 %v1141, 16
      %v1170 = vrot.slane %v1168, 1
      %v1171 = vsel %vm333, %v1166, %v1170
      %v1173 = vshrl.u32 %v1118, 16
      %v1175 = vshll.u32 %v1118, 16
      %v1177 = vrot.slane %v1175, 1
      %v1178 = vor.u32 %v1173, %v1177
      %v1180 = vshll.u32 %v1142, 16
      %v1182 = vrot.slane %v1180, 1
      %v1183 = vsel %vm333, %v1178, %v1182
      %v1185 = vshrl.u32 %v1119, 16
      %v1187 = vshll.u32 %v1119, 16
      %v1189 = vrot.slane %v1187, 1
      %v1190 = vor.u32 %v1185, %v1189
      %v1192 = vshll.u32 %v1143, 16
      %v1194 = vrot.slane %v1192, 1
      %v1195 = vsel %vm333, %v1190, %v1194
      %v1197 = vshrl.u32 %v1120, 16
      %v1199 = vshll.u32 %v1120, 16
      %v1201 = vrot.slane %v1199, 1
      %v1202 = vor.u32 %v1197, %v1201
      %v1204 = vshll.u32 %v1144, 16
      %v1206 = vrot.slane %v1204, 1
      %v1207 = vsel %vm333, %v1202, %v1206
      %v1209 = vshrl.u32 %v1121, 16
      %v1211 = vshll.u32 %v1121, 16
      %v1213 = vrot.slane %v1211, 1
      %v1214 = vor.u32 %v1209, %v1213
      %v1216 = vshll.u32 %v1145, 16
      %v1218 = vrot.slane %v1216, 1
      %v1219 = vsel %vm333, %v1214, %v1218
      %v1221 = vshrl.u32 %v1122, 16
      %v1223 = vshll.u32 %v1122, 16
      %v1225 = vrot.slane %v1223, 1
      %v1226 = vor.u32 %v1221, %v1225
      %v1228 = vshll.u32 %v1146, 16
      %v1230 = vrot.slane %v1228, 1
      %v1231 = vsel %vm333, %v1226, %v1230
      %v1233 = vshrl.u32 %v1123, 16
      %v1235 = vshll.u32 %v1123, 16
      %v1237 = vrot.slane %v1235, 1
      %v1238 = vor.u32 %v1233, %v1237
      %v1240 = vshll.u32 %v1147, 16
      %v1242 = vrot.slane %v1240, 1
      %v1243 = vsel %vm333, %v1238, %v1242
      %1244 = vrot.lane.b32.xlu0 %v1159, 8
      %v1245 = vpop.permute.xlu0 %1244
      %1246 = vrot.lane.b32.xlu0 %v1171, 8
      %v1247 = vpop.permute.xlu0 %1246
      %1248 = vrot.lane.b32.xlu0 %v1183, 8
      %v1249 = vpop.permute.xlu0 %1248
      %1250 = vrot.lane.b32.xlu0 %v1195, 8
      %v1251 = vpop.permute.xlu0 %1250
      %1252 = vrot.lane.b32.xlu0 %v1207, 8
      %v1253 = vpop.permute.xlu0 %1252
      %1254 = vrot.lane.b32.xlu0 %v1219, 8
      %v1255 = vpop.permute.xlu0 %1254
      %1256 = vrot.lane.b32.xlu0 %v1231, 8
      %v1257 = vpop.permute.xlu0 %1256
      %1258 = vrot.lane.b32.xlu0 %v1243, 8
      %v1259 = vpop.permute.xlu0 %1258
      %v1260 = vrot.slane %v1116, 1
      %v1261 = vrot.slane %v1140, 1
      %v1262 = vsel %vm446, %v1260, %v1261
      %v1263 = vrot.slane %v1117, 1
      %v1264 = vrot.slane %v1141, 1
      %v1265 = vsel %vm446, %v1263, %v1264
      %v1266 = vrot.slane %v1118, 1
      %v1267 = vrot.slane %v1142, 1
      %v1268 = vsel %vm446, %v1266, %v1267
      %v1269 = vrot.slane %v1119, 1
      %v1270 = vrot.slane %v1143, 1
      %v1271 = vsel %vm446, %v1269, %v1270
      %v1272 = vrot.slane %v1120, 1
      %v1273 = vrot.slane %v1144, 1
      %v1274 = vsel %vm446, %v1272, %v1273
      %v1275 = vrot.slane %v1121, 1
      %v1276 = vrot.slane %v1145, 1
      %v1277 = vsel %vm446, %v1275, %v1276
      %v1278 = vrot.slane %v1122, 1
      %v1279 = vrot.slane %v1146, 1
      %v1280 = vsel %vm446, %v1278, %v1279
      %v1281 = vrot.slane %v1123, 1
      %v1282 = vrot.slane %v1147, 1
      %v1283 = vsel %vm446, %v1281, %v1282
      %1284 = vrot.lane.b32.xlu0 %v1262, 16
      %v1285 = vpop.permute.xlu0 %1284
      %1286 = vrot.lane.b32.xlu0 %v1265, 16
      %v1287 = vpop.permute.xlu0 %1286
      %1288 = vrot.lane.b32.xlu0 %v1268, 16
      %v1289 = vpop.permute.xlu0 %1288
      %1290 = vrot.lane.b32.xlu0 %v1271, 16
      %v1291 = vpop.permute.xlu0 %1290
      %1292 = vrot.lane.b32.xlu0 %v1274, 16
      %v1293 = vpop.permute.xlu0 %1292
      %1294 = vrot.lane.b32.xlu0 %v1277, 16
      %v1295 = vpop.permute.xlu0 %1294
      %1296 = vrot.lane.b32.xlu0 %v1280, 16
      %v1297 = vpop.permute.xlu0 %1296
      %1298 = vrot.lane.b32.xlu0 %v1283, 16
      %v1299 = vpop.permute.xlu0 %1298
      %v1301 = vsel %vm487, %v1116, %v1245
      %v1303 = vsel %vm487, %v1117, %v1247
      %v1305 = vsel %vm487, %v1118, %v1249
      %v1307 = vsel %vm487, %v1119, %v1251
      %v1309 = vsel %vm487, %v1120, %v1253
      %v1311 = vsel %vm487, %v1121, %v1255
      %v1313 = vsel %vm487, %v1122, %v1257
      %v1315 = vsel %vm487, %v1123, %v1259
      %v1317 = vsel %vm504, %v1301, %v1285
      %v1319 = vsel %vm504, %v1303, %v1287
      %v1321 = vsel %vm504, %v1305, %v1289
      %v1323 = vsel %vm504, %v1307, %v1291
      %v1325 = vsel %vm504, %v1309, %v1293
      %v1327 = vsel %vm504, %v1311, %v1295
      %v1329 = vsel %vm504, %v1313, %v1297
      %v1331 = vsel %vm504, %v1315, %v1299
      %s1332 = scalar_lea.vmem %s1, 24
      %v1333 = vld [vmem:[%s1332] sm:$0xf]
      %v1334 = vld [vmem:[%s1332 + $0x4] sm:$0xf]
      %v1335 = vld [vmem:[%s1332 + $0x8] sm:$0xf]
      %v1339 = vunpack.c.l.b16 %v1333
      %v1340 = vunpack.c.l.b16 %v1334
      %v1341 = vunpack.c.l.b16 %v1335
      %v1342 = vpack.c.b16 %v1340, %v1339
      %v1343 = vpack.c.b16 %v1341, %v1341
      %v1345 = vsel %vm813, %v1317, 0
      %v1347 = vsel %vm813, %v1319, 0
      %v1349 = vsel %vm813, %v1321, 0
      %v1351 = vsel %vm813, %v1323, 0
      %v1353 = vsel %vm813, %v1325, 0
      %v1355 = vsel %vm813, %v1327, 0
      %v1357 = vsel %vm813, %v1329, 0
      %v1359 = vsel %vm813, %v1331, 0
      %v1362 = vsel %vm830, %v1343, 0
      %1364 = vmatprep.subr.bf16.mxu0 0
      %1365 = vmatpush1.bf16.msra.mxu0 %v1342
      %1366 = vmatprep.subr.bf16.mxu0 0
      %1367 = vmatpush1.bf16.msra.mxu0 %v1362
      %1368 = vmatprep.subr.bf16.mxu0 0
      %1369 = vmatpush1.bf16.msra.mxu0 0
      %1370 = vmatprep.subr.bf16.mxu0 0
      %1371 = vmatpush1.bf16.msra.mxu0 0
      %1372 = vmatprep.subr.bf16.mxu0 0
      %1373 = vmatpush1.bf16.msra.mxu0 0
      %1374 = vmatprep.subr.bf16.mxu0 0
      %1375 = vmatpush1.bf16.msra.mxu0 0
      %1376 = vmatprep.subr.bf16.mxu0 0
      %1377 = vmatpush1.bf16.msra.mxu0 0
      %1378 = vmatprep.subr.bf16.mxu0 0
      %1379 = vmatpush1.bf16.msra.mxu0 0
      %1380 = vmatprep.subr.bf16.mxu0 0
      %1381 = vmatpush1.bf16.msra.mxu0 0
      %1382 = vmatprep.subr.bf16.mxu0 0
      %1383 = vmatpush1.bf16.msra.mxu0 0
      %1384 = vmatprep.subr.bf16.mxu0 0
      %1385 = vmatpush1.bf16.msra.mxu0 0
      %1386 = vmatprep.subr.bf16.mxu0 0
      %1387 = vmatpush1.bf16.msra.mxu0 0
      %1388 = vmatprep.subr.bf16.mxu0 0
      %1389 = vmatpush1.bf16.msra.mxu0 0
      %1390 = vmatprep.subr.bf16.mxu0 0
      %1391 = vmatpush1.bf16.msra.mxu0 0
      %1392 = vmatprep.subr.bf16.mxu0 0
      %1393 = vmatpush1.bf16.msra.mxu0 0
      %1394 = vmatprep.subr.bf16.mxu0 0
      %1395 = vmatpush1.bf16.msra.mxu0 0
      %1396 = vmatprep.mubr.bf16.mxu0 0
      %1397 = vmatmul.mubr.bf16.gmra.mrb[0].mxu0 %v1345
      %v1398 = vpop.f32.mrb[0].mxu0
      %v1399 = vadd.f32 0.0, %v1398
      %v1400 = vpop.f32.mrb[0].mxu0
      %v1401 = vpop.f32.mrb[0].mxu0
      %v1402 = vadd.f32 0.0, %v1401
      %v1403 = vpop.f32.mrb[0].mxu0
      %1404 = vmatprep.mubr.bf16.mxu0 0
      %1405 = vmatmul.mubr.bf16.gmra.mrb[0].mxu0 %v1347
      %v1406 = vpop.f32.mrb[0].mxu0
      %v1407 = vadd.f32 0.0, %v1406
      %v1408 = vpop.f32.mrb[0].mxu0
      %v1409 = vpop.f32.mrb[0].mxu0
      %v1410 = vadd.f32 0.0, %v1409
      %v1411 = vpop.f32.mrb[0].mxu0
      %1412 = vmatprep.mubr.bf16.mxu0 0
      %1413 = vmatmul.mubr.bf16.gmra.mrb[0].mxu0 %v1349
      %v1414 = vpop.f32.mrb[0].mxu0
      %v1415 = vadd.f32 0.0, %v1414
      %v1416 = vpop.f32.mrb[0].mxu0
      %v1417 = vpop.f32.mrb[0].mxu0
      %v1418 = vadd.f32 0.0, %v1417
      %v1419 = vpop.f32.mrb[0].mxu0
      %1420 = vmatprep.mubr.bf16.mxu0 0
      %1421 = vmatmul.mubr.bf16.gmra.mrb[0].mxu0 %v1351
      %v1422 = vpop.f32.mrb[0].mxu0
      %v1423 = vadd.f32 0.0, %v1422
      %v1424 = vpop.f32.mrb[0].mxu0
      %v1425 = vpop.f32.mrb[0].mxu0
      %v1426 = vadd.f32 0.0, %v1425
      %v1427 = vpop.f32.mrb[0].mxu0
      %1428 = vmatprep.mubr.bf16.mxu0 0
      %1429 = vmatmul.mubr.bf16.gmra.mrb[0].mxu0 %v1353
      %v1430 = vpop.f32.mrb[0].mxu0
      %v1431 = vadd.f32 0.0, %v1430
      %v1432 = vpop.f32.mrb[0].mxu0
      %v1433 = vpop.f32.mrb[0].mxu0
      %v1434 = vadd.f32 0.0, %v1433
      %v1435 = vpop.f32.mrb[0].mxu0
      %1436 = vmatprep.mubr.bf16.mxu0 0
      %1437 = vmatmul.mubr.bf16.gmra.mrb[0].mxu0 %v1355
      %v1438 = vpop.f32.mrb[0].mxu0
      %v1439 = vadd.f32 0.0, %v1438
      %v1440 = vpop.f32.mrb[0].mxu0
      %v1441 = vpop.f32.mrb[0].mxu0
      %v1442 = vadd.f32 0.0, %v1441
      %v1443 = vpop.f32.mrb[0].mxu0
      %1444 = vmatprep.mubr.bf16.mxu0 0
      %1445 = vmatmul.mubr.bf16.gmra.mrb[0].mxu0 %v1357
      %v1446 = vpop.f32.mrb[0].mxu0
      %v1447 = vadd.f32 0.0, %v1446
      %v1448 = vpop.f32.mrb[0].mxu0
      %v1449 = vpop.f32.mrb[0].mxu0
      %v1450 = vadd.f32 0.0, %v1449
      %v1451 = vpop.f32.mrb[0].mxu0
      %1452 = vmatprep.mubr.bf16.mxu0 0
      %1453 = vmatmul.mubr.bf16.gmra.mrb[0].mxu0 %v1359
      %v1454 = vpop.f32.mrb[0].mxu0
      %v1455 = vadd.f32 0.0, %v1454
      %v1456 = vpop.f32.mrb[0].mxu0
      %v1457 = vpop.f32.mrb[0].mxu0
      %v1458 = vadd.f32 0.0, %v1457
      %v1459 = vpop.f32.mrb[0].mxu0
      %1460 = vdwg.mxu0
      %v1461 = vadd.f32 %v994, %v1399
      %v1462 = vadd.f32 %v997, %v1402
      %v1463 = vadd.f32 %v1002, %v1407
      %v1464 = vadd.f32 %v1005, %v1410
      %v1465 = vadd.f32 %v1010, %v1415
      %v1466 = vadd.f32 %v1013, %v1418
      %v1467 = vadd.f32 %v1018, %v1423
      %v1468 = vadd.f32 %v1021, %v1426
      %v1469 = vadd.f32 %v1026, %v1431
      %v1470 = vadd.f32 %v1029, %v1434
      %v1471 = vadd.f32 %v1034, %v1439
      %v1472 = vadd.f32 %v1037, %v1442
      %v1473 = vadd.f32 %v1042, %v1447
      %v1474 = vadd.f32 %v1045, %v1450
      %v1475 = vadd.f32 %v1050, %v1455
      %v1476 = vadd.f32 %v1053, %v1458
      %v1477 = vpack.c.bf16 %v1462, %v1461
      %v1478 = vpack.c.bf16 %v1464, %v1463
      %v1479 = vpack.c.bf16 %v1466, %v1465
      %v1480 = vpack.c.bf16 %v1468, %v1467
      %v1481 = vpack.c.bf16 %v1470, %v1469
      %v1482 = vpack.c.bf16 %v1472, %v1471
      %v1483 = vpack.c.bf16 %v1474, %v1473
      %v1484 = vpack.c.bf16 %v1476, %v1475
      %v1493 = vunpack.c.l.b16 %v1477
      %v1494 = vunpack.c.h.b16 %v1477
      %v1495 = vunpack.c.l.b16 %v1478
      %v1496 = vunpack.c.h.b16 %v1478
      %v1497 = vunpack.c.l.b16 %v1479
      %v1498 = vunpack.c.h.b16 %v1479
      %v1499 = vunpack.c.l.b16 %v1480
      %v1500 = vunpack.c.h.b16 %v1480
      %v1501 = vunpack.c.l.b16 %v1481
      %v1502 = vunpack.c.h.b16 %v1481
      %v1503 = vunpack.c.l.b16 %v1482
      %v1504 = vunpack.c.h.b16 %v1482
      %v1505 = vunpack.c.l.b16 %v1483
      %v1506 = vunpack.c.h.b16 %v1483
      %v1507 = vunpack.c.l.b16 %v1484
      %v1508 = vunpack.c.h.b16 %v1484
      %v1509 = vpack.c.b16 %v1493, %v1493
      %v1510 = vpack.c.b16 %v1494, %v1494
      %v1511 = vpack.c.b16 %v1495, %v1495
      %v1512 = vpack.c.b16 %v1496, %v1496
      %v1513 = vpack.c.b16 %v1497, %v1497
      %v1514 = vpack.c.b16 %v1498, %v1498
      %v1515 = vpack.c.b16 %v1499, %v1499
      %v1516 = vpack.c.b16 %v1500, %v1500
      %v1517 = vpack.c.b16 %v1501, %v1501
      %v1518 = vpack.c.b16 %v1502, %v1502
      %v1519 = vpack.c.b16 %v1503, %v1503
      %v1520 = vpack.c.b16 %v1504, %v1504
      %v1521 = vpack.c.b16 %v1505, %v1505
      %v1522 = vpack.c.b16 %v1506, %v1506
      %v1523 = vpack.c.b16 %v1507, %v1507
      %v1524 = vpack.c.b16 %v1508, %v1508
      %vm1541 = vcmask 60416
      %1542 = vst.msk [vmem:[%s232] sm:$0xf] %vm1541, %v1509
      %1543 = vst.msk [vmem:[%s232 + $0x4] sm:$0xf] %vm1541, %v1510
      %1544 = vst.msk [vmem:[%s232 + $0x8] sm:$0xf] %vm1541, %v1511
      %1545 = vst.msk [vmem:[%s232 + $0xc] sm:$0xf] %vm1541, %v1512
      %1546 = vst.msk [vmem:[%s232 + $0x10] sm:$0xf] %vm1541, %v1513
      %1547 = vst.msk [vmem:[%s232 + $0x14] sm:$0xf] %vm1541, %v1514
      %1548 = vst.msk [vmem:[%s232 + $0x18] sm:$0xf] %vm1541, %v1515
      %1549 = vst.msk [vmem:[%s232 + $0x1c] sm:$0xf] %vm1541, %v1516
      %1550 = vst.msk [vmem:[%s232 + $0x20] sm:$0xf] %vm1541, %v1517
      %1551 = vst.msk [vmem:[%s232 + $0x24] sm:$0xf] %vm1541, %v1518
      %1552 = vst.msk [vmem:[%s232 + $0x28] sm:$0xf] %vm1541, %v1519
      %1553 = vst.msk [vmem:[%s232 + $0x2c] sm:$0xf] %vm1541, %v1520
      %1554 = vst.msk [vmem:[%s232 + $0x30] sm:$0xf] %vm1541, %v1521
      %1555 = vst.msk [vmem:[%s232 + $0x34] sm:$0xf] %vm1541, %v1522
      %1556 = vst.msk [vmem:[%s232 + $0x38] sm:$0xf] %vm1541, %v1523
      %1557 = vst.msk [vmem:[%s232 + $0x3c] sm:$0xf] %vm1541, %v1524
      %p1558 = scmp.eq.s32.totalorder %s21, 0
      // Predicated region
      $region29: #{_lambda_.6} parent=27 // pred_check
        %p1559 = pneg %p1558
      $region30: #{_lambda_.6} parent=27 // pred_check_branch
        %1561 = sbr.rel (%p1559) target = $region32
      $region31: #{_lambda_.6} parent=27 // pred_region
        %vm1562 = vcmask 57344
        %1563 = vst.msk [vmem:[%s236] sm:$0x1] %vm1562, 0.0
        %1564 = vst.msk [vmem:[%s239] sm:$0x1] %vm1562, 0.0
      $region32: #{_lambda_.6} parent=27 // pred_fallthru
        _
      %v1565 = vld [vmem:[%s236] sm:$0x1]
      %v1566 = vsel %vm487, %v1461, 0.0
      %v1567 = vsel %vm487, %v1462, 0.0
      %v1568 = vadd.f32 %v1566, %v1567
      %v1569 = vsel %vm487, %v1463, 0.0
      %v1570 = vadd.f32 %v1568, %v1569
      %v1571 = vsel %vm487, %v1464, 0.0
      %v1572 = vadd.f32 %v1570, %v1571
      %v1573 = vsel %vm487, %v1465, 0.0
      %v1574 = vadd.f32 %v1572, %v1573
      %v1575 = vsel %vm487, %v1466, 0.0
      %v1576 = vadd.f32 %v1574, %v1575
      %v1577 = vsel %vm487, %v1467, 0.0
      %v1578 = vadd.f32 %v1576, %v1577
      %v1579 = vsel %vm487, %v1468, 0.0
      %v1580 = vadd.f32 %v1578, %v1579
      %v1581 = vsel %vm487, %v1469, 0.0
      %v1582 = vadd.f32 %v1580, %v1581
      %v1583 = vsel %vm487, %v1470, 0.0
      %v1584 = vadd.f32 %v1582, %v1583
      %v1585 = vsel %vm487, %v1471, 0.0
      %v1586 = vadd.f32 %v1584, %v1585
      %v1587 = vsel %vm487, %v1472, 0.0
      %v1588 = vadd.f32 %v1586, %v1587
      %v1589 = vsel %vm487, %v1473, 0.0
      %v1590 = vadd.f32 %v1588, %v1589
      %v1591 = vsel %vm487, %v1474, 0.0
      %v1592 = vadd.f32 %v1590, %v1591
      %v1593 = vsel %vm487, %v1475, 0.0
      %v1594 = vadd.f32 %v1592, %v1593
      %v1595 = vsel %vm487, %v1476, 0.0
      %v1596 = vadd.f32 %v1594, %v1595
      %v1597 = vrot.slane %v1596, 4
      %v1598 = vadd.f32 %v1596, %v1597
      %v1599 = vrot.slane %v1598, 2
      %v1600 = vadd.f32 %v1598, %v1599
      %v1601 = vrot.slane %v1600, 1
      %v1602 = vadd.f32 %v1600, %v1601
      %v1603 = vadd.f32 %v1565, %v1602
      %vm1604 = vcmask 57344
      %1605 = vst.msk [vmem:[%s236] sm:$0x1] %vm1604, %v1603
      %v1606 = vld [vmem:[%s239] sm:$0x1]
      %v1607 = vmul.f32 %v1461, %v1461
      %v1608 = vmul.f32 %v1462, %v1462
      %v1609 = vmul.f32 %v1463, %v1463
      %v1610 = vmul.f32 %v1464, %v1464
      %v1611 = vmul.f32 %v1465, %v1465
      %v1612 = vmul.f32 %v1466, %v1466
      %v1613 = vmul.f32 %v1467, %v1467
      %v1614 = vmul.f32 %v1468, %v1468
      %v1615 = vmul.f32 %v1469, %v1469
      %v1616 = vmul.f32 %v1470, %v1470
      %v1617 = vmul.f32 %v1471, %v1471
      %v1618 = vmul.f32 %v1472, %v1472
      %v1619 = vmul.f32 %v1473, %v1473
      %v1620 = vmul.f32 %v1474, %v1474
      %v1621 = vmul.f32 %v1475, %v1475
      %v1622 = vmul.f32 %v1476, %v1476
      %v1623 = vsel %vm487, %v1607, 0.0
      %v1624 = vsel %vm487, %v1608, 0.0
      %v1625 = vadd.f32 %v1623, %v1624
      %v1626 = vsel %vm487, %v1609, 0.0
      %v1627 = vadd.f32 %v1625, %v1626
      %v1628 = vsel %vm487, %v1610, 0.0
      %v1629 = vadd.f32 %v1627, %v1628
      %v1630 = vsel %vm487, %v1611, 0.0
      %v1631 = vadd.f32 %v1629, %v1630
      %v1632 = vsel %vm487, %v1612, 0.0
      %v1633 = vadd.f32 %v1631, %v1632
      %v1634 = vsel %vm487, %v1613, 0.0
      %v1635 = vadd.f32 %v1633, %v1634
      %v1636 = vsel %vm487, %v1614, 0.0
      %v1637 = vadd.f32 %v1635, %v1636
      %v1638 = vsel %vm487, %v1615, 0.0
      %v1639 = vadd.f32 %v1637, %v1638
      %v1640 = vsel %vm487, %v1616, 0.0
      %v1641 = vadd.f32 %v1639, %v1640
      %v1642 = vsel %vm487, %v1617, 0.0
      %v1643 = vadd.f32 %v1641, %v1642
      %v1644 = vsel %vm487, %v1618, 0.0
      %v1645 = vadd.f32 %v1643, %v1644
      %v1646 = vsel %vm487, %v1619, 0.0
      %v1647 = vadd.f32 %v1645, %v1646
      %v1648 = vsel %vm487, %v1620, 0.0
      %v1649 = vadd.f32 %v1647, %v1648
      %v1650 = vsel %vm487, %v1621, 0.0
      %v1651 = vadd.f32 %v1649, %v1650
      %v1652 = vsel %vm487, %v1622, 0.0
      %v1653 = vadd.f32 %v1651, %v1652
      %v1654 = vrot.slane %v1653, 4
      %v1655 = vadd.f32 %v1653, %v1654
      %v1656 = vrot.slane %v1655, 2
      %v1657 = vadd.f32 %v1655, %v1656
      %v1658 = vrot.slane %v1657, 1
      %v1659 = vadd.f32 %v1657, %v1658
      %v1660 = vadd.f32 %v1606, %v1659
      %1661 = vst.msk [vmem:[%s239] sm:$0x1] %vm1604, %v1660
      %s1662 = smul.u32 8, %s21
      %p1663 = scmp.lt.s32.totalorder %s20, 1
      %s1664 = scalar_select %p1663, %s20, 1
      %p1665 = scmp.lt.s32.totalorder %s1662, 15
      %s1666 = scalar_select %p1665, %s1662, 15
      %s1667 = smul.addr %s1666, 2
      %s1668 = smul.addr %s1664, 32
      %s1669 = sadd.s32 %s1667, %s1668
      %s1670 = smul.addr %s1669, 4
      %s1671 = scalar_lea.vmem %s2, %s1670
      %p1672 = scmp.lt.s32.totalorder %s20, 1
      %s1673 = scalar_select %p1672, %s20, 1
      %s1674 = scalar_lea.vmem %s3, %s1673
      %p1675 = scmp.lt.s32.totalorder %s20, 1
      %s1676 = scalar_select %p1675, %s20, 1
      %s1677 = scalar_lea.vmem %s4, %s1676
      // Predicated region
      $region33: #{_lambda_.6} parent=27 // pred_check
        %p1678 = pneg %p95
      $region34: #{_lambda_.6} parent=27 // pred_check_branch
        %1680 = sbr.rel (%p1678) target = $region36
      $region35: #{_lambda_.6} parent=27 // pred_region
        %s1681 = smul.u32 8, %s21
      $region36: #{_lambda_.6} parent=27 // pred_fallthru
        _
      // Predicated region
      $region37: #{_lambda_.6} parent=27 // pred_check
        %p1682 = pneg %p121
      $region38: #{_lambda_.6} parent=27 // pred_check_branch
        %1684 = sbr.rel (%p1682) target = $region40
      $region39: #{_lambda_.6} parent=27 // pred_region
        _
      $region40: #{_lambda_.6} parent=27 // pred_fallthru
        _
      // Predicated region
      $region41: #{_lambda_.6} parent=27 // pred_check
        %p1685 = pneg %p147
      $region42: #{_lambda_.6} parent=27 // pred_check_branch
        %1687 = sbr.rel (%p1685) target = $region44
      $region43: #{_lambda_.6} parent=27 // pred_region
        _
      $region44: #{_lambda_.6} parent=27 // pred_fallthru
        _
    $region28: #{_lambda_.6} parent=5 // pred_fallthru
      _
    %p1688 = scmp.le.s32.totalorder 2, %s11
    // Predicated region
    $region45: #{_lambda_.6} parent=5 // pred_check
      %p1689 = pneg %p1688
    $region46: #{_lambda_.6} parent=5 // pred_check_branch
      %1691 = sbr.rel (%p1689) target = $region48
    $region47: #{_lambda_.6} parent=5 // pred_region
      %s1692 = ssub.s32 %s11, 2
      // Predicated region
      $region49: #{_lambda_.6} parent=47 // pred_check
        %p1693 = pneg %p101
      $region50: #{_lambda_.6} parent=47 // pred_check_branch
        %1695 = sbr.rel (%p1693) target = $region52
      $region51: #{_lambda_.6} parent=47 // pred_region
        %s1696 = smul.u32 8, %s23
        %p1697 = scmp.lt.s32.totalorder %s22, 1
        %s1698 = scalar_select %p1697, %s22, 1
        %p1699 = scmp.lt.s32.totalorder %s1696, 15
        %s1700 = scalar_select %p1699, %s1696, 15
        %s1701 = smul.addr %s1700, 2
        %s1702 = smul.addr %s1698, 32
        %s1703 = sadd.s32 %s1701, %s1702
        %s1704 = smul.addr %s1703, 4
        %s1705 = scalar_lea.vmem %s2, %s1704
      $region52: #{_lambda_.6} parent=47 // pred_fallthru
        _
      // Predicated region
      $region53: #{_lambda_.6} parent=47 // pred_check
        %p1706 = pneg %p127
      $region54: #{_lambda_.6} parent=47 // pred_check_branch
        %1708 = sbr.rel (%p1706) target = $region56
      $region55: #{_lambda_.6} parent=47 // pred_region
        %p1709 = scmp.lt.s32.totalorder %s22, 1
        %s1710 = scalar_select %p1709, %s22, 1
        %s1711 = scalar_lea.vmem %s3, %s1710
      $region56: #{_lambda_.6} parent=47 // pred_fallthru
        _
      // Predicated region
      $region57: #{_lambda_.6} parent=47 // pred_check
        %p1712 = pneg %p153
      $region58: #{_lambda_.6} parent=47 // pred_check_branch
        %1714 = sbr.rel (%p1712) target = $region60
      $region59: #{_lambda_.6} parent=47 // pred_region
        %p1715 = scmp.lt.s32.totalorder %s22, 1
        %s1716 = scalar_select %p1715, %s22, 1
        %s1717 = scalar_lea.vmem %s4, %s1716
      $region60: #{_lambda_.6} parent=47 // pred_fallthru
        _
    $region48: #{_lambda_.6} parent=5 // pred_fallthru
      _
  $region6: #{_lambda_.6} parent=0 // loop_footer
    %s15 = sadd.s32 1, %s11
  $region7: #{_lambda_.6} parent=0 // loop_footer_branch
    %10 = sbr.rel target = $region3
  $region8: #{_lambda_.6} parent=0 // loop_exit
    _

</llo_original>
